<compile_context>
chip_gen: v6e
topology: v6e:2x2x1
jax: 0.10.0
libtpu: 0.0.40
codegen_flags: <defaults>
</compile_context>

<pallas_src>
import jax
import jax.numpy as jnp
from jax import lax
from jax.experimental import pallas as pl
from jax.experimental.pallas import tpu as pltpu

# ---- hyperparameters (stand-in for `param` in the original code) ----------
DIM = 3            # param.dim
N_HIDDEN = 32      # param.n_hidden
N_LAYER = 3        # param.n_layer (3 hidden Linear+ReLU layers, then out Linear)
D_IN = DIM + 1     # input features: (t, x)
HA = N_HIDDEN + 1  # hidden width + 1 "ones" row used to carry biases through layers
WH_COLS = D_IN + 1 + 2 * HA   # packed hidden slab: [W1e | b1e | W2a | W3a]


def _make_fnnt_kernel(tm, chunk):
    """Fused MLP over one (features, tm) lane-dense batch tile."""
    assert tm % chunk == 0
    n_chunks = tm // chunk
    # Bounded unroll once the chunk loop gets long (avoid vreg-pressure flip).
    unroll = True if n_chunks <= 4 else 2

    def kernel(xT_ref, wh_ref, wo_ref, oT_ref):
        # Static slices of the packed weight slab (loaded once per grid step;
        # they stay resident across the chunk loop).
        w1 = wh_ref[:, 0:D_IN]                              # (HA, D_IN)  rows 0..31 = W1, row 32 = 0
        b1 = wh_ref[:, D_IN:D_IN + 1]                       # (HA, 1)     rows 0..31 = b1, row 32 = 1
        w2 = wh_ref[:, D_IN + 1:D_IN + 1 + HA]              # (HA, HA)    [W2 | b2] + ones-propagation row
        w3 = wh_ref[:, D_IN + 1 + HA:D_IN + 1 + 2 * HA]     # (HA, HA)    [W3 | b3] + ones-propagation row
        wo = wo_ref[...]                                    # (DIM, HA)   [Wo | bo] / correct

        # Hoisted: JAX does not CSE broadcast_in_dim, so do the lane-broadcast
        # of the only remaining explicit bias once per grid step, not per chunk.
        b1b = jnp.broadcast_to(b1, (HA, chunk))

        def body(c, carry):
            col = pl.multiple_of(c * chunk, chunk)
            x = xT_ref[:, pl.ds(col, chunk)]                                  # (D_IN, chunk)
            # Layer 1 (+ seed the "ones" row carrying the biases downstream).
            h = jnp.maximum(
                jnp.dot(w1, x, preferred_element_type=jnp.float32) + b1b, 0.0)
            # Layers 2..3: biases live in the last weight column; row 32 stays 1.
            h = jnp.maximum(jnp.dot(w2, h, preferred_element_type=jnp.float32), 0.0)
            h = jnp.maximum(jnp.dot(w3, h, preferred_element_type=jnp.float32), 0.0)
            # Output layer: bias column + 1/correct already folded in -> dense store.
            oT_ref[:, pl.ds(col, chunk)] = jnp.dot(
                wo, h, preferred_element_type=jnp.float32)
            return carry

        lax.fori_loop(0, n_chunks, body, 0, unroll=unroll)

    return kernel


def _pack_params(params, correct):
    """Fold biases (ones-row trick) and 1/correct into two packed slabs."""
    f32 = jnp.float32
    c = jnp.asarray(correct, f32)
    w1 = params["w1"].astype(f32); b1 = params["b1"].astype(f32)
    w2 = params["w2"].astype(f32); b2 = params["b2"].astype(f32)
    w3 = params["w3"].astype(f32); b3 = params["b3"].astype(f32)
    wo = params["wo"].astype(f32); bo = params["bo"].astype(f32)

    e_last = jnp.zeros((1, HA), f32).at[0, N_HIDDEN].set(1.0)   # ones-propagation row

    w1e = jnp.concatenate([w1, jnp.zeros((1, D_IN), f32)], axis=0)            # (HA, D_IN)
    b1e = jnp.concatenate([b1, jnp.ones((1,), f32)]).reshape(HA, 1)           # (HA, 1)
    w2a = jnp.concatenate(
        [jnp.concatenate([w2, b2.reshape(N_HIDDEN, 1)], axis=1), e_last], 0)  # (HA, HA)
    w3a = jnp.concatenate(
        [jnp.concatenate([w3, b3.reshape(N_HIDDEN, 1)], axis=1), e_last], 0)  # (HA, HA)
    woa = jnp.concatenate([wo, bo.reshape(DIM, 1)], axis=1) / c               # (DIM, HA)

    wh = jnp.concatenate([w1e, b1e, w2a, w3a], axis=1)                        # (HA, WH_COLS)
    return wh, woa


def _tiling(n, max_tm=4096):
    # Single grid step whenever the batch fits (grid-step overhead dominates on
    # single-TC v5e/v6e); larger batches get a multi-step "parallel" grid that
    # the v7x runtime can shard across its two TensorCores.  VMEM per tile is
    # KB-scale, so max_tm can be raised further (review: 2048-8192) if desired.
    tm = min(max_tm, max(128, pl.next_power_of_2(n)))
    chunk = min(tm, 512)
    return tm, chunk


@jax.jit
def fnnt_forward_t(sT, params, correct=1.0):
    """Fast path: sT is (D_IN, N) = rows of (t, x) stacked column-wise.

    Returns (DIM, N) = out / correct.  Fully lane-dense, no transposes, no
    padding pass; a single pallas_call inside one jitted program.
    """
    d_in, n = sT.shape
    assert d_in == D_IN
    wh, woa = _pack_params(params, correct)
    tm, chunk = _tiling(n)
    grid = (pl.cdiv(n, tm),)   # edge block: OOB columns are computed then discarded

    outT = pl.pallas_call(
        _make_fnnt_kernel(tm, chunk),
        out_shape=jax.ShapeDtypeStruct((DIM, n), jnp.float32),
        grid_spec=pltpu.PrefetchScalarGridSpec(
            num_scalar_prefetch=0,
            grid=grid,
            in_specs=[
                pl.BlockSpec((D_IN, tm), lambda i: (0, i)),      # x^T batch tile
                pl.BlockSpec((HA, WH_COLS), lambda i: (0, 0)),   # packed hidden weights
                pl.BlockSpec((DIM, HA), lambda i: (0, 0)),       # packed output weights
            ],
            out_specs=pl.BlockSpec((DIM, tm), lambda i: (0, i)),
        ),
        compiler_params=pltpu.CompilerParams(
            dimension_semantics=("parallel",)),
    )(sT.astype(jnp.float32), wh, woa)
    return outT


@jax.jit
def fnnt_forward(s, params, correct=1.0):
    """PyTorch-module-compatible interface: s (N, D_IN) -> (N, DIM).

    Prefer fnnt_forward_t for performance: this wrapper adds two small
    transpose passes (inside the same jitted program) purely as layout
    plumbing for callers that require the row-major interface.
    """
    return fnnt_forward_t(s.T, params, correct).T


def init_params(key):
    """Deterministic synthetic init, PyTorch nn.Linear shapes (out, in) / (out,)."""
    ks = jax.random.split(key, 8)
    scale = 0.1
    return {
        "w1": scale * jax.random.normal(ks[0], (N_HIDDEN, D_IN), jnp.float32),
        "b1": scale * jax.random.normal(ks[1], (N_HIDDEN,), jnp.float32),
        "w2": scale * jax.random.normal(ks[2], (N_HIDDEN, N_HIDDEN), jnp.float32),
        "b2": scale * jax.random.normal(ks[3], (N_HIDDEN,), jnp.float32),
        "w3": scale * jax.random.normal(ks[4], (N_HIDDEN, N_HIDDEN), jnp.float32),
        "b3": scale * jax.random.normal(ks[5], (N_HIDDEN,), jnp.float32),
        "wo": scale * jax.random.normal(ks[6], (DIM, N_HIDDEN), jnp.float32),
        "bo": scale * jax.random.normal(ks[7], (DIM,), jnp.float32),
    }


def fnnt_reference(s_rows, params, correct=1.0):
    """Pure-JAX reference matching the PyTorch module semantics (rows of (t, x))."""
    h = jnp.maximum(s_rows @ params["w1"].T + params["b1"], 0.0)
    h = jnp.maximum(h @ params["w2"].T + params["b2"], 0.0)
    h = jnp.maximum(h @ params["w3"].T + params["b3"], 0.0)
    return (h @ params["wo"].T + params["bo"]) / correct


if __name__ == "__main__":
    root = jax.random.PRNGKey(0)
    k_data, k_data2, k_par = jax.random.split(root, 3)
    params = init_params(k_par)
    correct = 2.0

    # Fast path: (features, batch) in/out -> zero transposes, zero padding,
    # grid=1 (single TensorCore; overhead-minimal for this small batch).
    N = 2048
    sT = jax.random.normal(k_data, (D_IN, N), jnp.float32)       # (t, x) columns
    outT = jax.block_until_ready(fnnt_forward_t(sT, params, correct))
    refT = fnnt_reference(sT.T, params, correct).T
    assert outT.shape == (DIM, N)
    assert jnp.allclose(outT, refT, atol=1e-5, rtol=1e-5), "mismatch vs reference"

    # Module-compatible row-major path with a ragged batch: exercises the
    # no-pad edge-block handling (last tile's OOB columns are discarded).
    N2 = 1000
    s2 = jax.random.normal(k_data2, (N2, D_IN), jnp.float32)     # rows of (t, x)
    out2 = jax.block_until_ready(fnnt_forward(s2, params, correct))
    ref2 = fnnt_reference(s2, params, correct)
    assert out2.shape == (N2, DIM)
    assert jnp.allclose(out2, ref2, atol=1e-5, rtol=1e-5), "ragged mismatch"

    print("KERNEL_OK")
</pallas_src>

<mosaic_0001>
module attributes {stable_mosaic.version = 11 : i64} {
  func.func @kernel(%arg0: i32, %arg1: memref<4x2048xf32, #tpu.memory_space<vmem>>, %arg2: memref<33x71xf32, #tpu.memory_space<vmem>>, %arg3: memref<3x33xf32, #tpu.memory_space<vmem>>, %arg4: memref<3x2048xf32, #tpu.memory_space<vmem>>) attributes {dimension_semantics = [#tpu.dimension_semantics<parallel>], iteration_bounds = array<i64: 1>, scalar_prefetch = 0 : i64, scratch_operands = 0 : i64, tpu.core_type = #tpu.core_type<tc>, window_params = [{transform_indices = @transform_0, window_bounds = array<i64: 4, 2048>}, {pipeline_mode = #tpu.pipeline_mode<synchronous>, transform_indices = @transform_1, window_bounds = array<i64: 33, 71>}, {pipeline_mode = #tpu.pipeline_mode<synchronous>, transform_indices = @transform_2, window_bounds = array<i64: 3, 33>}, {transform_indices = @transform_3, window_bounds = array<i64: 3, 2048>}]} {
    %c0 = arith.constant 0 : index
    %c0_0 = arith.constant 0 : index
    %0 = vector.load %arg2[%c0, %c0_0] : memref<33x71xf32, #tpu.memory_space<vmem>>, vector<33x4xf32>
    %c0_1 = arith.constant 0 : index
    %c4 = arith.constant 4 : index
    %1 = vector.load %arg2[%c0_1, %c4] : memref<33x71xf32, #tpu.memory_space<vmem>>, vector<33x1xf32>
    %c0_2 = arith.constant 0 : index
    %c5 = arith.constant 5 : index
    %2 = vector.load %arg2[%c0_2, %c5] : memref<33x71xf32, #tpu.memory_space<vmem>>, vector<33x33xf32>
    %c0_3 = arith.constant 0 : index
    %c38 = arith.constant 38 : index
    %3 = vector.load %arg2[%c0_3, %c38] : memref<33x71xf32, #tpu.memory_space<vmem>>, vector<33x33xf32>
    %c0_4 = arith.constant 0 : index
    %c0_5 = arith.constant 0 : index
    %4 = vector.load %arg3[%c0_4, %c0_5] : memref<3x33xf32, #tpu.memory_space<vmem>>, vector<3x33xf32>
    %5 = vector.shape_cast %1 : vector<33x1xf32> to vector<33x1xf32>
    %6 = vector.broadcast %5 : vector<33x1xf32> to vector<33x512xf32>
    %c0_i32 = arith.constant 0 : i32
    %c512_i32 = arith.constant 512 : i32
    %7 = arith.muli %c0_i32, %c512_i32 : i32
    %8 = tpu.assume_multiple %7, 512 : i32
    %c0_6 = arith.constant 0 : index
    %9 = arith.index_cast %8 : i32 to index
    %10 = vector.load %arg1[%c0_6, %9] : memref<4x2048xf32, #tpu.memory_space<vmem>>, vector<4x512xf32>
    %cst = arith.constant dense<0.000000e+00> : vector<33x512xf32>
    %11 = tpu.matmul %0, %10, %cst {dimension_numbers = #tpu.dot_dimension_numbers<[1], [0], [0], [1], [0, 0, 1, 1], [], []>} : vector<33x4xf32>, vector<4x512xf32>, vector<33x512xf32> -> vector<33x512xf32>
    %12 = arith.addf %11, %6 : vector<33x512xf32>
    %cst_7 = arith.constant 0.000000e+00 : f32
    %13 = vector.broadcast %cst_7 : f32 to vector<33x512xf32>
    %14 = arith.maximumf %12, %13 : vector<33x512xf32>
    %cst_8 = arith.constant dense<0.000000e+00> : vector<33x512xf32>
    %15 = tpu.matmul %2, %14, %cst_8 {dimension_numbers = #tpu.dot_dimension_numbers<[1], [0], [0], [1], [0, 0, 1, 1], [], []>} : vector<33x33xf32>, vector<33x512xf32>, vector<33x512xf32> -> vector<33x512xf32>
    %cst_9 = arith.constant 0.000000e+00 : f32
    %16 = vector.broadcast %cst_9 : f32 to vector<33x512xf32>
    %17 = arith.maximumf %15, %16 : vector<33x512xf32>
    %cst_10 = arith.constant dense<0.000000e+00> : vector<33x512xf32>
    %18 = tpu.matmul %3, %17, %cst_10 {dimension_numbers = #tpu.dot_dimension_numbers<[1], [0], [0], [1], [0, 0, 1, 1], [], []>} : vector<33x33xf32>, vector<33x512xf32>, vector<33x512xf32> -> vector<33x512xf32>
    %cst_11 = arith.constant 0.000000e+00 : f32
    %19 = vector.broadcast %cst_11 : f32 to vector<33x512xf32>
    %20 = arith.maximumf %18, %19 : vector<33x512xf32>
    %cst_12 = arith.constant dense<0.000000e+00> : vector<3x512xf32>
    %21 = tpu.matmul %4, %20, %cst_12 {dimension_numbers = #tpu.dot_dimension_numbers<[1], [0], [0], [1], [0, 0, 1, 1], [], []>} : vector<3x33xf32>, vector<33x512xf32>, vector<3x512xf32> -> vector<3x512xf32>
    %c0_13 = arith.constant 0 : index
    %22 = arith.index_cast %8 : i32 to index
    %23 = vector.load %arg4[%c0_13, %22] : memref<3x2048xf32, #tpu.memory_space<vmem>>, vector<3x512xf32>
    tpu.vector_store %arg4[%c0_13, %22], %21 {strides = array<i32>} : memref<3x2048xf32, #tpu.memory_space<vmem>>, vector<3x512xf32>,
    %c1_i32 = arith.constant 1 : i32
    %c512_i32_14 = arith.constant 512 : i32
    %24 = arith.muli %c1_i32, %c512_i32_14 : i32
    %25 = tpu.assume_multiple %24, 512 : i32
    %c0_15 = arith.constant 0 : index
    %26 = arith.index_cast %25 : i32 to index
    %27 = vector.load %arg1[%c0_15, %26] : memref<4x2048xf32, #tpu.memory_space<vmem>>, vector<4x512xf32>
    %cst_16 = arith.constant dense<0.000000e+00> : vector<33x512xf32>
    %28 = tpu.matmul %0, %27, %cst_16 {dimension_numbers = #tpu.dot_dimension_numbers<[1], [0], [0], [1], [0, 0, 1, 1], [], []>} : vector<33x4xf32>, vector<4x512xf32>, vector<33x512xf32> -> vector<33x512xf32>
    %29 = arith.addf %28, %6 : vector<33x512xf32>
    %cst_17 = arith.constant 0.000000e+00 : f32
    %30 = vector.broadcast %cst_17 : f32 to vector<33x512xf32>
    %31 = arith.maximumf %29, %30 : vector<33x512xf32>
    %cst_18 = arith.constant dense<0.000000e+00> : vector<33x512xf32>
    %32 = tpu.matmul %2, %31, %cst_18 {dimension_numbers = #tpu.dot_dimension_numbers<[1], [0], [0], [1], [0, 0, 1, 1], [], []>} : vector<33x33xf32>, vector<33x512xf32>, vector<33x512xf32> -> vector<33x512xf32>
    %cst_19 = arith.constant 0.000000e+00 : f32
    %33 = vector.broadcast %cst_19 : f32 to vector<33x512xf32>
    %34 = arith.maximumf %32, %33 : vector<33x512xf32>
    %cst_20 = arith.constant dense<0.000000e+00> : vector<33x512xf32>
    %35 = tpu.matmul %3, %34, %cst_20 {dimension_numbers = #tpu.dot_dimension_numbers<[1], [0], [0], [1], [0, 0, 1, 1], [], []>} : vector<33x33xf32>, vector<33x512xf32>, vector<33x512xf32> -> vector<33x512xf32>
    %cst_21 = arith.constant 0.000000e+00 : f32
    %36 = vector.broadcast %cst_21 : f32 to vector<33x512xf32>
    %37 = arith.maximumf %35, %36 : vector<33x512xf32>
    %cst_22 = arith.constant dense<0.000000e+00> : vector<3x512xf32>
    %38 = tpu.matmul %4, %37, %cst_22 {dimension_numbers = #tpu.dot_dimension_numbers<[1], [0], [0], [1], [0, 0, 1, 1], [], []>} : vector<3x33xf32>, vector<33x512xf32>, vector<3x512xf32> -> vector<3x512xf32>
    %c0_23 = arith.constant 0 : index
    %39 = arith.index_cast %25 : i32 to index
    %40 = vector.load %arg4[%c0_23, %39] : memref<3x2048xf32, #tpu.memory_space<vmem>>, vector<3x512xf32>
    tpu.vector_store %arg4[%c0_23, %39], %38 {strides = array<i32>} : memref<3x2048xf32, #tpu.memory_space<vmem>>, vector<3x512xf32>,
    %c2_i32 = arith.constant 2 : i32
    %c512_i32_24 = arith.constant 512 : i32
    %41 = arith.muli %c2_i32, %c512_i32_24 : i32
    %42 = tpu.assume_multiple %41, 512 : i32
    %c0_25 = arith.constant 0 : index
    %43 = arith.index_cast %42 : i32 to index
    %44 = vector.load %arg1[%c0_25, %43] : memref<4x2048xf32, #tpu.memory_space<vmem>>, vector<4x512xf32>
    %cst_26 = arith.constant dense<0.000000e+00> : vector<33x512xf32>
    %45 = tpu.matmul %0, %44, %cst_26 {dimension_numbers = #tpu.dot_dimension_numbers<[1], [0], [0], [1], [0, 0, 1, 1], [], []>} : vector<33x4xf32>, vector<4x512xf32>, vector<33x512xf32> -> vector<33x512xf32>
    %46 = arith.addf %45, %6 : vector<33x512xf32>
    %cst_27 = arith.constant 0.000000e+00 : f32
    %47 = vector.broadcast %cst_27 : f32 to vector<33x512xf32>
    %48 = arith.maximumf %46, %47 : vector<33x512xf32>
    %cst_28 = arith.constant dense<0.000000e+00> : vector<33x512xf32>
    %49 = tpu.matmul %2, %48, %cst_28 {dimension_numbers = #tpu.dot_dimension_numbers<[1], [0], [0], [1], [0, 0, 1, 1], [], []>} : vector<33x33xf32>, vector<33x512xf32>, vector<33x512xf32> -> vector<33x512xf32>
    %cst_29 = arith.constant 0.000000e+00 : f32
    %50 = vector.broadcast %cst_29 : f32 to vector<33x512xf32>
    %51 = arith.maximumf %49, %50 : vector<33x512xf32>
    %cst_30 = arith.constant dense<0.000000e+00> : vector<33x512xf32>
    %52 = tpu.matmul %3, %51, %cst_30 {dimension_numbers = #tpu.dot_dimension_numbers<[1], [0], [0], [1], [0, 0, 1, 1], [], []>} : vector<33x33xf32>, vector<33x512xf32>, vector<33x512xf32> -> vector<33x512xf32>
    %cst_31 = arith.constant 0.000000e+00 : f32
    %53 = vector.broadcast %cst_31 : f32 to vector<33x512xf32>
    %54 = arith.maximumf %52, %53 : vector<33x512xf32>
    %cst_32 = arith.constant dense<0.000000e+00> : vector<3x512xf32>
    %55 = tpu.matmul %4, %54, %cst_32 {dimension_numbers = #tpu.dot_dimension_numbers<[1], [0], [0], [1], [0, 0, 1, 1], [], []>} : vector<3x33xf32>, vector<33x512xf32>, vector<3x512xf32> -> vector<3x512xf32>
    %c0_33 = arith.constant 0 : index
    %56 = arith.index_cast %42 : i32 to index
    %57 = vector.load %arg4[%c0_33, %56] : memref<3x2048xf32, #tpu.memory_space<vmem>>, vector<3x512xf32>
    tpu.vector_store %arg4[%c0_33, %56], %55 {strides = array<i32>} : memref<3x2048xf32, #tpu.memory_space<vmem>>, vector<3x512xf32>,
    %c3_i32 = arith.constant 3 : i32
    %c512_i32_34 = arith.constant 512 : i32
    %58 = arith.muli %c3_i32, %c512_i32_34 : i32
    %59 = tpu.assume_multiple %58, 512 : i32
    %c0_35 = arith.constant 0 : index
    %60 = arith.index_cast %59 : i32 to index
    %61 = vector.load %arg1[%c0_35, %60] : memref<4x2048xf32, #tpu.memory_space<vmem>>, vector<4x512xf32>
    %cst_36 = arith.constant dense<0.000000e+00> : vector<33x512xf32>
    %62 = tpu.matmul %0, %61, %cst_36 {dimension_numbers = #tpu.dot_dimension_numbers<[1], [0], [0], [1], [0, 0, 1, 1], [], []>} : vector<33x4xf32>, vector<4x512xf32>, vector<33x512xf32> -> vector<33x512xf32>
    %63 = arith.addf %62, %6 : vector<33x512xf32>
    %cst_37 = arith.constant 0.000000e+00 : f32
    %64 = vector.broadcast %cst_37 : f32 to vector<33x512xf32>
    %65 = arith.maximumf %63, %64 : vector<33x512xf32>
    %cst_38 = arith.constant dense<0.000000e+00> : vector<33x512xf32>
    %66 = tpu.matmul %2, %65, %cst_38 {dimension_numbers = #tpu.dot_dimension_numbers<[1], [0], [0], [1], [0, 0, 1, 1], [], []>} : vector<33x33xf32>, vector<33x512xf32>, vector<33x512xf32> -> vector<33x512xf32>
    %cst_39 = arith.constant 0.000000e+00 : f32
    %67 = vector.broadcast %cst_39 : f32 to vector<33x512xf32>
    %68 = arith.maximumf %66, %67 : vector<33x512xf32>
    %cst_40 = arith.constant dense<0.000000e+00> : vector<33x512xf32>
    %69 = tpu.matmul %3, %68, %cst_40 {dimension_numbers = #tpu.dot_dimension_numbers<[1], [0], [0], [1], [0, 0, 1, 1], [], []>} : vector<33x33xf32>, vector<33x512xf32>, vector<33x512xf32> -> vector<33x512xf32>
    %cst_41 = arith.constant 0.000000e+00 : f32
    %70 = vector.broadcast %cst_41 : f32 to vector<33x512xf32>
    %71 = arith.maximumf %69, %70 : vector<33x512xf32>
    %cst_42 = arith.constant dense<0.000000e+00> : vector<3x512xf32>
    %72 = tpu.matmul %4, %71, %cst_42 {dimension_numbers = #tpu.dot_dimension_numbers<[1], [0], [0], [1], [0, 0, 1, 1], [], []>} : vector<3x33xf32>, vector<33x512xf32>, vector<3x512xf32> -> vector<3x512xf32>
    %c0_43 = arith.constant 0 : index
    %73 = arith.index_cast %59 : i32 to index
    %74 = vector.load %arg4[%c0_43, %73] : memref<3x2048xf32, #tpu.memory_space<vmem>>, vector<3x512xf32>
    tpu.vector_store %arg4[%c0_43, %73], %72 {strides = array<i32>} : memref<3x2048xf32, #tpu.memory_space<vmem>>, vector<3x512xf32>,
    %c4_i32 = arith.constant 4 : i32
    return
  }
  func.func @transform_0(%arg0: i32) -> (i32, i32) {
    %c0_i32 = arith.constant 0 : i32
    %c0_i32_0 = arith.constant 0 : i32
    return %c0_i32, %arg0 : i32, i32
  }
  func.func @transform_1(%arg0: i32) -> (i32, i32) {
    %c0_i32 = arith.constant 0 : i32
    %c0_i32_0 = arith.constant 0 : i32
    %c0_i32_1 = arith.constant 0 : i32
    return %c0_i32, %c0_i32_0 : i32, i32
  }
  func.func @transform_2(%arg0: i32) -> (i32, i32) {
    %c0_i32 = arith.constant 0 : i32
    %c0_i32_0 = arith.constant 0 : i32
    %c0_i32_1 = arith.constant 0 : i32
    return %c0_i32, %c0_i32_0 : i32, i32
  }
  func.func @transform_3(%arg0: i32) -> (i32, i32) {
    %c0_i32 = arith.constant 0 : i32
    %c0_i32_0 = arith.constant 0 : i32
    return %c0_i32, %arg0 : i32, i32
  }
}

</mosaic_0001>

<llo_original>
// kernel: fnnt_forward_t.1
$region0: #{fnnt_forward_t.1}
  #allocation0 [shape = 'u32[]', space=smem, size = 0x4, offset = 0x4, fixed_abs, tag = 'smem constant byte address 0x4 - core index']
  #allocation1 [shape = 'u32[144,128]{1,0:T(1,128)}', space=vmem, size = 0x12000, scoped, tag = 'internal scratch']
  %s0 = inlined_call_operand.vmem [shape: f32[4,2048], index: 0, kind: input, shape index: {}]
  %s1 = inlined_call_operand.vmem [shape: f32[33,71], index: 1, kind: input, shape index: {}]
  %s2 = inlined_call_operand.vmem [shape: f32[3,33], index: 2, kind: input, shape index: {}]
  %s3 = inlined_call_operand.hbm [shape: f32[3,2048], index: 3, kind: output, shape index: {}]
  %s4 = sld [smem:[#allocation0]]
  $region22: #{fnnt_forward_t.1} parent=0
    _
  %s6 = ssub.s32 1, %s4
  %s7 = scalar_select 0, %s6, %s4
  $region1: #{fnnt_forward_t.1} parent=0
    #allocation2 [shape = 'u8[32768]{0}', space=vmem, size = 0x8000, scoped, tag = 'output window, operand 0, single buffered']
    #allocation3 [shape = 's32[1]{0}', space=sflag, size = 0x4, scoped, tag = 'scoped memory for fnnt_forward_t.1']
    %8 = vsyncpa [#allocation3], 0
    // Predicated region
    $region2: #{fnnt_forward_t.1} parent=1 // pred_check
      _
    $region3: #{fnnt_forward_t.1} parent=1 // pred_check_branch
      %10 = sbr.rel (0) target = $region5
    $region4: #{fnnt_forward_t.1} parent=1 // pred_region
      _
    $region5: #{fnnt_forward_t.1} parent=1 // pred_fallthru
      _
    // Predicated region
    $region6: #{fnnt_forward_t.1} parent=1 // pred_check
      _
    $region7: #{fnnt_forward_t.1} parent=1 // pred_check_branch
      %12 = sbr.rel (0) target = $region9
    $region8: #{fnnt_forward_t.1} parent=1 // pred_region
      _
    $region9: #{fnnt_forward_t.1} parent=1 // pred_fallthru
      _
    // Predicated region
    $region10: #{fnnt_forward_t.1} parent=1 // pred_check
      _
    $region11: #{fnnt_forward_t.1} parent=1 // pred_check_branch
      %14 = sbr.rel (0) target = $region13
    $region12: #{fnnt_forward_t.1} parent=1 // pred_region
      _
    $region13: #{fnnt_forward_t.1} parent=1 // pred_fallthru
      _
    %v15 = vld [vmem:[%s1] sm:$0xff]
    %v16 = vld [vmem:[%s1 + $0x8] sm:$0xff]
    %v17 = vld [vmem:[%s1 + $0x10] sm:$0xff]
    %v18 = vld [vmem:[%s1 + $0x18] sm:$0xff]
    %v19 = vld [vmem:[%s1 + $0x20] sm:$0x1]
    %v20 = vld [vmem:[%s2] sm:$0x7]
    %22 = vset.pattern.permute.xlu0 4
    %23 = vperm.xlu0 %22, %v15
    %v24 = vpop.permute.xlu0 %23
    %27 = vset.pattern.permute.xlu0 4
    %28 = vperm.xlu0 %27, %v16
    %v29 = vpop.permute.xlu0 %28
    %32 = vset.pattern.permute.xlu0 4
    %33 = vperm.xlu0 %32, %v17
    %v34 = vpop.permute.xlu0 %33
    %37 = vset.pattern.permute.xlu0 4
    %38 = vperm.xlu0 %37, %v18
    %v39 = vpop.permute.xlu0 %38
    %42 = vset.pattern.permute.xlu0 4
    %43 = vperm.xlu0 %42, %v19
    %v44 = vpop.permute.xlu0 %43
    %v46 = vld [vmem:[%s0] sm:$0xff]
    %v47 = vld [vmem:[%s0 + $0x8] sm:$0xff]
    %v50 = vcombine.high %v46, %v46
    %v51 = vcombine.high %v47, %v47
    %vm52 = vcmask 31744
    %v53 = vsel %vm52, %v15, 0
    %v55 = vsel %vm52, %v16, 0
    %v57 = vsel %vm52, %v17, 0
    %v59 = vsel %vm52, %v18, 0
    %v61 = vsel %vm52, %v19, 0
    %vm63 = vcmask 1043456
    %v64 = vsel %vm63, %v46, 0
    %v66 = vsel %vm63, %v50, 0
    %v68 = vsel %vm63, %v47, 0
    %v70 = vsel %vm63, %v51, 0
    %72 = vmatprep.subr.mxu0 0.0
    %73 = vmatpush1.msra.mxu0 0.0
    %74 = vmatprep.subr.mxu0 0.0
    %75 = vmatpush1.msra.mxu0 0.0
    %76 = vmatprep.subr.mxu0 0.0
    %77 = vmatpush1.msra.mxu0 0.0
    %78 = vmatprep.subr.mxu0 0.0
    %79 = vmatpush1.msra.mxu0 0.0
    %80 = vmatprep.subr.mxu0 0.0
    %81 = vmatpush1.msra.mxu0 0.0
    %82 = vmatprep.subr.mxu0 0.0
    %83 = vmatpush1.msra.mxu0 0.0
    %84 = vmatprep.subr.mxu0 0.0
    %85 = vmatpush1.msra.mxu0 0.0
    %86 = vmatprep.subr.mxu0 0.0
    %87 = vmatpush1.msra.mxu0 0.0
    %88 = vmatprep.subr.mxu0 0.0
    %89 = vmatpush1.msra.mxu0 0.0
    %90 = vmatprep.subr.mxu0 0.0
    %91 = vmatpush1.msra.mxu0 0.0
    %92 = vmatprep.subr.mxu0 0.0
    %93 = vmatpush1.msra.mxu0 0.0
    %94 = vmatprep.subr.mxu0 0.0
    %95 = vmatpush1.msra.mxu0 0.0
    %96 = vmatprep.subr.mxu0 0.0
    %97 = vmatpush1.msra.mxu0 0.0
    %98 = vmatprep.subr.mxu0 0.0
    %99 = vmatpush1.msra.mxu0 0.0
    %100 = vmatprep.subr.mxu0 0.0
    %101 = vmatpush1.msra.mxu0 0.0
    %102 = vmatprep.subr.mxu0 %v66
    %103 = vmatpush1.msra.mxu0 %v64
    %104 = vmatprep.subr.mxu0 0.0
    %105 = vmatpush2.msra.mxu0 0.0
    %106 = vmatprep.subr.mxu0 0.0
    %107 = vmatpush2.msra.mxu0 0.0
    %108 = vmatprep.subr.mxu0 0.0
    %109 = vmatpush2.msra.mxu0 0.0
    %110 = vmatprep.subr.mxu0 0.0
    %111 = vmatpush2.msra.mxu0 0.0
    %112 = vmatprep.subr.mxu0 0.0
    %113 = vmatpush2.msra.mxu0 0.0
    %114 = vmatprep.subr.mxu0 0.0
    %115 = vmatpush2.msra.mxu0 0.0
    %116 = vmatprep.subr.mxu0 0.0
    %117 = vmatpush2.msra.mxu0 0.0
    %118 = vmatprep.subr.mxu0 0.0
    %119 = vmatpush2.msra.mxu0 0.0
    %120 = vmatprep.subr.mxu0 0.0
    %121 = vmatpush2.msra.mxu0 0.0
    %122 = vmatprep.subr.mxu0 0.0
    %123 = vmatpush2.msra.mxu0 0.0
    %124 = vmatprep.subr.mxu0 0.0
    %125 = vmatpush2.msra.mxu0 0.0
    %126 = vmatprep.subr.mxu0 0.0
    %127 = vmatpush2.msra.mxu0 0.0
    %128 = vmatprep.subr.mxu0 0.0
    %129 = vmatpush2.msra.mxu0 0.0
    %130 = vmatprep.subr.mxu0 0.0
    %131 = vmatpush2.msra.mxu0 0.0
    %132 = vmatprep.subr.mxu0 0.0
    %133 = vmatpush2.msra.mxu0 0.0
    %134 = vmatprep.subr.mxu0 0.0
    %135 = vmatpush2.msra.mxu0 0.0
    %136 = vmatprep.mubr.f32.mxu0 0.0
    %137 = vmatmul.mubr.f32.gmra.mxu0 %v53
    %v138 = vpop.f32.mrf.mxu0
    %v139 = vadd.f32 %v24, %v138
    %v140 = vpop.f32.mrf.mxu0
    %v141 = vadd.f32 %v24, %v140
    %142 = vmatprep.mubr.f32.mxu0 0.0
    %143 = vmatmul.mubr.f32.gmra.mxu0 %v55
    %v144 = vpop.f32.mrf.mxu0
    %v145 = vadd.f32 %v29, %v144
    %v146 = vpop.f32.mrf.mxu0
    %v147 = vadd.f32 %v29, %v146
    %148 = vmatprep.mubr.f32.mxu0 0.0
    %149 = vmatmul.mubr.f32.gmra.mxu0 %v57
    %v150 = vpop.f32.mrf.mxu0
    %v151 = vadd.f32 %v34, %v150
    %v152 = vpop.f32.mrf.mxu0
    %v153 = vadd.f32 %v34, %v152
    %154 = vmatprep.mubr.f32.mxu0 0.0
    %155 = vmatmul.mubr.f32.gmra.mxu0 %v59
    %v156 = vpop.f32.mrf.mxu0
    %v157 = vadd.f32 %v39, %v156
    %v158 = vpop.f32.mrf.mxu0
    %v159 = vadd.f32 %v39, %v158
    %160 = vmatprep.mubr.f32.mxu0 0.0
    %161 = vmatmul.mubr.f32.gmra.mxu0 %v61
    %v162 = vpop.f32.mrf.mxu0
    %v163 = vadd.f32 %v44, %v162
    %v164 = vpop.f32.mrf.mxu0
    %v165 = vadd.f32 %v44, %v164
    %166 = vdwg.mxu0
    %167 = vmatprep.subr.mxu0 0.0
    %168 = vmatpush1.msra.mxu0 0.0
    %169 = vmatprep.subr.mxu0 0.0
    %170 = vmatpush1.msra.mxu0 0.0
    %171 = vmatprep.subr.mxu0 0.0
    %172 = vmatpush1.msra.mxu0 0.0
    %173 = vmatprep.subr.mxu0 0.0
    %174 = vmatpush1.msra.mxu0 0.0
    %175 = vmatprep.subr.mxu0 0.0
    %176 = vmatpush1.msra.mxu0 0.0
    %177 = vmatprep.subr.mxu0 0.0
    %178 = vmatpush1.msra.mxu0 0.0
    %179 = vmatprep.subr.mxu0 0.0
    %180 = vmatpush1.msra.mxu0 0.0
    %181 = vmatprep.subr.mxu0 0.0
    %182 = vmatpush1.msra.mxu0 0.0
    %183 = vmatprep.subr.mxu0 0.0
    %184 = vmatpush1.msra.mxu0 0.0
    %185 = vmatprep.subr.mxu0 0.0
    %186 = vmatpush1.msra.mxu0 0.0
    %187 = vmatprep.subr.mxu0 0.0
    %188 = vmatpush1.msra.mxu0 0.0
    %189 = vmatprep.subr.mxu0 0.0
    %190 = vmatpush1.msra.mxu0 0.0
    %191 = vmatprep.subr.mxu0 0.0
    %192 = vmatpush1.msra.mxu0 0.0
    %193 = vmatprep.subr.mxu0 0.0
    %194 = vmatpush1.msra.mxu0 0.0
    %195 = vmatprep.subr.mxu0 0.0
    %196 = vmatpush1.msra.mxu0 0.0
    %197 = vmatprep.subr.mxu0 %v70
    %198 = vmatpush1.msra.mxu0 %v68
    %199 = vmatprep.subr.mxu0 0.0
    %200 = vmatpush2.msra.mxu0 0.0
    %201 = vmatprep.subr.mxu0 0.0
    %202 = vmatpush2.msra.mxu0 0.0
    %203 = vmatprep.subr.mxu0 0.0
    %204 = vmatpush2.msra.mxu0 0.0
    %205 = vmatprep.subr.mxu0 0.0
    %206 = vmatpush2.msra.mxu0 0.0
    %207 = vmatprep.subr.mxu0 0.0
    %208 = vmatpush2.msra.mxu0 0.0
    %209 = vmatprep.subr.mxu0 0.0
    %210 = vmatpush2.msra.mxu0 0.0
    %211 = vmatprep.subr.mxu0 0.0
    %212 = vmatpush2.msra.mxu0 0.0
    %213 = vmatprep.subr.mxu0 0.0
    %214 = vmatpush2.msra.mxu0 0.0
    %215 = vmatprep.subr.mxu0 0.0
    %216 = vmatpush2.msra.mxu0 0.0
    %217 = vmatprep.subr.mxu0 0.0
    %218 = vmatpush2.msra.mxu0 0.0
    %219 = vmatprep.subr.mxu0 0.0
    %220 = vmatpush2.msra.mxu0 0.0
    %221 = vmatprep.subr.mxu0 0.0
    %222 = vmatpush2.msra.mxu0 0.0
    %223 = vmatprep.subr.mxu0 0.0
    %224 = vmatpush2.msra.mxu0 0.0
    %225 = vmatprep.subr.mxu0 0.0
    %226 = vmatpush2.msra.mxu0 0.0
    %227 = vmatprep.subr.mxu0 0.0
    %228 = vmatpush2.msra.mxu0 0.0
    %229 = vmatprep.subr.mxu0 0.0
    %230 = vmatpush2.msra.mxu0 0.0
    %231 = vmatprep.mubr.f32.mxu0 0.0
    %232 = vmatmul.mubr.f32.gmra.mxu0 %v53
    %v233 = vpop.f32.mrf.mxu0
    %v234 = vadd.f32 %v24, %v233
    %v235 = vpop.f32.mrf.mxu0
    %v236 = vadd.f32 %v24, %v235
    %237 = vmatprep.mubr.f32.mxu0 0.0
    %238 = vmatmul.mubr.f32.gmra.mxu0 %v55
    %v239 = vpop.f32.mrf.mxu0
    %v240 = vadd.f32 %v29, %v239
    %v241 = vpop.f32.mrf.mxu0
    %v242 = vadd.f32 %v29, %v241
    %243 = vmatprep.mubr.f32.mxu0 0.0
    %244 = vmatmul.mubr.f32.gmra.mxu0 %v57
    %v245 = vpop.f32.mrf.mxu0
    %v246 = vadd.f32 %v34, %v245
    %v247 = vpop.f32.mrf.mxu0
    %v248 = vadd.f32 %v34, %v247
    %249 = vmatprep.mubr.f32.mxu0 0.0
    %250 = vmatmul.mubr.f32.gmra.mxu0 %v59
    %v251 = vpop.f32.mrf.mxu0
    %v252 = vadd.f32 %v39, %v251
    %v253 = vpop.f32.mrf.mxu0
    %v254 = vadd.f32 %v39, %v253
    %255 = vmatprep.mubr.f32.mxu0 0.0
    %256 = vmatmul.mubr.f32.gmra.mxu0 %v61
    %v257 = vpop.f32.mrf.mxu0
    %v258 = vadd.f32 %v44, %v257
    %v259 = vpop.f32.mrf.mxu0
    %v260 = vadd.f32 %v44, %v259
    %261 = vdwg.mxu0
    %v262 = vmax.f32 %v139, 0.0
    %v263 = vmax.f32 %v141, 0.0
    %v264 = vmax.f32 %v234, 0.0
    %v265 = vmax.f32 %v236, 0.0
    %v266 = vmax.f32 %v145, 0.0
    %v267 = vmax.f32 %v147, 0.0
    %v268 = vmax.f32 %v240, 0.0
    %v269 = vmax.f32 %v242, 0.0
    %v270 = vmax.f32 %v151, 0.0
    %v271 = vmax.f32 %v153, 0.0
    %v272 = vmax.f32 %v246, 0.0
    %v273 = vmax.f32 %v248, 0.0
    %v274 = vmax.f32 %v157, 0.0
    %v275 = vmax.f32 %v159, 0.0
    %v276 = vmax.f32 %v252, 0.0
    %v277 = vmax.f32 %v254, 0.0
    %v278 = vmax.f32 %v163, 0.0
    %v279 = vmax.f32 %v165, 0.0
    %v280 = vmax.f32 %v258, 0.0
    %v281 = vmax.f32 %v260, 0.0
    %282 = vrot.lane.b32.xlu0 %v15, 123
    %v283 = vpop.permute.xlu0 %282
    %284 = vrot.lane.b32.xlu0 %v16, 123
    %v285 = vpop.permute.xlu0 %284
    %286 = vrot.lane.b32.xlu0 %v17, 123
    %v287 = vpop.permute.xlu0 %286
    %288 = vrot.lane.b32.xlu0 %v18, 123
    %v289 = vpop.permute.xlu0 %288
    %290 = vrot.lane.b32.xlu0 %v19, 123
    %v291 = vpop.permute.xlu0 %290
    %vm292 = vcmask 269312
    %v293 = vsel %vm292, %v283, 0
    %v295 = vsel %vm292, %v285, 0
    %v297 = vsel %vm292, %v287, 0
    %v299 = vsel %vm292, %v289, 0
    %v301 = vsel %vm292, %v291, 0
    %vm303 = vcmask 1040384
    %v305 = vsel %vm303, %v278, 0
    %v308 = vsel %vm303, %v279, 0
    %v311 = vsel %vm303, %v280, 0
    %v314 = vsel %vm303, %v281, 0
    %316 = vmatprep.subr.mxu0 0.0
    %317 = vmatpush1.msra.mxu0 0.0
    %318 = vmatprep.subr.mxu0 0.0
    %319 = vmatpush1.msra.mxu0 0.0
    %320 = vmatprep.subr.mxu0 0.0
    %321 = vmatpush1.msra.mxu0 0.0
    %322 = vmatprep.subr.mxu0 0.0
    %323 = vmatpush1.msra.mxu0 0.0
    %324 = vmatprep.subr.mxu0 0.0
    %325 = vmatpush1.msra.mxu0 0.0
    %326 = vmatprep.subr.mxu0 0.0
    %327 = vmatpush1.msra.mxu0 0.0
    %328 = vmatprep.subr.mxu0 0.0
    %329 = vmatpush1.msra.mxu0 0.0
    %330 = vmatprep.subr.mxu0 0.0
    %331 = vmatpush1.msra.mxu0 0.0
    %332 = vmatprep.subr.mxu0 0.0
    %333 = vmatpush1.msra.mxu0 0.0
    %334 = vmatprep.subr.mxu0 0.0
    %335 = vmatpush1.msra.mxu0 0.0
    %336 = vmatprep.subr.mxu0 0.0
    %337 = vmatpush1.msra.mxu0 0.0
    %338 = vmatprep.subr.mxu0 %v308
    %339 = vmatpush1.msra.mxu0 %v305
    %340 = vmatprep.subr.mxu0 %v275
    %341 = vmatpush1.msra.mxu0 %v274
    %342 = vmatprep.subr.mxu0 %v271
    %343 = vmatpush1.msra.mxu0 %v270
    %344 = vmatprep.subr.mxu0 %v267
    %345 = vmatpush1.msra.mxu0 %v266
    %346 = vmatprep.subr.mxu0 %v263
    %347 = vmatpush1.msra.mxu0 %v262
    %348 = vmatprep.subr.mxu0 0.0
    %349 = vmatpush2.msra.mxu0 0.0
    %350 = vmatprep.subr.mxu0 0.0
    %351 = vmatpush2.msra.mxu0 0.0
    %352 = vmatprep.subr.mxu0 0.0
    %353 = vmatpush2.msra.mxu0 0.0
    %354 = vmatprep.subr.mxu0 0.0
    %355 = vmatpush2.msra.mxu0 0.0
    %356 = vmatprep.subr.mxu0 0.0
    %357 = vmatpush2.msra.mxu0 0.0
    %358 = vmatprep.subr.mxu0 0.0
    %359 = vmatpush2.msra.mxu0 0.0
    %360 = vmatprep.subr.mxu0 0.0
    %361 = vmatpush2.msra.mxu0 0.0
    %362 = vmatprep.subr.mxu0 0.0
    %363 = vmatpush2.msra.mxu0 0.0
    %364 = vmatprep.subr.mxu0 0.0
    %365 = vmatpush2.msra.mxu0 0.0
    %366 = vmatprep.subr.mxu0 0.0
    %367 = vmatpush2.msra.mxu0 0.0
    %368 = vmatprep.subr.mxu0 0.0
    %369 = vmatpush2.msra.mxu0 0.0
    %370 = vmatprep.subr.mxu0 0.0
    %371 = vmatpush2.msra.mxu0 0.0
    %372 = vmatprep.subr.mxu0 0.0
    %373 = vmatpush2.msra.mxu0 0.0
    %374 = vmatprep.subr.mxu0 0.0
    %375 = vmatpush2.msra.mxu0 0.0
    %376 = vmatprep.subr.mxu0 0.0
    %377 = vmatpush2.msra.mxu0 0.0
    %378 = vmatprep.subr.mxu0 0.0
    %379 = vmatpush2.msra.mxu0 0.0
    %380 = vmatprep.mubr.f32.mxu0 0.0
    %381 = vmatmul.mubr.f32.gmra.mxu0 %v293
    %v382 = vpop.f32.mrf.mxu0
    %v383 = vadd.f32 0.0, %v382
    %v384 = vpop.f32.mrf.mxu0
    %v385 = vadd.f32 0.0, %v384
    %386 = vmatprep.mubr.f32.mxu0 0.0
    %387 = vmatmul.mubr.f32.gmra.mxu0 %v295
    %v388 = vpop.f32.mrf.mxu0
    %v389 = vadd.f32 0.0, %v388
    %v390 = vpop.f32.mrf.mxu0
    %v391 = vadd.f32 0.0, %v390
    %392 = vmatprep.mubr.f32.mxu0 0.0
    %393 = vmatmul.mubr.f32.gmra.mxu0 %v297
    %v394 = vpop.f32.mrf.mxu0
    %v395 = vadd.f32 0.0, %v394
    %v396 = vpop.f32.mrf.mxu0
    %v397 = vadd.f32 0.0, %v396
    %398 = vmatprep.mubr.f32.mxu0 0.0
    %399 = vmatmul.mubr.f32.gmra.mxu0 %v299
    %v400 = vpop.f32.mrf.mxu0
    %v401 = vadd.f32 0.0, %v400
    %v402 = vpop.f32.mrf.mxu0
    %v403 = vadd.f32 0.0, %v402
    %404 = vmatprep.mubr.f32.mxu0 0.0
    %405 = vmatmul.mubr.f32.gmra.mxu0 %v301
    %v406 = vpop.f32.mrf.mxu0
    %v407 = vadd.f32 0.0, %v406
    %v408 = vpop.f32.mrf.mxu0
    %v409 = vadd.f32 0.0, %v408
    %410 = vdwg.mxu0
    %411 = vmatprep.subr.mxu0 0.0
    %412 = vmatpush1.msra.mxu0 0.0
    %413 = vmatprep.subr.mxu0 0.0
    %414 = vmatpush1.msra.mxu0 0.0
    %415 = vmatprep.subr.mxu0 0.0
    %416 = vmatpush1.msra.mxu0 0.0
    %417 = vmatprep.subr.mxu0 0.0
    %418 = vmatpush1.msra.mxu0 0.0
    %419 = vmatprep.subr.mxu0 0.0
    %420 = vmatpush1.msra.mxu0 0.0
    %421 = vmatprep.subr.mxu0 0.0
    %422 = vmatpush1.msra.mxu0 0.0
    %423 = vmatprep.subr.mxu0 0.0
    %424 = vmatpush1.msra.mxu0 0.0
    %425 = vmatprep.subr.mxu0 0.0
    %426 = vmatpush1.msra.mxu0 0.0
    %427 = vmatprep.subr.mxu0 0.0
    %428 = vmatpush1.msra.mxu0 0.0
    %429 = vmatprep.subr.mxu0 0.0
    %430 = vmatpush1.msra.mxu0 0.0
    %431 = vmatprep.subr.mxu0 0.0
    %432 = vmatpush1.msra.mxu0 0.0
    %433 = vmatprep.subr.mxu0 %v314
    %434 = vmatpush1.msra.mxu0 %v311
    %435 = vmatprep.subr.mxu0 %v277
    %436 = vmatpush1.msra.mxu0 %v276
    %437 = vmatprep.subr.mxu0 %v273
    %438 = vmatpush1.msra.mxu0 %v272
    %439 = vmatprep.subr.mxu0 %v269
    %440 = vmatpush1.msra.mxu0 %v268
    %441 = vmatprep.subr.mxu0 %v265
    %442 = vmatpush1.msra.mxu0 %v264
    %443 = vmatprep.subr.mxu0 0.0
    %444 = vmatpush2.msra.mxu0 0.0
    %445 = vmatprep.subr.mxu0 0.0
    %446 = vmatpush2.msra.mxu0 0.0
    %447 = vmatprep.subr.mxu0 0.0
    %448 = vmatpush2.msra.mxu0 0.0
    %449 = vmatprep.subr.mxu0 0.0
    %450 = vmatpush2.msra.mxu0 0.0
    %451 = vmatprep.subr.mxu0 0.0
    %452 = vmatpush2.msra.mxu0 0.0
    %453 = vmatprep.subr.mxu0 0.0
    %454 = vmatpush2.msra.mxu0 0.0
    %455 = vmatprep.subr.mxu0 0.0
    %456 = vmatpush2.msra.mxu0 0.0
    %457 = vmatprep.subr.mxu0 0.0
    %458 = vmatpush2.msra.mxu0 0.0
    %459 = vmatprep.subr.mxu0 0.0
    %460 = vmatpush2.msra.mxu0 0.0
    %461 = vmatprep.subr.mxu0 0.0
    %462 = vmatpush2.msra.mxu0 0.0
    %463 = vmatprep.subr.mxu0 0.0
    %464 = vmatpush2.msra.mxu0 0.0
    %465 = vmatprep.subr.mxu0 0.0
    %466 = vmatpush2.msra.mxu0 0.0
    %467 = vmatprep.subr.mxu0 0.0
    %468 = vmatpush2.msra.mxu0 0.0
    %469 = vmatprep.subr.mxu0 0.0
    %470 = vmatpush2.msra.mxu0 0.0
    %471 = vmatprep.subr.mxu0 0.0
    %472 = vmatpush2.msra.mxu0 0.0
    %473 = vmatprep.subr.mxu0 0.0
    %474 = vmatpush2.msra.mxu0 0.0
    %475 = vmatprep.mubr.f32.mxu0 0.0
    %476 = vmatmul.mubr.f32.gmra.mxu0 %v293
    %v477 = vpop.f32.mrf.mxu0
    %v478 = vadd.f32 0.0, %v477
    %v479 = vpop.f32.mrf.mxu0
    %v480 = vadd.f32 0.0, %v479
    %481 = vmatprep.mubr.f32.mxu0 0.0
    %482 = vmatmul.mubr.f32.gmra.mxu0 %v295
    %v483 = vpop.f32.mrf.mxu0
    %v484 = vadd.f32 0.0, %v483
    %v485 = vpop.f32.mrf.mxu0
    %v486 = vadd.f32 0.0, %v485
    %487 = vmatprep.mubr.f32.mxu0 0.0
    %488 = vmatmul.mubr.f32.gmra.mxu0 %v297
    %v489 = vpop.f32.mrf.mxu0
    %v490 = vadd.f32 0.0, %v489
    %v491 = vpop.f32.mrf.mxu0
    %v492 = vadd.f32 0.0, %v491
    %493 = vmatprep.mubr.f32.mxu0 0.0
    %494 = vmatmul.mubr.f32.gmra.mxu0 %v299
    %v495 = vpop.f32.mrf.mxu0
    %v496 = vadd.f32 0.0, %v495
    %v497 = vpop.f32.mrf.mxu0
    %v498 = vadd.f32 0.0, %v497
    %499 = vmatprep.mubr.f32.mxu0 0.0
    %500 = vmatmul.mubr.f32.gmra.mxu0 %v301
    %v501 = vpop.f32.mrf.mxu0
    %v502 = vadd.f32 0.0, %v501
    %v503 = vpop.f32.mrf.mxu0
    %v504 = vadd.f32 0.0, %v503
    %505 = vdwg.mxu0
    %v506 = vmax.f32 %v383, 0.0
    %v507 = vmax.f32 %v385, 0.0
    %v508 = vmax.f32 %v478, 0.0
    %v509 = vmax.f32 %v480, 0.0
    %v510 = vmax.f32 %v389, 0.0
    %v511 = vmax.f32 %v391, 0.0
    %v512 = vmax.f32 %v484, 0.0
    %v513 = vmax.f32 %v486, 0.0
    %v514 = vmax.f32 %v395, 0.0
    %v515 = vmax.f32 %v397, 0.0
    %v516 = vmax.f32 %v490, 0.0
    %v517 = vmax.f32 %v492, 0.0
    %v518 = vmax.f32 %v401, 0.0
    %v519 = vmax.f32 %v403, 0.0
    %v520 = vmax.f32 %v496, 0.0
    %v521 = vmax.f32 %v498, 0.0
    %v522 = vmax.f32 %v407, 0.0
    %v523 = vmax.f32 %v409, 0.0
    %v524 = vmax.f32 %v502, 0.0
    %v525 = vmax.f32 %v504, 0.0
    %526 = vrot.lane.b32.xlu0 %v15, 90
    %v527 = vpop.permute.xlu0 %526
    %528 = vrot.lane.b32.xlu0 %v16, 90
    %v529 = vpop.permute.xlu0 %528
    %530 = vrot.lane.b32.xlu0 %v17, 90
    %v531 = vpop.permute.xlu0 %530
    %532 = vrot.lane.b32.xlu0 %v18, 90
    %v533 = vpop.permute.xlu0 %532
    %534 = vrot.lane.b32.xlu0 %v19, 90
    %v535 = vpop.permute.xlu0 %534
    %v536 = vsel %vm292, %v527, 0
    %v538 = vsel %vm292, %v529, 0
    %v540 = vsel %vm292, %v531, 0
    %v542 = vsel %vm292, %v533, 0
    %v544 = vsel %vm292, %v535, 0
    %v547 = vsel %vm303, %v522, 0
    %v550 = vsel %vm303, %v523, 0
    %v553 = vsel %vm303, %v524, 0
    %v556 = vsel %vm303, %v525, 0
    %558 = vmatprep.subr.mxu0 0.0
    %559 = vmatpush1.msra.mxu0 0.0
    %560 = vmatprep.subr.mxu0 0.0
    %561 = vmatpush1.msra.mxu0 0.0
    %562 = vmatprep.subr.mxu0 0.0
    %563 = vmatpush1.msra.mxu0 0.0
    %564 = vmatprep.subr.mxu0 0.0
    %565 = vmatpush1.msra.mxu0 0.0
    %566 = vmatprep.subr.mxu0 0.0
    %567 = vmatpush1.msra.mxu0 0.0
    %568 = vmatprep.subr.mxu0 0.0
    %569 = vmatpush1.msra.mxu0 0.0
    %570 = vmatprep.subr.mxu0 0.0
    %571 = vmatpush1.msra.mxu0 0.0
    %572 = vmatprep.subr.mxu0 0.0
    %573 = vmatpush1.msra.mxu0 0.0
    %574 = vmatprep.subr.mxu0 0.0
    %575 = vmatpush1.msra.mxu0 0.0
    %576 = vmatprep.subr.mxu0 0.0
    %577 = vmatpush1.msra.mxu0 0.0
    %578 = vmatprep.subr.mxu0 0.0
    %579 = vmatpush1.msra.mxu0 0.0
    %580 = vmatprep.subr.mxu0 %v550
    %581 = vmatpush1.msra.mxu0 %v547
    %582 = vmatprep.subr.mxu0 %v519
    %583 = vmatpush1.msra.mxu0 %v518
    %584 = vmatprep.subr.mxu0 %v515
    %585 = vmatpush1.msra.mxu0 %v514
    %586 = vmatprep.subr.mxu0 %v511
    %587 = vmatpush1.msra.mxu0 %v510
    %588 = vmatprep.subr.mxu0 %v507
    %589 = vmatpush1.msra.mxu0 %v506
    %590 = vmatprep.subr.mxu0 0.0
    %591 = vmatpush2.msra.mxu0 0.0
    %592 = vmatprep.subr.mxu0 0.0
    %593 = vmatpush2.msra.mxu0 0.0
    %594 = vmatprep.subr.mxu0 0.0
    %595 = vmatpush2.msra.mxu0 0.0
    %596 = vmatprep.subr.mxu0 0.0
    %597 = vmatpush2.msra.mxu0 0.0
    %598 = vmatprep.subr.mxu0 0.0
    %599 = vmatpush2.msra.mxu0 0.0
    %600 = vmatprep.subr.mxu0 0.0
    %601 = vmatpush2.msra.mxu0 0.0
    %602 = vmatprep.subr.mxu0 0.0
    %603 = vmatpush2.msra.mxu0 0.0
    %604 = vmatprep.subr.mxu0 0.0
    %605 = vmatpush2.msra.mxu0 0.0
    %606 = vmatprep.subr.mxu0 0.0
    %607 = vmatpush2.msra.mxu0 0.0
    %608 = vmatprep.subr.mxu0 0.0
    %609 = vmatpush2.msra.mxu0 0.0
    %610 = vmatprep.subr.mxu0 0.0
    %611 = vmatpush2.msra.mxu0 0.0
    %612 = vmatprep.subr.mxu0 0.0
    %613 = vmatpush2.msra.mxu0 0.0
    %614 = vmatprep.subr.mxu0 0.0
    %615 = vmatpush2.msra.mxu0 0.0
    %616 = vmatprep.subr.mxu0 0.0
    %617 = vmatpush2.msra.mxu0 0.0
    %618 = vmatprep.subr.mxu0 0.0
    %619 = vmatpush2.msra.mxu0 0.0
    %620 = vmatprep.subr.mxu0 0.0
    %621 = vmatpush2.msra.mxu0 0.0
    %622 = vmatprep.mubr.f32.mxu0 0.0
    %623 = vmatmul.mubr.f32.gmra.mxu0 %v536
    %v624 = vpop.f32.mrf.mxu0
    %v625 = vadd.f32 0.0, %v624
    %v626 = vpop.f32.mrf.mxu0
    %v627 = vadd.f32 0.0, %v626
    %628 = vmatprep.mubr.f32.mxu0 0.0
    %629 = vmatmul.mubr.f32.gmra.mxu0 %v538
    %v630 = vpop.f32.mrf.mxu0
    %v631 = vadd.f32 0.0, %v630
    %v632 = vpop.f32.mrf.mxu0
    %v633 = vadd.f32 0.0, %v632
    %634 = vmatprep.mubr.f32.mxu0 0.0
    %635 = vmatmul.mubr.f32.gmra.mxu0 %v540
    %v636 = vpop.f32.mrf.mxu0
    %v637 = vadd.f32 0.0, %v636
    %v638 = vpop.f32.mrf.mxu0
    %v639 = vadd.f32 0.0, %v638
    %640 = vmatprep.mubr.f32.mxu0 0.0
    %641 = vmatmul.mubr.f32.gmra.mxu0 %v542
    %v642 = vpop.f32.mrf.mxu0
    %v643 = vadd.f32 0.0, %v642
    %v644 = vpop.f32.mrf.mxu0
    %v645 = vadd.f32 0.0, %v644
    %646 = vmatprep.mubr.f32.mxu0 0.0
    %647 = vmatmul.mubr.f32.gmra.mxu0 %v544
    %v648 = vpop.f32.mrf.mxu0
    %v649 = vadd.f32 0.0, %v648
    %v650 = vpop.f32.mrf.mxu0
    %v651 = vadd.f32 0.0, %v650
    %652 = vdwg.mxu0
    %653 = vmatprep.subr.mxu0 0.0
    %654 = vmatpush1.msra.mxu0 0.0
    %655 = vmatprep.subr.mxu0 0.0
    %656 = vmatpush1.msra.mxu0 0.0
    %657 = vmatprep.subr.mxu0 0.0
    %658 = vmatpush1.msra.mxu0 0.0
    %659 = vmatprep.subr.mxu0 0.0
    %660 = vmatpush1.msra.mxu0 0.0
    %661 = vmatprep.subr.mxu0 0.0
    %662 = vmatpush1.msra.mxu0 0.0
    %663 = vmatprep.subr.mxu0 0.0
    %664 = vmatpush1.msra.mxu0 0.0
    %665 = vmatprep.subr.mxu0 0.0
    %666 = vmatpush1.msra.mxu0 0.0
    %667 = vmatprep.subr.mxu0 0.0
    %668 = vmatpush1.msra.mxu0 0.0
    %669 = vmatprep.subr.mxu0 0.0
    %670 = vmatpush1.msra.mxu0 0.0
    %671 = vmatprep.subr.mxu0 0.0
    %672 = vmatpush1.msra.mxu0 0.0
    %673 = vmatprep.subr.mxu0 0.0
    %674 = vmatpush1.msra.mxu0 0.0
    %675 = vmatprep.subr.mxu0 %v556
    %676 = vmatpush1.msra.mxu0 %v553
    %677 = vmatprep.subr.mxu0 %v521
    %678 = vmatpush1.msra.mxu0 %v520
    %679 = vmatprep.subr.mxu0 %v517
    %680 = vmatpush1.msra.mxu0 %v516
    %681 = vmatprep.subr.mxu0 %v513
    %682 = vmatpush1.msra.mxu0 %v512
    %683 = vmatprep.subr.mxu0 %v509
    %684 = vmatpush1.msra.mxu0 %v508
    %685 = vmatprep.subr.mxu0 0.0
    %686 = vmatpush2.msra.mxu0 0.0
    %687 = vmatprep.subr.mxu0 0.0
    %688 = vmatpush2.msra.mxu0 0.0
    %689 = vmatprep.subr.mxu0 0.0
    %690 = vmatpush2.msra.mxu0 0.0
    %691 = vmatprep.subr.mxu0 0.0
    %692 = vmatpush2.msra.mxu0 0.0
    %693 = vmatprep.subr.mxu0 0.0
    %694 = vmatpush2.msra.mxu0 0.0
    %695 = vmatprep.subr.mxu0 0.0
    %696 = vmatpush2.msra.mxu0 0.0
    %697 = vmatprep.subr.mxu0 0.0
    %698 = vmatpush2.msra.mxu0 0.0
    %699 = vmatprep.subr.mxu0 0.0
    %700 = vmatpush2.msra.mxu0 0.0
    %701 = vmatprep.subr.mxu0 0.0
    %702 = vmatpush2.msra.mxu0 0.0
    %703 = vmatprep.subr.mxu0 0.0
    %704 = vmatpush2.msra.mxu0 0.0
    %705 = vmatprep.subr.mxu0 0.0
    %706 = vmatpush2.msra.mxu0 0.0
    %707 = vmatprep.subr.mxu0 0.0
    %708 = vmatpush2.msra.mxu0 0.0
    %709 = vmatprep.subr.mxu0 0.0
    %710 = vmatpush2.msra.mxu0 0.0
    %711 = vmatprep.subr.mxu0 0.0
    %712 = vmatpush2.msra.mxu0 0.0
    %713 = vmatprep.subr.mxu0 0.0
    %714 = vmatpush2.msra.mxu0 0.0
    %715 = vmatprep.subr.mxu0 0.0
    %716 = vmatpush2.msra.mxu0 0.0
    %717 = vmatprep.mubr.f32.mxu0 0.0
    %718 = vmatmul.mubr.f32.gmra.mxu0 %v536
    %v719 = vpop.f32.mrf.mxu0
    %v720 = vadd.f32 0.0, %v719
    %v721 = vpop.f32.mrf.mxu0
    %v722 = vadd.f32 0.0, %v721
    %723 = vmatprep.mubr.f32.mxu0 0.0
    %724 = vmatmul.mubr.f32.gmra.mxu0 %v538
    %v725 = vpop.f32.mrf.mxu0
    %v726 = vadd.f32 0.0, %v725
    %v727 = vpop.f32.mrf.mxu0
    %v728 = vadd.f32 0.0, %v727
    %729 = vmatprep.mubr.f32.mxu0 0.0
    %730 = vmatmul.mubr.f32.gmra.mxu0 %v540
    %v731 = vpop.f32.mrf.mxu0
    %v732 = vadd.f32 0.0, %v731
    %v733 = vpop.f32.mrf.mxu0
    %v734 = vadd.f32 0.0, %v733
    %735 = vmatprep.mubr.f32.mxu0 0.0
    %736 = vmatmul.mubr.f32.gmra.mxu0 %v542
    %v737 = vpop.f32.mrf.mxu0
    %v738 = vadd.f32 0.0, %v737
    %v739 = vpop.f32.mrf.mxu0
    %v740 = vadd.f32 0.0, %v739
    %741 = vmatprep.mubr.f32.mxu0 0.0
    %742 = vmatmul.mubr.f32.gmra.mxu0 %v544
    %v743 = vpop.f32.mrf.mxu0
    %v744 = vadd.f32 0.0, %v743
    %v745 = vpop.f32.mrf.mxu0
    %v746 = vadd.f32 0.0, %v745
    %747 = vdwg.mxu0
    %v748 = vmax.f32 %v625, 0.0
    %v749 = vmax.f32 %v627, 0.0
    %v750 = vmax.f32 %v720, 0.0
    %v751 = vmax.f32 %v722, 0.0
    %v752 = vmax.f32 %v631, 0.0
    %v753 = vmax.f32 %v633, 0.0
    %v754 = vmax.f32 %v726, 0.0
    %v755 = vmax.f32 %v728, 0.0
    %v756 = vmax.f32 %v637, 0.0
    %v757 = vmax.f32 %v639, 0.0
    %v758 = vmax.f32 %v732, 0.0
    %v759 = vmax.f32 %v734, 0.0
    %v760 = vmax.f32 %v643, 0.0
    %v761 = vmax.f32 %v645, 0.0
    %v762 = vmax.f32 %v738, 0.0
    %v763 = vmax.f32 %v740, 0.0
    %v764 = vmax.f32 %v649, 0.0
    %v765 = vmax.f32 %v651, 0.0
    %v766 = vmax.f32 %v744, 0.0
    %v767 = vmax.f32 %v746, 0.0
    %v769 = vsel %vm292, %v20, 0
    %v772 = vsel %vm303, %v764, 0
    %v775 = vsel %vm303, %v765, 0
    %v778 = vsel %vm303, %v766, 0
    %v781 = vsel %vm303, %v767, 0
    %783 = vmatprep.subr.mxu0 0.0
    %784 = vmatpush1.msra.mxu0 0.0
    %785 = vmatprep.subr.mxu0 0.0
    %786 = vmatpush1.msra.mxu0 0.0
    %787 = vmatprep.subr.mxu0 0.0
    %788 = vmatpush1.msra.mxu0 0.0
    %789 = vmatprep.subr.mxu0 0.0
    %790 = vmatpush1.msra.mxu0 0.0
    %791 = vmatprep.subr.mxu0 0.0
    %792 = vmatpush1.msra.mxu0 0.0
    %793 = vmatprep.subr.mxu0 0.0
    %794 = vmatpush1.msra.mxu0 0.0
    %795 = vmatprep.subr.mxu0 0.0
    %796 = vmatpush1.msra.mxu0 0.0
    %797 = vmatprep.subr.mxu0 0.0
    %798 = vmatpush1.msra.mxu0 0.0
    %799 = vmatprep.subr.mxu0 0.0
    %800 = vmatpush1.msra.mxu0 0.0
    %801 = vmatprep.subr.mxu0 0.0
    %802 = vmatpush1.msra.mxu0 0.0
    %803 = vmatprep.subr.mxu0 0.0
    %804 = vmatpush1.msra.mxu0 0.0
    %805 = vmatprep.subr.mxu0 %v775
    %806 = vmatpush1.msra.mxu0 %v772
    %807 = vmatprep.subr.mxu0 %v761
    %808 = vmatpush1.msra.mxu0 %v760
    %809 = vmatprep.subr.mxu0 %v757
    %810 = vmatpush1.msra.mxu0 %v756
    %811 = vmatprep.subr.mxu0 %v753
    %812 = vmatpush1.msra.mxu0 %v752
    %813 = vmatprep.subr.mxu0 %v749
    %814 = vmatpush1.msra.mxu0 %v748
    %815 = vmatprep.subr.mxu0 0.0
    %816 = vmatpush2.msra.mxu0 0.0
    %817 = vmatprep.subr.mxu0 0.0
    %818 = vmatpush2.msra.mxu0 0.0
    %819 = vmatprep.subr.mxu0 0.0
    %820 = vmatpush2.msra.mxu0 0.0
    %821 = vmatprep.subr.mxu0 0.0
    %822 = vmatpush2.msra.mxu0 0.0
    %823 = vmatprep.subr.mxu0 0.0
    %824 = vmatpush2.msra.mxu0 0.0
    %825 = vmatprep.subr.mxu0 0.0
    %826 = vmatpush2.msra.mxu0 0.0
    %827 = vmatprep.subr.mxu0 0.0
    %828 = vmatpush2.msra.mxu0 0.0
    %829 = vmatprep.subr.mxu0 0.0
    %830 = vmatpush2.msra.mxu0 0.0
    %831 = vmatprep.subr.mxu0 0.0
    %832 = vmatpush2.msra.mxu0 0.0
    %833 = vmatprep.subr.mxu0 0.0
    %834 = vmatpush2.msra.mxu0 0.0
    %835 = vmatprep.subr.mxu0 0.0
    %836 = vmatpush2.msra.mxu0 0.0
    %837 = vmatprep.subr.mxu0 0.0
    %838 = vmatpush2.msra.mxu0 0.0
    %839 = vmatprep.subr.mxu0 0.0
    %840 = vmatpush2.msra.mxu0 0.0
    %841 = vmatprep.subr.mxu0 0.0
    %842 = vmatpush2.msra.mxu0 0.0
    %843 = vmatprep.subr.mxu0 0.0
    %844 = vmatpush2.msra.mxu0 0.0
    %845 = vmatprep.subr.mxu0 0.0
    %846 = vmatpush2.msra.mxu0 0.0
    %847 = vmatprep.mubr.f32.mxu0 0.0
    %848 = vmatmul.mubr.f32.gmra.mxu0 %v769
    %v849 = vpop.f32.mrf.mxu0
    %v850 = vadd.f32 0.0, %v849
    %v851 = vpop.f32.mrf.mxu0
    %v852 = vadd.f32 0.0, %v851
    %853 = vdwg.mxu0
    %854 = vmatprep.subr.mxu0 0.0
    %855 = vmatpush1.msra.mxu0 0.0
    %856 = vmatprep.subr.mxu0 0.0
    %857 = vmatpush1.msra.mxu0 0.0
    %858 = vmatprep.subr.mxu0 0.0
    %859 = vmatpush1.msra.mxu0 0.0
    %860 = vmatprep.subr.mxu0 0.0
    %861 = vmatpush1.msra.mxu0 0.0
    %862 = vmatprep.subr.mxu0 0.0
    %863 = vmatpush1.msra.mxu0 0.0
    %864 = vmatprep.subr.mxu0 0.0
    %865 = vmatpush1.msra.mxu0 0.0
    %866 = vmatprep.subr.mxu0 0.0
    %867 = vmatpush1.msra.mxu0 0.0
    %868 = vmatprep.subr.mxu0 0.0
    %869 = vmatpush1.msra.mxu0 0.0
    %870 = vmatprep.subr.mxu0 0.0
    %871 = vmatpush1.msra.mxu0 0.0
    %872 = vmatprep.subr.mxu0 0.0
    %873 = vmatpush1.msra.mxu0 0.0
    %874 = vmatprep.subr.mxu0 0.0
    %875 = vmatpush1.msra.mxu0 0.0
    %876 = vmatprep.subr.mxu0 %v781
    %877 = vmatpush1.msra.mxu0 %v778
    %878 = vmatprep.subr.mxu0 %v763
    %879 = vmatpush1.msra.mxu0 %v762
    %880 = vmatprep.subr.mxu0 %v759
    %881 = vmatpush1.msra.mxu0 %v758
    %882 = vmatprep.subr.mxu0 %v755
    %883 = vmatpush1.msra.mxu0 %v754
    %884 = vmatprep.subr.mxu0 %v751
    %885 = vmatpush1.msra.mxu0 %v750
    %886 = vmatprep.subr.mxu0 0.0
    %887 = vmatpush2.msra.mxu0 0.0
    %888 = vmatprep.subr.mxu0 0.0
    %889 = vmatpush2.msra.mxu0 0.0
    %890 = vmatprep.subr.mxu0 0.0
    %891 = vmatpush2.msra.mxu0 0.0
    %892 = vmatprep.subr.mxu0 0.0
    %893 = vmatpush2.msra.mxu0 0.0
    %894 = vmatprep.subr.mxu0 0.0
    %895 = vmatpush2.msra.mxu0 0.0
    %896 = vmatprep.subr.mxu0 0.0
    %897 = vmatpush2.msra.mxu0 0.0
    %898 = vmatprep.subr.mxu0 0.0
    %899 = vmatpush2.msra.mxu0 0.0
    %900 = vmatprep.subr.mxu0 0.0
    %901 = vmatpush2.msra.mxu0 0.0
    %902 = vmatprep.subr.mxu0 0.0
    %903 = vmatpush2.msra.mxu0 0.0
    %904 = vmatprep.subr.mxu0 0.0
    %905 = vmatpush2.msra.mxu0 0.0
    %906 = vmatprep.subr.mxu0 0.0
    %907 = vmatpush2.msra.mxu0 0.0
    %908 = vmatprep.subr.mxu0 0.0
    %909 = vmatpush2.msra.mxu0 0.0
    %910 = vmatprep.subr.mxu0 0.0
    %911 = vmatpush2.msra.mxu0 0.0
    %912 = vmatprep.subr.mxu0 0.0
    %913 = vmatpush2.msra.mxu0 0.0
    %914 = vmatprep.subr.mxu0 0.0
    %915 = vmatpush2.msra.mxu0 0.0
    %916 = vmatprep.subr.mxu0 0.0
    %917 = vmatpush2.msra.mxu0 0.0
    %918 = vmatprep.mubr.f32.mxu0 0.0
    %919 = vmatmul.mubr.f32.gmra.mxu0 %v769
    %v920 = vpop.f32.mrf.mxu0
    %v921 = vadd.f32 0.0, %v920
    %v922 = vpop.f32.mrf.mxu0
    %v923 = vadd.f32 0.0, %v922
    %924 = vdwg.mxu0
    %v929 = vcombine.low %v850, %v852
    %v930 = vcombine.low %v921, %v923
    %933 = vst [vmem:[#allocation2] sm:$0x77] %v929
    %934 = vst [vmem:[#allocation2 + $0x8] sm:$0x77] %v930
    %s935 = scalar_lea.vmem %s0, 16
    %v936 = vld [vmem:[%s935] sm:$0xff]
    %v937 = vld [vmem:[%s935 + $0x8] sm:$0xff]
    %v940 = vcombine.high %v936, %v936
    %v941 = vcombine.high %v937, %v937
    %v942 = vsel %vm63, %v936, 0
    %v944 = vsel %vm63, %v940, 0
    %v946 = vsel %vm63, %v937, 0
    %v948 = vsel %vm63, %v941, 0
    %950 = vmatprep.subr.mxu0 0.0
    %951 = vmatpush1.msra.mxu0 0.0
    %952 = vmatprep.subr.mxu0 0.0
    %953 = vmatpush1.msra.mxu0 0.0
    %954 = vmatprep.subr.mxu0 0.0
    %955 = vmatpush1.msra.mxu0 0.0
    %956 = vmatprep.subr.mxu0 0.0
    %957 = vmatpush1.msra.mxu0 0.0
    %958 = vmatprep.subr.mxu0 0.0
    %959 = vmatpush1.msra.mxu0 0.0
    %960 = vmatprep.subr.mxu0 0.0
    %961 = vmatpush1.msra.mxu0 0.0
    %962 = vmatprep.subr.mxu0 0.0
    %963 = vmatpush1.msra.mxu0 0.0
    %964 = vmatprep.subr.mxu0 0.0
    %965 = vmatpush1.msra.mxu0 0.0
    %966 = vmatprep.subr.mxu0 0.0
    %967 = vmatpush1.msra.mxu0 0.0
    %968 = vmatprep.subr.mxu0 0.0
    %969 = vmatpush1.msra.mxu0 0.0
    %970 = vmatprep.subr.mxu0 0.0
    %971 = vmatpush1.msra.mxu0 0.0
    %972 = vmatprep.subr.mxu0 0.0
    %973 = vmatpush1.msra.mxu0 0.0
    %974 = vmatprep.subr.mxu0 0.0
    %975 = vmatpush1.msra.mxu0 0.0
    %976 = vmatprep.subr.mxu0 0.0
    %977 = vmatpush1.msra.mxu0 0.0
    %978 = vmatprep.subr.mxu0 0.0
    %979 = vmatpush1.msra.mxu0 0.0
    %980 = vmatprep.subr.mxu0 %v944
    %981 = vmatpush1.msra.mxu0 %v942
    %982 = vmatprep.subr.mxu0 0.0
    %983 = vmatpush2.msra.mxu0 0.0
    %984 = vmatprep.subr.mxu0 0.0
    %985 = vmatpush2.msra.mxu0 0.0
    %986 = vmatprep.subr.mxu0 0.0
    %987 = vmatpush2.msra.mxu0 0.0
    %988 = vmatprep.subr.mxu0 0.0
    %989 = vmatpush2.msra.mxu0 0.0
    %990 = vmatprep.subr.mxu0 0.0
    %991 = vmatpush2.msra.mxu0 0.0
    %992 = vmatprep.subr.mxu0 0.0
    %993 = vmatpush2.msra.mxu0 0.0
    %994 = vmatprep.subr.mxu0 0.0
    %995 = vmatpush2.msra.mxu0 0.0
    %996 = vmatprep.subr.mxu0 0.0
    %997 = vmatpush2.msra.mxu0 0.0
    %998 = vmatprep.subr.mxu0 0.0
    %999 = vmatpush2.msra.mxu0 0.0
    %1000 = vmatprep.subr.mxu0 0.0
    %1001 = vmatpush2.msra.mxu0 0.0
    %1002 = vmatprep.subr.mxu0 0.0
    %1003 = vmatpush2.msra.mxu0 0.0
    %1004 = vmatprep.subr.mxu0 0.0
    %1005 = vmatpush2.msra.mxu0 0.0
    %1006 = vmatprep.subr.mxu0 0.0
    %1007 = vmatpush2.msra.mxu0 0.0
    %1008 = vmatprep.subr.mxu0 0.0
    %1009 = vmatpush2.msra.mxu0 0.0
    %1010 = vmatprep.subr.mxu0 0.0
    %1011 = vmatpush2.msra.mxu0 0.0
    %1012 = vmatprep.subr.mxu0 0.0
    %1013 = vmatpush2.msra.mxu0 0.0
    %1014 = vmatprep.mubr.f32.mxu0 0.0
    %1015 = vmatmul.mubr.f32.gmra.mxu0 %v53
    %v1016 = vpop.f32.mrf.mxu0
    %v1017 = vadd.f32 %v24, %v1016
    %v1018 = vpop.f32.mrf.mxu0
    %v1019 = vadd.f32 %v24, %v1018
    %1020 = vmatprep.mubr.f32.mxu0 0.0
    %1021 = vmatmul.mubr.f32.gmra.mxu0 %v55
    %v1022 = vpop.f32.mrf.mxu0
    %v1023 = vadd.f32 %v29, %v1022
    %v1024 = vpop.f32.mrf.mxu0
    %v1025 = vadd.f32 %v29, %v1024
    %1026 = vmatprep.mubr.f32.mxu0 0.0
    %1027 = vmatmul.mubr.f32.gmra.mxu0 %v57
    %v1028 = vpop.f32.mrf.mxu0
    %v1029 = vadd.f32 %v34, %v1028
    %v1030 = vpop.f32.mrf.mxu0
    %v1031 = vadd.f32 %v34, %v1030
    %1032 = vmatprep.mubr.f32.mxu0 0.0
    %1033 = vmatmul.mubr.f32.gmra.mxu0 %v59
    %v1034 = vpop.f32.mrf.mxu0
    %v1035 = vadd.f32 %v39, %v1034
    %v1036 = vpop.f32.mrf.mxu0
    %v1037 = vadd.f32 %v39, %v1036
    %1038 = vmatprep.mubr.f32.mxu0 0.0
    %1039 = vmatmul.mubr.f32.gmra.mxu0 %v61
    %v1040 = vpop.f32.mrf.mxu0
    %v1041 = vadd.f32 %v44, %v1040
    %v1042 = vpop.f32.mrf.mxu0
    %v1043 = vadd.f32 %v44, %v1042
    %1044 = vdwg.mxu0
    %1045 = vmatprep.subr.mxu0 0.0
    %1046 = vmatpush1.msra.mxu0 0.0
    %1047 = vmatprep.subr.mxu0 0.0
    %1048 = vmatpush1.msra.mxu0 0.0
    %1049 = vmatprep.subr.mxu0 0.0
    %1050 = vmatpush1.msra.mxu0 0.0
    %1051 = vmatprep.subr.mxu0 0.0
    %1052 = vmatpush1.msra.mxu0 0.0
    %1053 = vmatprep.subr.mxu0 0.0
    %1054 = vmatpush1.msra.mxu0 0.0
    %1055 = vmatprep.subr.mxu0 0.0
    %1056 = vmatpush1.msra.mxu0 0.0
    %1057 = vmatprep.subr.mxu0 0.0
    %1058 = vmatpush1.msra.mxu0 0.0
    %1059 = vmatprep.subr.mxu0 0.0
    %1060 = vmatpush1.msra.mxu0 0.0
    %1061 = vmatprep.subr.mxu0 0.0
    %1062 = vmatpush1.msra.mxu0 0.0
    %1063 = vmatprep.subr.mxu0 0.0
    %1064 = vmatpush1.msra.mxu0 0.0
    %1065 = vmatprep.subr.mxu0 0.0
    %1066 = vmatpush1.msra.mxu0 0.0
    %1067 = vmatprep.subr.mxu0 0.0
    %1068 = vmatpush1.msra.mxu0 0.0
    %1069 = vmatprep.subr.mxu0 0.0
    %1070 = vmatpush1.msra.mxu0 0.0
    %1071 = vmatprep.subr.mxu0 0.0
    %1072 = vmatpush1.msra.mxu0 0.0
    %1073 = vmatprep.subr.mxu0 0.0
    %1074 = vmatpush1.msra.mxu0 0.0
    %1075 = vmatprep.subr.mxu0 %v948
    %1076 = vmatpush1.msra.mxu0 %v946
    %1077 = vmatprep.subr.mxu0 0.0
    %1078 = vmatpush2.msra.mxu0 0.0
    %1079 = vmatprep.subr.mxu0 0.0
    %1080 = vmatpush2.msra.mxu0 0.0
    %1081 = vmatprep.subr.mxu0 0.0
    %1082 = vmatpush2.msra.mxu0 0.0
    %1083 = vmatprep.subr.mxu0 0.0
    %1084 = vmatpush2.msra.mxu0 0.0
    %1085 = vmatprep.subr.mxu0 0.0
    %1086 = vmatpush2.msra.mxu0 0.0
    %1087 = vmatprep.subr.mxu0 0.0
    %1088 = vmatpush2.msra.mxu0 0.0
    %1089 = vmatprep.subr.mxu0 0.0
    %1090 = vmatpush2.msra.mxu0 0.0
    %1091 = vmatprep.subr.mxu0 0.0
    %1092 = vmatpush2.msra.mxu0 0.0
    %1093 = vmatprep.subr.mxu0 0.0
    %1094 = vmatpush2.msra.mxu0 0.0
    %1095 = vmatprep.subr.mxu0 0.0
    %1096 = vmatpush2.msra.mxu0 0.0
    %1097 = vmatprep.subr.mxu0 0.0
    %1098 = vmatpush2.msra.mxu0 0.0
    %1099 = vmatprep.subr.mxu0 0.0
    %1100 = vmatpush2.msra.mxu0 0.0
    %1101 = vmatprep.subr.mxu0 0.0
    %1102 = vmatpush2.msra.mxu0 0.0
    %1103 = vmatprep.subr.mxu0 0.0
    %1104 = vmatpush2.msra.mxu0 0.0
    %1105 = vmatprep.subr.mxu0 0.0
    %1106 = vmatpush2.msra.mxu0 0.0
    %1107 = vmatprep.subr.mxu0 0.0
    %1108 = vmatpush2.msra.mxu0 0.0
    %1109 = vmatprep.mubr.f32.mxu0 0.0
    %1110 = vmatmul.mubr.f32.gmra.mxu0 %v53
    %v1111 = vpop.f32.mrf.mxu0
    %v1112 = vadd.f32 %v24, %v1111
    %v1113 = vpop.f32.mrf.mxu0
    %v1114 = vadd.f32 %v24, %v1113
    %1115 = vmatprep.mubr.f32.mxu0 0.0
    %1116 = vmatmul.mubr.f32.gmra.mxu0 %v55
    %v1117 = vpop.f32.mrf.mxu0
    %v1118 = vadd.f32 %v29, %v1117
    %v1119 = vpop.f32.mrf.mxu0
    %v1120 = vadd.f32 %v29, %v1119
    %1121 = vmatprep.mubr.f32.mxu0 0.0
    %1122 = vmatmul.mubr.f32.gmra.mxu0 %v57
    %v1123 = vpop.f32.mrf.mxu0
    %v1124 = vadd.f32 %v34, %v1123
    %v1125 = vpop.f32.mrf.mxu0
    %v1126 = vadd.f32 %v34, %v1125
    %1127 = vmatprep.mubr.f32.mxu0 0.0
    %1128 = vmatmul.mubr.f32.gmra.mxu0 %v59
    %v1129 = vpop.f32.mrf.mxu0
    %v1130 = vadd.f32 %v39, %v1129
    %v1131 = vpop.f32.mrf.mxu0
    %v1132 = vadd.f32 %v39, %v1131
    %1133 = vmatprep.mubr.f32.mxu0 0.0
    %1134 = vmatmul.mubr.f32.gmra.mxu0 %v61
    %v1135 = vpop.f32.mrf.mxu0
    %v1136 = vadd.f32 %v44, %v1135
    %v1137 = vpop.f32.mrf.mxu0
    %v1138 = vadd.f32 %v44, %v1137
    %1139 = vdwg.mxu0
    %v1140 = vmax.f32 %v1017, 0.0
    %v1141 = vmax.f32 %v1019, 0.0
    %v1142 = vmax.f32 %v1112, 0.0
    %v1143 = vmax.f32 %v1114, 0.0
    %v1144 = vmax.f32 %v1023, 0.0
    %v1145 = vmax.f32 %v1025, 0.0
    %v1146 = vmax.f32 %v1118, 0.0
    %v1147 = vmax.f32 %v1120, 0.0
    %v1148 = vmax.f32 %v1029, 0.0
    %v1149 = vmax.f32 %v1031, 0.0
    %v1150 = vmax.f32 %v1124, 0.0
    %v1151 = vmax.f32 %v1126, 0.0
    %v1152 = vmax.f32 %v1035, 0.0
    %v1153 = vmax.f32 %v1037, 0.0
    %v1154 = vmax.f32 %v1130, 0.0
    %v1155 = vmax.f32 %v1132, 0.0
    %v1156 = vmax.f32 %v1041, 0.0
    %v1157 = vmax.f32 %v1043, 0.0
    %v1158 = vmax.f32 %v1136, 0.0
    %v1159 = vmax.f32 %v1138, 0.0
    %v1161 = vsel %vm303, %v1156, 0
    %v1164 = vsel %vm303, %v1157, 0
    %v1167 = vsel %vm303, %v1158, 0
    %v1170 = vsel %vm303, %v1159, 0
    %1172 = vmatprep.subr.mxu0 0.0
    %1173 = vmatpush1.msra.mxu0 0.0
    %1174 = vmatprep.subr.mxu0 0.0
    %1175 = vmatpush1.msra.mxu0 0.0
    %1176 = vmatprep.subr.mxu0 0.0
    %1177 = vmatpush1.msra.mxu0 0.0
    %1178 = vmatprep.subr.mxu0 0.0
    %1179 = vmatpush1.msra.mxu0 0.0
    %1180 = vmatprep.subr.mxu0 0.0
    %1181 = vmatpush1.msra.mxu0 0.0
    %1182 = vmatprep.subr.mxu0 0.0
    %1183 = vmatpush1.msra.mxu0 0.0
    %1184 = vmatprep.subr.mxu0 0.0
    %1185 = vmatpush1.msra.mxu0 0.0
    %1186 = vmatprep.subr.mxu0 0.0
    %1187 = vmatpush1.msra.mxu0 0.0
    %1188 = vmatprep.subr.mxu0 0.0
    %1189 = vmatpush1.msra.mxu0 0.0
    %1190 = vmatprep.subr.mxu0 0.0
    %1191 = vmatpush1.msra.mxu0 0.0
    %1192 = vmatprep.subr.mxu0 0.0
    %1193 = vmatpush1.msra.mxu0 0.0
    %1194 = vmatprep.subr.mxu0 %v1164
    %1195 = vmatpush1.msra.mxu0 %v1161
    %1196 = vmatprep.subr.mxu0 %v1153
    %1197 = vmatpush1.msra.mxu0 %v1152
    %1198 = vmatprep.subr.mxu0 %v1149
    %1199 = vmatpush1.msra.mxu0 %v1148
    %1200 = vmatprep.subr.mxu0 %v1145
    %1201 = vmatpush1.msra.mxu0 %v1144
    %1202 = vmatprep.subr.mxu0 %v1141
    %1203 = vmatpush1.msra.mxu0 %v1140
    %1204 = vmatprep.subr.mxu0 0.0
    %1205 = vmatpush2.msra.mxu0 0.0
    %1206 = vmatprep.subr.mxu0 0.0
    %1207 = vmatpush2.msra.mxu0 0.0
    %1208 = vmatprep.subr.mxu0 0.0
    %1209 = vmatpush2.msra.mxu0 0.0
    %1210 = vmatprep.subr.mxu0 0.0
    %1211 = vmatpush2.msra.mxu0 0.0
    %1212 = vmatprep.subr.mxu0 0.0
    %1213 = vmatpush2.msra.mxu0 0.0
    %1214 = vmatprep.subr.mxu0 0.0
    %1215 = vmatpush2.msra.mxu0 0.0
    %1216 = vmatprep.subr.mxu0 0.0
    %1217 = vmatpush2.msra.mxu0 0.0
    %1218 = vmatprep.subr.mxu0 0.0
    %1219 = vmatpush2.msra.mxu0 0.0
    %1220 = vmatprep.subr.mxu0 0.0
    %1221 = vmatpush2.msra.mxu0 0.0
    %1222 = vmatprep.subr.mxu0 0.0
    %1223 = vmatpush2.msra.mxu0 0.0
    %1224 = vmatprep.subr.mxu0 0.0
    %1225 = vmatpush2.msra.mxu0 0.0
    %1226 = vmatprep.subr.mxu0 0.0
    %1227 = vmatpush2.msra.mxu0 0.0
    %1228 = vmatprep.subr.mxu0 0.0
    %1229 = vmatpush2.msra.mxu0 0.0
    %1230 = vmatprep.subr.mxu0 0.0
    %1231 = vmatpush2.msra.mxu0 0.0
    %1232 = vmatprep.subr.mxu0 0.0
    %1233 = vmatpush2.msra.mxu0 0.0
    %1234 = vmatprep.subr.mxu0 0.0
    %1235 = vmatpush2.msra.mxu0 0.0
    %1236 = vmatprep.mubr.f32.mxu0 0.0
    %1237 = vmatmul.mubr.f32.gmra.mxu0 %v293
    %v1238 = vpop.f32.mrf.mxu0
    %v1239 = vadd.f32 0.0, %v1238
    %v1240 = vpop.f32.mrf.mxu0
    %v1241 = vadd.f32 0.0, %v1240
    %1242 = vmatprep.mubr.f32.mxu0 0.0
    %1243 = vmatmul.mubr.f32.gmra.mxu0 %v295
    %v1244 = vpop.f32.mrf.mxu0
    %v1245 = vadd.f32 0.0, %v1244
    %v1246 = vpop.f32.mrf.mxu0
    %v1247 = vadd.f32 0.0, %v1246
    %1248 = vmatprep.mubr.f32.mxu0 0.0
    %1249 = vmatmul.mubr.f32.gmra.mxu0 %v297
    %v1250 = vpop.f32.mrf.mxu0
    %v1251 = vadd.f32 0.0, %v1250
    %v1252 = vpop.f32.mrf.mxu0
    %v1253 = vadd.f32 0.0, %v1252
    %1254 = vmatprep.mubr.f32.mxu0 0.0
    %1255 = vmatmul.mubr.f32.gmra.mxu0 %v299
    %v1256 = vpop.f32.mrf.mxu0
    %v1257 = vadd.f32 0.0, %v1256
    %v1258 = vpop.f32.mrf.mxu0
    %v1259 = vadd.f32 0.0, %v1258
    %1260 = vmatprep.mubr.f32.mxu0 0.0
    %1261 = vmatmul.mubr.f32.gmra.mxu0 %v301
    %v1262 = vpop.f32.mrf.mxu0
    %v1263 = vadd.f32 0.0, %v1262
    %v1264 = vpop.f32.mrf.mxu0
    %v1265 = vadd.f32 0.0, %v1264
    %1266 = vdwg.mxu0
    %1267 = vmatprep.subr.mxu0 0.0
    %1268 = vmatpush1.msra.mxu0 0.0
    %1269 = vmatprep.subr.mxu0 0.0
    %1270 = vmatpush1.msra.mxu0 0.0
    %1271 = vmatprep.subr.mxu0 0.0
    %1272 = vmatpush1.msra.mxu0 0.0
    %1273 = vmatprep.subr.mxu0 0.0
    %1274 = vmatpush1.msra.mxu0 0.0
    %1275 = vmatprep.subr.mxu0 0.0
    %1276 = vmatpush1.msra.mxu0 0.0
    %1277 = vmatprep.subr.mxu0 0.0
    %1278 = vmatpush1.msra.mxu0 0.0
    %1279 = vmatprep.subr.mxu0 0.0
    %1280 = vmatpush1.msra.mxu0 0.0
    %1281 = vmatprep.subr.mxu0 0.0
    %1282 = vmatpush1.msra.mxu0 0.0
    %1283 = vmatprep.subr.mxu0 0.0
    %1284 = vmatpush1.msra.mxu0 0.0
    %1285 = vmatprep.subr.mxu0 0.0
    %1286 = vmatpush1.msra.mxu0 0.0
    %1287 = vmatprep.subr.mxu0 0.0
    %1288 = vmatpush1.msra.mxu0 0.0
    %1289 = vmatprep.subr.mxu0 %v1170
    %1290 = vmatpush1.msra.mxu0 %v1167
    %1291 = vmatprep.subr.mxu0 %v1155
    %1292 = vmatpush1.msra.mxu0 %v1154
    %1293 = vmatprep.subr.mxu0 %v1151
    %1294 = vmatpush1.msra.mxu0 %v1150
    %1295 = vmatprep.subr.mxu0 %v1147
    %1296 = vmatpush1.msra.mxu0 %v1146
    %1297 = vmatprep.subr.mxu0 %v1143
    %1298 = vmatpush1.msra.mxu0 %v1142
    %1299 = vmatprep.subr.mxu0 0.0
    %1300 = vmatpush2.msra.mxu0 0.0
    %1301 = vmatprep.subr.mxu0 0.0
    %1302 = vmatpush2.msra.mxu0 0.0
    %1303 = vmatprep.subr.mxu0 0.0
    %1304 = vmatpush2.msra.mxu0 0.0
    %1305 = vmatprep.subr.mxu0 0.0
    %1306 = vmatpush2.msra.mxu0 0.0
    %1307 = vmatprep.subr.mxu0 0.0
    %1308 = vmatpush2.msra.mxu0 0.0
    %1309 = vmatprep.subr.mxu0 0.0
    %1310 = vmatpush2.msra.mxu0 0.0
    %1311 = vmatprep.subr.mxu0 0.0
    %1312 = vmatpush2.msra.mxu0 0.0
    %1313 = vmatprep.subr.mxu0 0.0
    %1314 = vmatpush2.msra.mxu0 0.0
    %1315 = vmatprep.subr.mxu0 0.0
    %1316 = vmatpush2.msra.mxu0 0.0
    %1317 = vmatprep.subr.mxu0 0.0
    %1318 = vmatpush2.msra.mxu0 0.0
    %1319 = vmatprep.subr.mxu0 0.0
    %1320 = vmatpush2.msra.mxu0 0.0
    %1321 = vmatprep.subr.mxu0 0.0
    %1322 = vmatpush2.msra.mxu0 0.0
    %1323 = vmatprep.subr.mxu0 0.0
    %1324 = vmatpush2.msra.mxu0 0.0
    %1325 = vmatprep.subr.mxu0 0.0
    %1326 = vmatpush2.msra.mxu0 0.0
    %1327 = vmatprep.subr.mxu0 0.0
    %1328 = vmatpush2.msra.mxu0 0.0
    %1329 = vmatprep.subr.mxu0 0.0
    %1330 = vmatpush2.msra.mxu0 0.0
    %1331 = vmatprep.mubr.f32.mxu0 0.0
    %1332 = vmatmul.mubr.f32.gmra.mxu0 %v293
    %v1333 = vpop.f32.mrf.mxu0
    %v1334 = vadd.f32 0.0, %v1333
    %v1335 = vpop.f32.mrf.mxu0
    %v1336 = vadd.f32 0.0, %v1335
    %1337 = vmatprep.mubr.f32.mxu0 0.0
    %1338 = vmatmul.mubr.f32.gmra.mxu0 %v295
    %v1339 = vpop.f32.mrf.mxu0
    %v1340 = vadd.f32 0.0, %v1339
    %v1341 = vpop.f32.mrf.mxu0
    %v1342 = vadd.f32 0.0, %v1341
    %1343 = vmatprep.mubr.f32.mxu0 0.0
    %1344 = vmatmul.mubr.f32.gmra.mxu0 %v297
    %v1345 = vpop.f32.mrf.mxu0
    %v1346 = vadd.f32 0.0, %v1345
    %v1347 = vpop.f32.mrf.mxu0
    %v1348 = vadd.f32 0.0, %v1347
    %1349 = vmatprep.mubr.f32.mxu0 0.0
    %1350 = vmatmul.mubr.f32.gmra.mxu0 %v299
    %v1351 = vpop.f32.mrf.mxu0
    %v1352 = vadd.f32 0.0, %v1351
    %v1353 = vpop.f32.mrf.mxu0
    %v1354 = vadd.f32 0.0, %v1353
    %1355 = vmatprep.mubr.f32.mxu0 0.0
    %1356 = vmatmul.mubr.f32.gmra.mxu0 %v301
    %v1357 = vpop.f32.mrf.mxu0
    %v1358 = vadd.f32 0.0, %v1357
    %v1359 = vpop.f32.mrf.mxu0
    %v1360 = vadd.f32 0.0, %v1359
    %1361 = vdwg.mxu0
    %v1362 = vmax.f32 %v1239, 0.0
    %v1363 = vmax.f32 %v1241, 0.0
    %v1364 = vmax.f32 %v1334, 0.0
    %v1365 = vmax.f32 %v1336, 0.0
    %v1366 = vmax.f32 %v1245, 0.0
    %v1367 = vmax.f32 %v1247, 0.0
    %v1368 = vmax.f32 %v1340, 0.0
    %v1369 = vmax.f32 %v1342, 0.0
    %v1370 = vmax.f32 %v1251, 0.0
    %v1371 = vmax.f32 %v1253, 0.0
    %v1372 = vmax.f32 %v1346, 0.0
    %v1373 = vmax.f32 %v1348, 0.0
    %v1374 = vmax.f32 %v1257, 0.0
    %v1375 = vmax.f32 %v1259, 0.0
    %v1376 = vmax.f32 %v1352, 0.0
    %v1377 = vmax.f32 %v1354, 0.0
    %v1378 = vmax.f32 %v1263, 0.0
    %v1379 = vmax.f32 %v1265, 0.0
    %v1380 = vmax.f32 %v1358, 0.0
    %v1381 = vmax.f32 %v1360, 0.0
    %v1383 = vsel %vm303, %v1378, 0
    %v1386 = vsel %vm303, %v1379, 0
    %v1389 = vsel %vm303, %v1380, 0
    %v1392 = vsel %vm303, %v1381, 0
    %1394 = vmatprep.subr.mxu0 0.0
    %1395 = vmatpush1.msra.mxu0 0.0
    %1396 = vmatprep.subr.mxu0 0.0
    %1397 = vmatpush1.msra.mxu0 0.0
    %1398 = vmatprep.subr.mxu0 0.0
    %1399 = vmatpush1.msra.mxu0 0.0
    %1400 = vmatprep.subr.mxu0 0.0
    %1401 = vmatpush1.msra.mxu0 0.0
    %1402 = vmatprep.subr.mxu0 0.0
    %1403 = vmatpush1.msra.mxu0 0.0
    %1404 = vmatprep.subr.mxu0 0.0
    %1405 = vmatpush1.msra.mxu0 0.0
    %1406 = vmatprep.subr.mxu0 0.0
    %1407 = vmatpush1.msra.mxu0 0.0
    %1408 = vmatprep.subr.mxu0 0.0
    %1409 = vmatpush1.msra.mxu0 0.0
    %1410 = vmatprep.subr.mxu0 0.0
    %1411 = vmatpush1.msra.mxu0 0.0
    %1412 = vmatprep.subr.mxu0 0.0
    %1413 = vmatpush1.msra.mxu0 0.0
    %1414 = vmatprep.subr.mxu0 0.0
    %1415 = vmatpush1.msra.mxu0 0.0
    %1416 = vmatprep.subr.mxu0 %v1386
    %1417 = vmatpush1.msra.mxu0 %v1383
    %1418 = vmatprep.subr.mxu0 %v1375
    %1419 = vmatpush1.msra.mxu0 %v1374
    %1420 = vmatprep.subr.mxu0 %v1371
    %1421 = vmatpush1.msra.mxu0 %v1370
    %1422 = vmatprep.subr.mxu0 %v1367
    %1423 = vmatpush1.msra.mxu0 %v1366
    %1424 = vmatprep.subr.mxu0 %v1363
    %1425 = vmatpush1.msra.mxu0 %v1362
    %1426 = vmatprep.subr.mxu0 0.0
    %1427 = vmatpush2.msra.mxu0 0.0
    %1428 = vmatprep.subr.mxu0 0.0
    %1429 = vmatpush2.msra.mxu0 0.0
    %1430 = vmatprep.subr.mxu0 0.0
    %1431 = vmatpush2.msra.mxu0 0.0
    %1432 = vmatprep.subr.mxu0 0.0
    %1433 = vmatpush2.msra.mxu0 0.0
    %1434 = vmatprep.subr.mxu0 0.0
    %1435 = vmatpush2.msra.mxu0 0.0
    %1436 = vmatprep.subr.mxu0 0.0
    %1437 = vmatpush2.msra.mxu0 0.0
    %1438 = vmatprep.subr.mxu0 0.0
    %1439 = vmatpush2.msra.mxu0 0.0
    %1440 = vmatprep.subr.mxu0 0.0
    %1441 = vmatpush2.msra.mxu0 0.0
    %1442 = vmatprep.subr.mxu0 0.0
    %1443 = vmatpush2.msra.mxu0 0.0
    %1444 = vmatprep.subr.mxu0 0.0
    %1445 = vmatpush2.msra.mxu0 0.0
    %1446 = vmatprep.subr.mxu0 0.0
    %1447 = vmatpush2.msra.mxu0 0.0
    %1448 = vmatprep.subr.mxu0 0.0
    %1449 = vmatpush2.msra.mxu0 0.0
    %1450 = vmatprep.subr.mxu0 0.0
    %1451 = vmatpush2.msra.mxu0 0.0
    %1452 = vmatprep.subr.mxu0 0.0
    %1453 = vmatpush2.msra.mxu0 0.0
    %1454 = vmatprep.subr.mxu0 0.0
    %1455 = vmatpush2.msra.mxu0 0.0
    %1456 = vmatprep.subr.mxu0 0.0
    %1457 = vmatpush2.msra.mxu0 0.0
    %1458 = vmatprep.mubr.f32.mxu0 0.0
    %1459 = vmatmul.mubr.f32.gmra.mxu0 %v536
    %v1460 = vpop.f32.mrf.mxu0
    %v1461 = vadd.f32 0.0, %v1460
    %v1462 = vpop.f32.mrf.mxu0
    %v1463 = vadd.f32 0.0, %v1462
    %1464 = vmatprep.mubr.f32.mxu0 0.0
    %1465 = vmatmul.mubr.f32.gmra.mxu0 %v538
    %v1466 = vpop.f32.mrf.mxu0
    %v1467 = vadd.f32 0.0, %v1466
    %v1468 = vpop.f32.mrf.mxu0
    %v1469 = vadd.f32 0.0, %v1468
    %1470 = vmatprep.mubr.f32.mxu0 0.0
    %1471 = vmatmul.mubr.f32.gmra.mxu0 %v540
    %v1472 = vpop.f32.mrf.mxu0
    %v1473 = vadd.f32 0.0, %v1472
    %v1474 = vpop.f32.mrf.mxu0
    %v1475 = vadd.f32 0.0, %v1474
    %1476 = vmatprep.mubr.f32.mxu0 0.0
    %1477 = vmatmul.mubr.f32.gmra.mxu0 %v542
    %v1478 = vpop.f32.mrf.mxu0
    %v1479 = vadd.f32 0.0, %v1478
    %v1480 = vpop.f32.mrf.mxu0
    %v1481 = vadd.f32 0.0, %v1480
    %1482 = vmatprep.mubr.f32.mxu0 0.0
    %1483 = vmatmul.mubr.f32.gmra.mxu0 %v544
    %v1484 = vpop.f32.mrf.mxu0
    %v1485 = vadd.f32 0.0, %v1484
    %v1486 = vpop.f32.mrf.mxu0
    %v1487 = vadd.f32 0.0, %v1486
    %1488 = vdwg.mxu0
    %1489 = vmatprep.subr.mxu0 0.0
    %1490 = vmatpush1.msra.mxu0 0.0
    %1491 = vmatprep.subr.mxu0 0.0
    %1492 = vmatpush1.msra.mxu0 0.0
    %1493 = vmatprep.subr.mxu0 0.0
    %1494 = vmatpush1.msra.mxu0 0.0
    %1495 = vmatprep.subr.mxu0 0.0
    %1496 = vmatpush1.msra.mxu0 0.0
    %1497 = vmatprep.subr.mxu0 0.0
    %1498 = vmatpush1.msra.mxu0 0.0
    %1499 = vmatprep.subr.mxu0 0.0
    %1500 = vmatpush1.msra.mxu0 0.0
    %1501 = vmatprep.subr.mxu0 0.0
    %1502 = vmatpush1.msra.mxu0 0.0
    %1503 = vmatprep.subr.mxu0 0.0
    %1504 = vmatpush1.msra.mxu0 0.0
    %1505 = vmatprep.subr.mxu0 0.0
    %1506 = vmatpush1.msra.mxu0 0.0
    %1507 = vmatprep.subr.mxu0 0.0
    %1508 = vmatpush1.msra.mxu0 0.0
    %1509 = vmatprep.subr.mxu0 0.0
    %1510 = vmatpush1.msra.mxu0 0.0
    %1511 = vmatprep.subr.mxu0 %v1392
    %1512 = vmatpush1.msra.mxu0 %v1389
    %1513 = vmatprep.subr.mxu0 %v1377
    %1514 = vmatpush1.msra.mxu0 %v1376
    %1515 = vmatprep.subr.mxu0 %v1373
    %1516 = vmatpush1.msra.mxu0 %v1372
    %1517 = vmatprep.subr.mxu0 %v1369
    %1518 = vmatpush1.msra.mxu0 %v1368
    %1519 = vmatprep.subr.mxu0 %v1365
    %1520 = vmatpush1.msra.mxu0 %v1364
    %1521 = vmatprep.subr.mxu0 0.0
    %1522 = vmatpush2.msra.mxu0 0.0
    %1523 = vmatprep.subr.mxu0 0.0
    %1524 = vmatpush2.msra.mxu0 0.0
    %1525 = vmatprep.subr.mxu0 0.0
    %1526 = vmatpush2.msra.mxu0 0.0
    %1527 = vmatprep.subr.mxu0 0.0
    %1528 = vmatpush2.msra.mxu0 0.0
    %1529 = vmatprep.subr.mxu0 0.0
    %1530 = vmatpush2.msra.mxu0 0.0
    %1531 = vmatprep.subr.mxu0 0.0
    %1532 = vmatpush2.msra.mxu0 0.0
    %1533 = vmatprep.subr.mxu0 0.0
    %1534 = vmatpush2.msra.mxu0 0.0
    %1535 = vmatprep.subr.mxu0 0.0
    %1536 = vmatpush2.msra.mxu0 0.0
    %1537 = vmatprep.subr.mxu0 0.0
    %1538 = vmatpush2.msra.mxu0 0.0
    %1539 = vmatprep.subr.mxu0 0.0
    %1540 = vmatpush2.msra.mxu0 0.0
    %1541 = vmatprep.subr.mxu0 0.0
    %1542 = vmatpush2.msra.mxu0 0.0
    %1543 = vmatprep.subr.mxu0 0.0
    %1544 = vmatpush2.msra.mxu0 0.0
    %1545 = vmatprep.subr.mxu0 0.0
    %1546 = vmatpush2.msra.mxu0 0.0
    %1547 = vmatprep.subr.mxu0 0.0
    %1548 = vmatpush2.msra.mxu0 0.0
    %1549 = vmatprep.subr.mxu0 0.0
    %1550 = vmatpush2.msra.mxu0 0.0
    %1551 = vmatprep.subr.mxu0 0.0
    %1552 = vmatpush2.msra.mxu0 0.0
    %1553 = vmatprep.mubr.f32.mxu0 0.0
    %1554 = vmatmul.mubr.f32.gmra.mxu0 %v536
    %v1555 = vpop.f32.mrf.mxu0
    %v1556 = vadd.f32 0.0, %v1555
    %v1557 = vpop.f32.mrf.mxu0
    %v1558 = vadd.f32 0.0, %v1557
    %1559 = vmatprep.mubr.f32.mxu0 0.0
    %1560 = vmatmul.mubr.f32.gmra.mxu0 %v538
    %v1561 = vpop.f32.mrf.mxu0
    %v1562 = vadd.f32 0.0, %v1561
    %v1563 = vpop.f32.mrf.mxu0
    %v1564 = vadd.f32 0.0, %v1563
    %1565 = vmatprep.mubr.f32.mxu0 0.0
    %1566 = vmatmul.mubr.f32.gmra.mxu0 %v540
    %v1567 = vpop.f32.mrf.mxu0
    %v1568 = vadd.f32 0.0, %v1567
    %v1569 = vpop.f32.mrf.mxu0
    %v1570 = vadd.f32 0.0, %v1569
    %1571 = vmatprep.mubr.f32.mxu0 0.0
    %1572 = vmatmul.mubr.f32.gmra.mxu0 %v542
    %v1573 = vpop.f32.mrf.mxu0
    %v1574 = vadd.f32 0.0, %v1573
    %v1575 = vpop.f32.mrf.mxu0
    %v1576 = vadd.f32 0.0, %v1575
    %1577 = vmatprep.mubr.f32.mxu0 0.0
    %1578 = vmatmul.mubr.f32.gmra.mxu0 %v544
    %v1579 = vpop.f32.mrf.mxu0
    %v1580 = vadd.f32 0.0, %v1579
    %v1581 = vpop.f32.mrf.mxu0
    %v1582 = vadd.f32 0.0, %v1581
    %1583 = vdwg.mxu0
    %v1584 = vmax.f32 %v1461, 0.0
    %v1585 = vmax.f32 %v1463, 0.0
    %v1586 = vmax.f32 %v1556, 0.0
    %v1587 = vmax.f32 %v1558, 0.0
    %v1588 = vmax.f32 %v1467, 0.0
    %v1589 = vmax.f32 %v1469, 0.0
    %v1590 = vmax.f32 %v1562, 0.0
    %v1591 = vmax.f32 %v1564, 0.0
    %v1592 = vmax.f32 %v1473, 0.0
    %v1593 = vmax.f32 %v1475, 0.0
    %v1594 = vmax.f32 %v1568, 0.0
    %v1595 = vmax.f32 %v1570, 0.0
    %v1596 = vmax.f32 %v1479, 0.0
    %v1597 = vmax.f32 %v1481, 0.0
    %v1598 = vmax.f32 %v1574, 0.0
    %v1599 = vmax.f32 %v1576, 0.0
    %v1600 = vmax.f32 %v1485, 0.0
    %v1601 = vmax.f32 %v1487, 0.0
    %v1602 = vmax.f32 %v1580, 0.0
    %v1603 = vmax.f32 %v1582, 0.0
    %v1605 = vsel %vm303, %v1600, 0
    %v1608 = vsel %vm303, %v1601, 0
    %v1611 = vsel %vm303, %v1602, 0
    %v1614 = vsel %vm303, %v1603, 0
    %1616 = vmatprep.subr.mxu0 0.0
    %1617 = vmatpush1.msra.mxu0 0.0
    %1618 = vmatprep.subr.mxu0 0.0
    %1619 = vmatpush1.msra.mxu0 0.0
    %1620 = vmatprep.subr.mxu0 0.0
    %1621 = vmatpush1.msra.mxu0 0.0
    %1622 = vmatprep.subr.mxu0 0.0
    %1623 = vmatpush1.msra.mxu0 0.0
    %1624 = vmatprep.subr.mxu0 0.0
    %1625 = vmatpush1.msra.mxu0 0.0
    %1626 = vmatprep.subr.mxu0 0.0
    %1627 = vmatpush1.msra.mxu0 0.0
    %1628 = vmatprep.subr.mxu0 0.0
    %1629 = vmatpush1.msra.mxu0 0.0
    %1630 = vmatprep.subr.mxu0 0.0
    %1631 = vmatpush1.msra.mxu0 0.0
    %1632 = vmatprep.subr.mxu0 0.0
    %1633 = vmatpush1.msra.mxu0 0.0
    %1634 = vmatprep.subr.mxu0 0.0
    %1635 = vmatpush1.msra.mxu0 0.0
    %1636 = vmatprep.subr.mxu0 0.0
    %1637 = vmatpush1.msra.mxu0 0.0
    %1638 = vmatprep.subr.mxu0 %v1608
    %1639 = vmatpush1.msra.mxu0 %v1605
    %1640 = vmatprep.subr.mxu0 %v1597
    %1641 = vmatpush1.msra.mxu0 %v1596
    %1642 = vmatprep.subr.mxu0 %v1593
    %1643 = vmatpush1.msra.mxu0 %v1592
    %1644 = vmatprep.subr.mxu0 %v1589
    %1645 = vmatpush1.msra.mxu0 %v1588
    %1646 = vmatprep.subr.mxu0 %v1585
    %1647 = vmatpush1.msra.mxu0 %v1584
    %1648 = vmatprep.subr.mxu0 0.0
    %1649 = vmatpush2.msra.mxu0 0.0
    %1650 = vmatprep.subr.mxu0 0.0
    %1651 = vmatpush2.msra.mxu0 0.0
    %1652 = vmatprep.subr.mxu0 0.0
    %1653 = vmatpush2.msra.mxu0 0.0
    %1654 = vmatprep.subr.mxu0 0.0
    %1655 = vmatpush2.msra.mxu0 0.0
    %1656 = vmatprep.subr.mxu0 0.0
    %1657 = vmatpush2.msra.mxu0 0.0
    %1658 = vmatprep.subr.mxu0 0.0
    %1659 = vmatpush2.msra.mxu0 0.0
    %1660 = vmatprep.subr.mxu0 0.0
    %1661 = vmatpush2.msra.mxu0 0.0
    %1662 = vmatprep.subr.mxu0 0.0
    %1663 = vmatpush2.msra.mxu0 0.0
    %1664 = vmatprep.subr.mxu0 0.0
    %1665 = vmatpush2.msra.mxu0 0.0
    %1666 = vmatprep.subr.mxu0 0.0
    %1667 = vmatpush2.msra.mxu0 0.0
    %1668 = vmatprep.subr.mxu0 0.0
    %1669 = vmatpush2.msra.mxu0 0.0
    %1670 = vmatprep.subr.mxu0 0.0
    %1671 = vmatpush2.msra.mxu0 0.0
    %1672 = vmatprep.subr.mxu0 0.0
    %1673 = vmatpush2.msra.mxu0 0.0
    %1674 = vmatprep.subr.mxu0 0.0
    %1675 = vmatpush2.msra.mxu0 0.0
    %1676 = vmatprep.subr.mxu0 0.0
    %1677 = vmatpush2.msra.mxu0 0.0
    %1678 = vmatprep.subr.mxu0 0.0
    %1679 = vmatpush2.msra.mxu0 0.0
    %1680 = vmatprep.mubr.f32.mxu0 0.0
    %1681 = vmatmul.mubr.f32.gmra.mxu0 %v769
    %v1682 = vpop.f32.mrf.mxu0
    %v1683 = vadd.f32 0.0, %v1682
    %v1684 = vpop.f32.mrf.mxu0
    %v1685 = vadd.f32 0.0, %v1684
    %1686 = vdwg.mxu0
    %1687 = vmatprep.subr.mxu0 0.0
    %1688 = vmatpush1.msra.mxu0 0.0
    %1689 = vmatprep.subr.mxu0 0.0
    %1690 = vmatpush1.msra.mxu0 0.0
    %1691 = vmatprep.subr.mxu0 0.0
    %1692 = vmatpush1.msra.mxu0 0.0
    %1693 = vmatprep.subr.mxu0 0.0
    %1694 = vmatpush1.msra.mxu0 0.0
    %1695 = vmatprep.subr.mxu0 0.0
    %1696 = vmatpush1.msra.mxu0 0.0
    %1697 = vmatprep.subr.mxu0 0.0
    %1698 = vmatpush1.msra.mxu0 0.0
    %1699 = vmatprep.subr.mxu0 0.0
    %1700 = vmatpush1.msra.mxu0 0.0
    %1701 = vmatprep.subr.mxu0 0.0
    %1702 = vmatpush1.msra.mxu0 0.0
    %1703 = vmatprep.subr.mxu0 0.0
    %1704 = vmatpush1.msra.mxu0 0.0
    %1705 = vmatprep.subr.mxu0 0.0
    %1706 = vmatpush1.msra.mxu0 0.0
    %1707 = vmatprep.subr.mxu0 0.0
    %1708 = vmatpush1.msra.mxu0 0.0
    %1709 = vmatprep.subr.mxu0 %v1614
    %1710 = vmatpush1.msra.mxu0 %v1611
    %1711 = vmatprep.subr.mxu0 %v1599
    %1712 = vmatpush1.msra.mxu0 %v1598
    %1713 = vmatprep.subr.mxu0 %v1595
    %1714 = vmatpush1.msra.mxu0 %v1594
    %1715 = vmatprep.subr.mxu0 %v1591
    %1716 = vmatpush1.msra.mxu0 %v1590
    %1717 = vmatprep.subr.mxu0 %v1587
    %1718 = vmatpush1.msra.mxu0 %v1586
    %1719 = vmatprep.subr.mxu0 0.0
    %1720 = vmatpush2.msra.mxu0 0.0
    %1721 = vmatprep.subr.mxu0 0.0
    %1722 = vmatpush2.msra.mxu0 0.0
    %1723 = vmatprep.subr.mxu0 0.0
    %1724 = vmatpush2.msra.mxu0 0.0
    %1725 = vmatprep.subr.mxu0 0.0
    %1726 = vmatpush2.msra.mxu0 0.0
    %1727 = vmatprep.subr.mxu0 0.0
    %1728 = vmatpush2.msra.mxu0 0.0
    %1729 = vmatprep.subr.mxu0 0.0
    %1730 = vmatpush2.msra.mxu0 0.0
    %1731 = vmatprep.subr.mxu0 0.0
    %1732 = vmatpush2.msra.mxu0 0.0
    %1733 = vmatprep.subr.mxu0 0.0
    %1734 = vmatpush2.msra.mxu0 0.0
    %1735 = vmatprep.subr.mxu0 0.0
    %1736 = vmatpush2.msra.mxu0 0.0
    %1737 = vmatprep.subr.mxu0 0.0
    %1738 = vmatpush2.msra.mxu0 0.0
    %1739 = vmatprep.subr.mxu0 0.0
    %1740 = vmatpush2.msra.mxu0 0.0
    %1741 = vmatprep.subr.mxu0 0.0
    %1742 = vmatpush2.msra.mxu0 0.0
    %1743 = vmatprep.subr.mxu0 0.0
    %1744 = vmatpush2.msra.mxu0 0.0
    %1745 = vmatprep.subr.mxu0 0.0
    %1746 = vmatpush2.msra.mxu0 0.0
    %1747 = vmatprep.subr.mxu0 0.0
    %1748 = vmatpush2.msra.mxu0 0.0
    %1749 = vmatprep.subr.mxu0 0.0
    %1750 = vmatpush2.msra.mxu0 0.0
    %1751 = vmatprep.mubr.f32.mxu0 0.0
    %1752 = vmatmul.mubr.f32.gmra.mxu0 %v769
    %v1753 = vpop.f32.mrf.mxu0
    %v1754 = vadd.f32 0.0, %v1753
    %v1755 = vpop.f32.mrf.mxu0
    %v1756 = vadd.f32 0.0, %v1755
    %1757 = vdwg.mxu0
    %v1762 = vcombine.low %v1683, %v1685
    %v1763 = vcombine.low %v1754, %v1756
    %s1766 = scalar_lea.vmem [#allocation2], 16
    %1767 = vst [vmem:[%s1766] sm:$0x77] %v1762
    %1768 = vst [vmem:[%s1766 + $0x8] sm:$0x77] %v1763
    %s1769 = scalar_lea.vmem %s0, 32
    %v1770 = vld [vmem:[%s1769] sm:$0xff]
    %v1771 = vld [vmem:[%s1769 + $0x8] sm:$0xff]
    %v1774 = vcombine.high %v1770, %v1770
    %v1775 = vcombine.high %v1771, %v1771
    %v1776 = vsel %vm63, %v1770, 0
    %v1778 = vsel %vm63, %v1774, 0
    %v1780 = vsel %vm63, %v1771, 0
    %v1782 = vsel %vm63, %v1775, 0
    %1784 = vmatprep.subr.mxu0 0.0
    %1785 = vmatpush1.msra.mxu0 0.0
    %1786 = vmatprep.subr.mxu0 0.0
    %1787 = vmatpush1.msra.mxu0 0.0
    %1788 = vmatprep.subr.mxu0 0.0
    %1789 = vmatpush1.msra.mxu0 0.0
    %1790 = vmatprep.subr.mxu0 0.0
    %1791 = vmatpush1.msra.mxu0 0.0
    %1792 = vmatprep.subr.mxu0 0.0
    %1793 = vmatpush1.msra.mxu0 0.0
    %1794 = vmatprep.subr.mxu0 0.0
    %1795 = vmatpush1.msra.mxu0 0.0
    %1796 = vmatprep.subr.mxu0 0.0
    %1797 = vmatpush1.msra.mxu0 0.0
    %1798 = vmatprep.subr.mxu0 0.0
    %1799 = vmatpush1.msra.mxu0 0.0
    %1800 = vmatprep.subr.mxu0 0.0
    %1801 = vmatpush1.msra.mxu0 0.0
    %1802 = vmatprep.subr.mxu0 0.0
    %1803 = vmatpush1.msra.mxu0 0.0
    %1804 = vmatprep.subr.mxu0 0.0
    %1805 = vmatpush1.msra.mxu0 0.0
    %1806 = vmatprep.subr.mxu0 0.0
    %1807 = vmatpush1.msra.mxu0 0.0
    %1808 = vmatprep.subr.mxu0 0.0
    %1809 = vmatpush1.msra.mxu0 0.0
    %1810 = vmatprep.subr.mxu0 0.0
    %1811 = vmatpush1.msra.mxu0 0.0
    %1812 = vmatprep.subr.mxu0 0.0
    %1813 = vmatpush1.msra.mxu0 0.0
    %1814 = vmatprep.subr.mxu0 %v1778
    %1815 = vmatpush1.msra.mxu0 %v1776
    %1816 = vmatprep.subr.mxu0 0.0
    %1817 = vmatpush2.msra.mxu0 0.0
    %1818 = vmatprep.subr.mxu0 0.0
    %1819 = vmatpush2.msra.mxu0 0.0
    %1820 = vmatprep.subr.mxu0 0.0
    %1821 = vmatpush2.msra.mxu0 0.0
    %1822 = vmatprep.subr.mxu0 0.0
    %1823 = vmatpush2.msra.mxu0 0.0
    %1824 = vmatprep.subr.mxu0 0.0
    %1825 = vmatpush2.msra.mxu0 0.0
    %1826 = vmatprep.subr.mxu0 0.0
    %1827 = vmatpush2.msra.mxu0 0.0
    %1828 = vmatprep.subr.mxu0 0.0
    %1829 = vmatpush2.msra.mxu0 0.0
    %1830 = vmatprep.subr.mxu0 0.0
    %1831 = vmatpush2.msra.mxu0 0.0
    %1832 = vmatprep.subr.mxu0 0.0
    %1833 = vmatpush2.msra.mxu0 0.0
    %1834 = vmatprep.subr.mxu0 0.0
    %1835 = vmatpush2.msra.mxu0 0.0
    %1836 = vmatprep.subr.mxu0 0.0
    %1837 = vmatpush2.msra.mxu0 0.0
    %1838 = vmatprep.subr.mxu0 0.0
    %1839 = vmatpush2.msra.mxu0 0.0
    %1840 = vmatprep.subr.mxu0 0.0
    %1841 = vmatpush2.msra.mxu0 0.0
    %1842 = vmatprep.subr.mxu0 0.0
    %1843 = vmatpush2.msra.mxu0 0.0
    %1844 = vmatprep.subr.mxu0 0.0
    %1845 = vmatpush2.msra.mxu0 0.0
    %1846 = vmatprep.subr.mxu0 0.0
    %1847 = vmatpush2.msra.mxu0 0.0
    %1848 = vmatprep.mubr.f32.mxu0 0.0
    %1849 = vmatmul.mubr.f32.gmra.mxu0 %v53
    %v1850 = vpop.f32.mrf.mxu0
    %v1851 = vadd.f32 %v24, %v1850
    %v1852 = vpop.f32.mrf.mxu0
    %v1853 = vadd.f32 %v24, %v1852
    %1854 = vmatprep.mubr.f32.mxu0 0.0
    %1855 = vmatmul.mubr.f32.gmra.mxu0 %v55
    %v1856 = vpop.f32.mrf.mxu0
    %v1857 = vadd.f32 %v29, %v1856
    %v1858 = vpop.f32.mrf.mxu0
    %v1859 = vadd.f32 %v29, %v1858
    %1860 = vmatprep.mubr.f32.mxu0 0.0
    %1861 = vmatmul.mubr.f32.gmra.mxu0 %v57
    %v1862 = vpop.f32.mrf.mxu0
    %v1863 = vadd.f32 %v34, %v1862
    %v1864 = vpop.f32.mrf.mxu0
    %v1865 = vadd.f32 %v34, %v1864
    %1866 = vmatprep.mubr.f32.mxu0 0.0
    %1867 = vmatmul.mubr.f32.gmra.mxu0 %v59
    %v1868 = vpop.f32.mrf.mxu0
    %v1869 = vadd.f32 %v39, %v1868
    %v1870 = vpop.f32.mrf.mxu0
    %v1871 = vadd.f32 %v39, %v1870
    %1872 = vmatprep.mubr.f32.mxu0 0.0
    %1873 = vmatmul.mubr.f32.gmra.mxu0 %v61
    %v1874 = vpop.f32.mrf.mxu0
    %v1875 = vadd.f32 %v44, %v1874
    %v1876 = vpop.f32.mrf.mxu0
    %v1877 = vadd.f32 %v44, %v1876
    %1878 = vdwg.mxu0
    %1879 = vmatprep.subr.mxu0 0.0
    %1880 = vmatpush1.msra.mxu0 0.0
    %1881 = vmatprep.subr.mxu0 0.0
    %1882 = vmatpush1.msra.mxu0 0.0
    %1883 = vmatprep.subr.mxu0 0.0
    %1884 = vmatpush1.msra.mxu0 0.0
    %1885 = vmatprep.subr.mxu0 0.0
    %1886 = vmatpush1.msra.mxu0 0.0
    %1887 = vmatprep.subr.mxu0 0.0
    %1888 = vmatpush1.msra.mxu0 0.0
    %1889 = vmatprep.subr.mxu0 0.0
    %1890 = vmatpush1.msra.mxu0 0.0
    %1891 = vmatprep.subr.mxu0 0.0
    %1892 = vmatpush1.msra.mxu0 0.0
    %1893 = vmatprep.subr.mxu0 0.0
    %1894 = vmatpush1.msra.mxu0 0.0
    %1895 = vmatprep.subr.mxu0 0.0
    %1896 = vmatpush1.msra.mxu0 0.0
    %1897 = vmatprep.subr.mxu0 0.0
    %1898 = vmatpush1.msra.mxu0 0.0
    %1899 = vmatprep.subr.mxu0 0.0
    %1900 = vmatpush1.msra.mxu0 0.0
    %1901 = vmatprep.subr.mxu0 0.0
    %1902 = vmatpush1.msra.mxu0 0.0
    %1903 = vmatprep.subr.mxu0 0.0
    %1904 = vmatpush1.msra.mxu0 0.0
    %1905 = vmatprep.subr.mxu0 0.0
    %1906 = vmatpush1.msra.mxu0 0.0
    %1907 = vmatprep.subr.mxu0 0.0
    %1908 = vmatpush1.msra.mxu0 0.0
    %1909 = vmatprep.subr.mxu0 %v1782
    %1910 = vmatpush1.msra.mxu0 %v1780
    %1911 = vmatprep.subr.mxu0 0.0
    %1912 = vmatpush2.msra.mxu0 0.0
    %1913 = vmatprep.subr.mxu0 0.0
    %1914 = vmatpush2.msra.mxu0 0.0
    %1915 = vmatprep.subr.mxu0 0.0
    %1916 = vmatpush2.msra.mxu0 0.0
    %1917 = vmatprep.subr.mxu0 0.0
    %1918 = vmatpush2.msra.mxu0 0.0
    %1919 = vmatprep.subr.mxu0 0.0
    %1920 = vmatpush2.msra.mxu0 0.0
    %1921 = vmatprep.subr.mxu0 0.0
    %1922 = vmatpush2.msra.mxu0 0.0
    %1923 = vmatprep.subr.mxu0 0.0
    %1924 = vmatpush2.msra.mxu0 0.0
    %1925 = vmatprep.subr.mxu0 0.0
    %1926 = vmatpush2.msra.mxu0 0.0
    %1927 = vmatprep.subr.mxu0 0.0
    %1928 = vmatpush2.msra.mxu0 0.0
    %1929 = vmatprep.subr.mxu0 0.0
    %1930 = vmatpush2.msra.mxu0 0.0
    %1931 = vmatprep.subr.mxu0 0.0
    %1932 = vmatpush2.msra.mxu0 0.0
    %1933 = vmatprep.subr.mxu0 0.0
    %1934 = vmatpush2.msra.mxu0 0.0
    %1935 = vmatprep.subr.mxu0 0.0
    %1936 = vmatpush2.msra.mxu0 0.0
    %1937 = vmatprep.subr.mxu0 0.0
    %1938 = vmatpush2.msra.mxu0 0.0
    %1939 = vmatprep.subr.mxu0 0.0
    %1940 = vmatpush2.msra.mxu0 0.0
    %1941 = vmatprep.subr.mxu0 0.0
    %1942 = vmatpush2.msra.mxu0 0.0
    %1943 = vmatprep.mubr.f32.mxu0 0.0
    %1944 = vmatmul.mubr.f32.gmra.mxu0 %v53
    %v1945 = vpop.f32.mrf.mxu0
    %v1946 = vadd.f32 %v24, %v1945
    %v1947 = vpop.f32.mrf.mxu0
    %v1948 = vadd.f32 %v24, %v1947
    %1949 = vmatprep.mubr.f32.mxu0 0.0
    %1950 = vmatmul.mubr.f32.gmra.mxu0 %v55
    %v1951 = vpop.f32.mrf.mxu0
    %v1952 = vadd.f32 %v29, %v1951
    %v1953 = vpop.f32.mrf.mxu0
    %v1954 = vadd.f32 %v29, %v1953
    %1955 = vmatprep.mubr.f32.mxu0 0.0
    %1956 = vmatmul.mubr.f32.gmra.mxu0 %v57
    %v1957 = vpop.f32.mrf.mxu0
    %v1958 = vadd.f32 %v34, %v1957
    %v1959 = vpop.f32.mrf.mxu0
    %v1960 = vadd.f32 %v34, %v1959
    %1961 = vmatprep.mubr.f32.mxu0 0.0
    %1962 = vmatmul.mubr.f32.gmra.mxu0 %v59
    %v1963 = vpop.f32.mrf.mxu0
    %v1964 = vadd.f32 %v39, %v1963
    %v1965 = vpop.f32.mrf.mxu0
    %v1966 = vadd.f32 %v39, %v1965
    %1967 = vmatprep.mubr.f32.mxu0 0.0
    %1968 = vmatmul.mubr.f32.gmra.mxu0 %v61
    %v1969 = vpop.f32.mrf.mxu0
    %v1970 = vadd.f32 %v44, %v1969
    %v1971 = vpop.f32.mrf.mxu0
    %v1972 = vadd.f32 %v44, %v1971
    %1973 = vdwg.mxu0
    %v1974 = vmax.f32 %v1851, 0.0
    %v1975 = vmax.f32 %v1853, 0.0
    %v1976 = vmax.f32 %v1946, 0.0
    %v1977 = vmax.f32 %v1948, 0.0
    %v1978 = vmax.f32 %v1857, 0.0
    %v1979 = vmax.f32 %v1859, 0.0
    %v1980 = vmax.f32 %v1952, 0.0
    %v1981 = vmax.f32 %v1954, 0.0
    %v1982 = vmax.f32 %v1863, 0.0
    %v1983 = vmax.f32 %v1865, 0.0
    %v1984 = vmax.f32 %v1958, 0.0
    %v1985 = vmax.f32 %v1960, 0.0
    %v1986 = vmax.f32 %v1869, 0.0
    %v1987 = vmax.f32 %v1871, 0.0
    %v1988 = vmax.f32 %v1964, 0.0
    %v1989 = vmax.f32 %v1966, 0.0
    %v1990 = vmax.f32 %v1875, 0.0
    %v1991 = vmax.f32 %v1877, 0.0
    %v1992 = vmax.f32 %v1970, 0.0
    %v1993 = vmax.f32 %v1972, 0.0
    %v1995 = vsel %vm303, %v1990, 0
    %v1998 = vsel %vm303, %v1991, 0
    %v2001 = vsel %vm303, %v1992, 0
    %v2004 = vsel %vm303, %v1993, 0
    %2006 = vmatprep.subr.mxu0 0.0
    %2007 = vmatpush1.msra.mxu0 0.0
    %2008 = vmatprep.subr.mxu0 0.0
    %2009 = vmatpush1.msra.mxu0 0.0
    %2010 = vmatprep.subr.mxu0 0.0
    %2011 = vmatpush1.msra.mxu0 0.0
    %2012 = vmatprep.subr.mxu0 0.0
    %2013 = vmatpush1.msra.mxu0 0.0
    %2014 = vmatprep.subr.mxu0 0.0
    %2015 = vmatpush1.msra.mxu0 0.0
    %2016 = vmatprep.subr.mxu0 0.0
    %2017 = vmatpush1.msra.mxu0 0.0
    %2018 = vmatprep.subr.mxu0 0.0
    %2019 = vmatpush1.msra.mxu0 0.0
    %2020 = vmatprep.subr.mxu0 0.0
    %2021 = vmatpush1.msra.mxu0 0.0
    %2022 = vmatprep.subr.mxu0 0.0
    %2023 = vmatpush1.msra.mxu0 0.0
    %2024 = vmatprep.subr.mxu0 0.0
    %2025 = vmatpush1.msra.mxu0 0.0
    %2026 = vmatprep.subr.mxu0 0.0
    %2027 = vmatpush1.msra.mxu0 0.0
    %2028 = vmatprep.subr.mxu0 %v1998
    %2029 = vmatpush1.msra.mxu0 %v1995
    %2030 = vmatprep.subr.mxu0 %v1987
    %2031 = vmatpush1.msra.mxu0 %v1986
    %2032 = vmatprep.subr.mxu0 %v1983
    %2033 = vmatpush1.msra.mxu0 %v1982
    %2034 = vmatprep.subr.mxu0 %v1979
    %2035 = vmatpush1.msra.mxu0 %v1978
    %2036 = vmatprep.subr.mxu0 %v1975
    %2037 = vmatpush1.msra.mxu0 %v1974
    %2038 = vmatprep.subr.mxu0 0.0
    %2039 = vmatpush2.msra.mxu0 0.0
    %2040 = vmatprep.subr.mxu0 0.0
    %2041 = vmatpush2.msra.mxu0 0.0
    %2042 = vmatprep.subr.mxu0 0.0
    %2043 = vmatpush2.msra.mxu0 0.0
    %2044 = vmatprep.subr.mxu0 0.0
    %2045 = vmatpush2.msra.mxu0 0.0
    %2046 = vmatprep.subr.mxu0 0.0
    %2047 = vmatpush2.msra.mxu0 0.0
    %2048 = vmatprep.subr.mxu0 0.0
    %2049 = vmatpush2.msra.mxu0 0.0
    %2050 = vmatprep.subr.mxu0 0.0
    %2051 = vmatpush2.msra.mxu0 0.0
    %2052 = vmatprep.subr.mxu0 0.0
    %2053 = vmatpush2.msra.mxu0 0.0
    %2054 = vmatprep.subr.mxu0 0.0
    %2055 = vmatpush2.msra.mxu0 0.0
    %2056 = vmatprep.subr.mxu0 0.0
    %2057 = vmatpush2.msra.mxu0 0.0
    %2058 = vmatprep.subr.mxu0 0.0
    %2059 = vmatpush2.msra.mxu0 0.0
    %2060 = vmatprep.subr.mxu0 0.0
    %2061 = vmatpush2.msra.mxu0 0.0
    %2062 = vmatprep.subr.mxu0 0.0
    %2063 = vmatpush2.msra.mxu0 0.0
    %2064 = vmatprep.subr.mxu0 0.0
    %2065 = vmatpush2.msra.mxu0 0.0
    %2066 = vmatprep.subr.mxu0 0.0
    %2067 = vmatpush2.msra.mxu0 0.0
    %2068 = vmatprep.subr.mxu0 0.0
    %2069 = vmatpush2.msra.mxu0 0.0
    %2070 = vmatprep.mubr.f32.mxu0 0.0
    %2071 = vmatmul.mubr.f32.gmra.mxu0 %v293
    %v2072 = vpop.f32.mrf.mxu0
    %v2073 = vadd.f32 0.0, %v2072
    %v2074 = vpop.f32.mrf.mxu0
    %v2075 = vadd.f32 0.0, %v2074
    %2076 = vmatprep.mubr.f32.mxu0 0.0
    %2077 = vmatmul.mubr.f32.gmra.mxu0 %v295
    %v2078 = vpop.f32.mrf.mxu0
    %v2079 = vadd.f32 0.0, %v2078
    %v2080 = vpop.f32.mrf.mxu0
    %v2081 = vadd.f32 0.0, %v2080
    %2082 = vmatprep.mubr.f32.mxu0 0.0
    %2083 = vmatmul.mubr.f32.gmra.mxu0 %v297
    %v2084 = vpop.f32.mrf.mxu0
    %v2085 = vadd.f32 0.0, %v2084
    %v2086 = vpop.f32.mrf.mxu0
    %v2087 = vadd.f32 0.0, %v2086
    %2088 = vmatprep.mubr.f32.mxu0 0.0
    %2089 = vmatmul.mubr.f32.gmra.mxu0 %v299
    %v2090 = vpop.f32.mrf.mxu0
    %v2091 = vadd.f32 0.0, %v2090
    %v2092 = vpop.f32.mrf.mxu0
    %v2093 = vadd.f32 0.0, %v2092
    %2094 = vmatprep.mubr.f32.mxu0 0.0
    %2095 = vmatmul.mubr.f32.gmra.mxu0 %v301
    %v2096 = vpop.f32.mrf.mxu0
    %v2097 = vadd.f32 0.0, %v2096
    %v2098 = vpop.f32.mrf.mxu0
    %v2099 = vadd.f32 0.0, %v2098
    %2100 = vdwg.mxu0
    %2101 = vmatprep.subr.mxu0 0.0
    %2102 = vmatpush1.msra.mxu0 0.0
    %2103 = vmatprep.subr.mxu0 0.0
    %2104 = vmatpush1.msra.mxu0 0.0
    %2105 = vmatprep.subr.mxu0 0.0
    %2106 = vmatpush1.msra.mxu0 0.0
    %2107 = vmatprep.subr.mxu0 0.0
    %2108 = vmatpush1.msra.mxu0 0.0
    %2109 = vmatprep.subr.mxu0 0.0
    %2110 = vmatpush1.msra.mxu0 0.0
    %2111 = vmatprep.subr.mxu0 0.0
    %2112 = vmatpush1.msra.mxu0 0.0
    %2113 = vmatprep.subr.mxu0 0.0
    %2114 = vmatpush1.msra.mxu0 0.0
    %2115 = vmatprep.subr.mxu0 0.0
    %2116 = vmatpush1.msra.mxu0 0.0
    %2117 = vmatprep.subr.mxu0 0.0
    %2118 = vmatpush1.msra.mxu0 0.0
    %2119 = vmatprep.subr.mxu0 0.0
    %2120 = vmatpush1.msra.mxu0 0.0
    %2121 = vmatprep.subr.mxu0 0.0
    %2122 = vmatpush1.msra.mxu0 0.0
    %2123 = vmatprep.subr.mxu0 %v2004
    %2124 = vmatpush1.msra.mxu0 %v2001
    %2125 = vmatprep.subr.mxu0 %v1989
    %2126 = vmatpush1.msra.mxu0 %v1988
    %2127 = vmatprep.subr.mxu0 %v1985
    %2128 = vmatpush1.msra.mxu0 %v1984
    %2129 = vmatprep.subr.mxu0 %v1981
    %2130 = vmatpush1.msra.mxu0 %v1980
    %2131 = vmatprep.subr.mxu0 %v1977
    %2132 = vmatpush1.msra.mxu0 %v1976
    %2133 = vmatprep.subr.mxu0 0.0
    %2134 = vmatpush2.msra.mxu0 0.0
    %2135 = vmatprep.subr.mxu0 0.0
    %2136 = vmatpush2.msra.mxu0 0.0
    %2137 = vmatprep.subr.mxu0 0.0
    %2138 = vmatpush2.msra.mxu0 0.0
    %2139 = vmatprep.subr.mxu0 0.0
    %2140 = vmatpush2.msra.mxu0 0.0
    %2141 = vmatprep.subr.mxu0 0.0
    %2142 = vmatpush2.msra.mxu0 0.0
    %2143 = vmatprep.subr.mxu0 0.0
    %2144 = vmatpush2.msra.mxu0 0.0
    %2145 = vmatprep.subr.mxu0 0.0
    %2146 = vmatpush2.msra.mxu0 0.0
    %2147 = vmatprep.subr.mxu0 0.0
    %2148 = vmatpush2.msra.mxu0 0.0
    %2149 = vmatprep.subr.mxu0 0.0
    %2150 = vmatpush2.msra.mxu0 0.0
    %2151 = vmatprep.subr.mxu0 0.0
    %2152 = vmatpush2.msra.mxu0 0.0
    %2153 = vmatprep.subr.mxu0 0.0
    %2154 = vmatpush2.msra.mxu0 0.0
    %2155 = vmatprep.subr.mxu0 0.0
    %2156 = vmatpush2.msra.mxu0 0.0
    %2157 = vmatprep.subr.mxu0 0.0
    %2158 = vmatpush2.msra.mxu0 0.0
    %2159 = vmatprep.subr.mxu0 0.0
    %2160 = vmatpush2.msra.mxu0 0.0
    %2161 = vmatprep.subr.mxu0 0.0
    %2162 = vmatpush2.msra.mxu0 0.0
    %2163 = vmatprep.subr.mxu0 0.0
    %2164 = vmatpush2.msra.mxu0 0.0
    %2165 = vmatprep.mubr.f32.mxu0 0.0
    %2166 = vmatmul.mubr.f32.gmra.mxu0 %v293
    %v2167 = vpop.f32.mrf.mxu0
    %v2168 = vadd.f32 0.0, %v2167
    %v2169 = vpop.f32.mrf.mxu0
    %v2170 = vadd.f32 0.0, %v2169
    %2171 = vmatprep.mubr.f32.mxu0 0.0
    %2172 = vmatmul.mubr.f32.gmra.mxu0 %v295
    %v2173 = vpop.f32.mrf.mxu0
    %v2174 = vadd.f32 0.0, %v2173
    %v2175 = vpop.f32.mrf.mxu0
    %v2176 = vadd.f32 0.0, %v2175
    %2177 = vmatprep.mubr.f32.mxu0 0.0
    %2178 = vmatmul.mubr.f32.gmra.mxu0 %v297
    %v2179 = vpop.f32.mrf.mxu0
    %v2180 = vadd.f32 0.0, %v2179
    %v2181 = vpop.f32.mrf.mxu0
    %v2182 = vadd.f32 0.0, %v2181
    %2183 = vmatprep.mubr.f32.mxu0 0.0
    %2184 = vmatmul.mubr.f32.gmra.mxu0 %v299
    %v2185 = vpop.f32.mrf.mxu0
    %v2186 = vadd.f32 0.0, %v2185
    %v2187 = vpop.f32.mrf.mxu0
    %v2188 = vadd.f32 0.0, %v2187
    %2189 = vmatprep.mubr.f32.mxu0 0.0
    %2190 = vmatmul.mubr.f32.gmra.mxu0 %v301
    %v2191 = vpop.f32.mrf.mxu0
    %v2192 = vadd.f32 0.0, %v2191
    %v2193 = vpop.f32.mrf.mxu0
    %v2194 = vadd.f32 0.0, %v2193
    %2195 = vdwg.mxu0
    %v2196 = vmax.f32 %v2073, 0.0
    %v2197 = vmax.f32 %v2075, 0.0
    %v2198 = vmax.f32 %v2168, 0.0
    %v2199 = vmax.f32 %v2170, 0.0
    %v2200 = vmax.f32 %v2079, 0.0
    %v2201 = vmax.f32 %v2081, 0.0
    %v2202 = vmax.f32 %v2174, 0.0
    %v2203 = vmax.f32 %v2176, 0.0
    %v2204 = vmax.f32 %v2085, 0.0
    %v2205 = vmax.f32 %v2087, 0.0
    %v2206 = vmax.f32 %v2180, 0.0
    %v2207 = vmax.f32 %v2182, 0.0
    %v2208 = vmax.f32 %v2091, 0.0
    %v2209 = vmax.f32 %v2093, 0.0
    %v2210 = vmax.f32 %v2186, 0.0
    %v2211 = vmax.f32 %v2188, 0.0
    %v2212 = vmax.f32 %v2097, 0.0
    %v2213 = vmax.f32 %v2099, 0.0
    %v2214 = vmax.f32 %v2192, 0.0
    %v2215 = vmax.f32 %v2194, 0.0
    %v2217 = vsel %vm303, %v2212, 0
    %v2220 = vsel %vm303, %v2213, 0
    %v2223 = vsel %vm303, %v2214, 0
    %v2226 = vsel %vm303, %v2215, 0
    %2228 = vmatprep.subr.mxu0 0.0
    %2229 = vmatpush1.msra.mxu0 0.0
    %2230 = vmatprep.subr.mxu0 0.0
    %2231 = vmatpush1.msra.mxu0 0.0
    %2232 = vmatprep.subr.mxu0 0.0
    %2233 = vmatpush1.msra.mxu0 0.0
    %2234 = vmatprep.subr.mxu0 0.0
    %2235 = vmatpush1.msra.mxu0 0.0
    %2236 = vmatprep.subr.mxu0 0.0
    %2237 = vmatpush1.msra.mxu0 0.0
    %2238 = vmatprep.subr.mxu0 0.0
    %2239 = vmatpush1.msra.mxu0 0.0
    %2240 = vmatprep.subr.mxu0 0.0
    %2241 = vmatpush1.msra.mxu0 0.0
    %2242 = vmatprep.subr.mxu0 0.0
    %2243 = vmatpush1.msra.mxu0 0.0
    %2244 = vmatprep.subr.mxu0 0.0
    %2245 = vmatpush1.msra.mxu0 0.0
    %2246 = vmatprep.subr.mxu0 0.0
    %2247 = vmatpush1.msra.mxu0 0.0
    %2248 = vmatprep.subr.mxu0 0.0
    %2249 = vmatpush1.msra.mxu0 0.0
    %2250 = vmatprep.subr.mxu0 %v2220
    %2251 = vmatpush1.msra.mxu0 %v2217
    %2252 = vmatprep.subr.mxu0 %v2209
    %2253 = vmatpush1.msra.mxu0 %v2208
    %2254 = vmatprep.subr.mxu0 %v2205
    %2255 = vmatpush1.msra.mxu0 %v2204
    %2256 = vmatprep.subr.mxu0 %v2201
    %2257 = vmatpush1.msra.mxu0 %v2200
    %2258 = vmatprep.subr.mxu0 %v2197
    %2259 = vmatpush1.msra.mxu0 %v2196
    %2260 = vmatprep.subr.mxu0 0.0
    %2261 = vmatpush2.msra.mxu0 0.0
    %2262 = vmatprep.subr.mxu0 0.0
    %2263 = vmatpush2.msra.mxu0 0.0
    %2264 = vmatprep.subr.mxu0 0.0
    %2265 = vmatpush2.msra.mxu0 0.0
    %2266 = vmatprep.subr.mxu0 0.0
    %2267 = vmatpush2.msra.mxu0 0.0
    %2268 = vmatprep.subr.mxu0 0.0
    %2269 = vmatpush2.msra.mxu0 0.0
    %2270 = vmatprep.subr.mxu0 0.0
    %2271 = vmatpush2.msra.mxu0 0.0
    %2272 = vmatprep.subr.mxu0 0.0
    %2273 = vmatpush2.msra.mxu0 0.0
    %2274 = vmatprep.subr.mxu0 0.0
    %2275 = vmatpush2.msra.mxu0 0.0
    %2276 = vmatprep.subr.mxu0 0.0
    %2277 = vmatpush2.msra.mxu0 0.0
    %2278 = vmatprep.subr.mxu0 0.0
    %2279 = vmatpush2.msra.mxu0 0.0
    %2280 = vmatprep.subr.mxu0 0.0
    %2281 = vmatpush2.msra.mxu0 0.0
    %2282 = vmatprep.subr.mxu0 0.0
    %2283 = vmatpush2.msra.mxu0 0.0
    %2284 = vmatprep.subr.mxu0 0.0
    %2285 = vmatpush2.msra.mxu0 0.0
    %2286 = vmatprep.subr.mxu0 0.0
    %2287 = vmatpush2.msra.mxu0 0.0
    %2288 = vmatprep.subr.mxu0 0.0
    %2289 = vmatpush2.msra.mxu0 0.0
    %2290 = vmatprep.subr.mxu0 0.0
    %2291 = vmatpush2.msra.mxu0 0.0
    %2292 = vmatprep.mubr.f32.mxu0 0.0
    %2293 = vmatmul.mubr.f32.gmra.mxu0 %v536
    %v2294 = vpop.f32.mrf.mxu0
    %v2295 = vadd.f32 0.0, %v2294
    %v2296 = vpop.f32.mrf.mxu0
    %v2297 = vadd.f32 0.0, %v2296
    %2298 = vmatprep.mubr.f32.mxu0 0.0
    %2299 = vmatmul.mubr.f32.gmra.mxu0 %v538
    %v2300 = vpop.f32.mrf.mxu0
    %v2301 = vadd.f32 0.0, %v2300
    %v2302 = vpop.f32.mrf.mxu0
    %v2303 = vadd.f32 0.0, %v2302
    %2304 = vmatprep.mubr.f32.mxu0 0.0
    %2305 = vmatmul.mubr.f32.gmra.mxu0 %v540
    %v2306 = vpop.f32.mrf.mxu0
    %v2307 = vadd.f32 0.0, %v2306
    %v2308 = vpop.f32.mrf.mxu0
    %v2309 = vadd.f32 0.0, %v2308
    %2310 = vmatprep.mubr.f32.mxu0 0.0
    %2311 = vmatmul.mubr.f32.gmra.mxu0 %v542
    %v2312 = vpop.f32.mrf.mxu0
    %v2313 = vadd.f32 0.0, %v2312
    %v2314 = vpop.f32.mrf.mxu0
    %v2315 = vadd.f32 0.0, %v2314
    %2316 = vmatprep.mubr.f32.mxu0 0.0
    %2317 = vmatmul.mubr.f32.gmra.mxu0 %v544
    %v2318 = vpop.f32.mrf.mxu0
    %v2319 = vadd.f32 0.0, %v2318
    %v2320 = vpop.f32.mrf.mxu0
    %v2321 = vadd.f32 0.0, %v2320
    %2322 = vdwg.mxu0
    %2323 = vmatprep.subr.mxu0 0.0
    %2324 = vmatpush1.msra.mxu0 0.0
    %2325 = vmatprep.subr.mxu0 0.0
    %2326 = vmatpush1.msra.mxu0 0.0
    %2327 = vmatprep.subr.mxu0 0.0
    %2328 = vmatpush1.msra.mxu0 0.0
    %2329 = vmatprep.subr.mxu0 0.0
    %2330 = vmatpush1.msra.mxu0 0.0
    %2331 = vmatprep.subr.mxu0 0.0
    %2332 = vmatpush1.msra.mxu0 0.0
    %2333 = vmatprep.subr.mxu0 0.0
    %2334 = vmatpush1.msra.mxu0 0.0
    %2335 = vmatprep.subr.mxu0 0.0
    %2336 = vmatpush1.msra.mxu0 0.0
    %2337 = vmatprep.subr.mxu0 0.0
    %2338 = vmatpush1.msra.mxu0 0.0
    %2339 = vmatprep.subr.mxu0 0.0
    %2340 = vmatpush1.msra.mxu0 0.0
    %2341 = vmatprep.subr.mxu0 0.0
    %2342 = vmatpush1.msra.mxu0 0.0
    %2343 = vmatprep.subr.mxu0 0.0
    %2344 = vmatpush1.msra.mxu0 0.0
    %2345 = vmatprep.subr.mxu0 %v2226
    %2346 = vmatpush1.msra.mxu0 %v2223
    %2347 = vmatprep.subr.mxu0 %v2211
    %2348 = vmatpush1.msra.mxu0 %v2210
    %2349 = vmatprep.subr.mxu0 %v2207
    %2350 = vmatpush1.msra.mxu0 %v2206
    %2351 = vmatprep.subr.mxu0 %v2203
    %2352 = vmatpush1.msra.mxu0 %v2202
    %2353 = vmatprep.subr.mxu0 %v2199
    %2354 = vmatpush1.msra.mxu0 %v2198
    %2355 = vmatprep.subr.mxu0 0.0
    %2356 = vmatpush2.msra.mxu0 0.0
    %2357 = vmatprep.subr.mxu0 0.0
    %2358 = vmatpush2.msra.mxu0 0.0
    %2359 = vmatprep.subr.mxu0 0.0
    %2360 = vmatpush2.msra.mxu0 0.0
    %2361 = vmatprep.subr.mxu0 0.0
    %2362 = vmatpush2.msra.mxu0 0.0
    %2363 = vmatprep.subr.mxu0 0.0
    %2364 = vmatpush2.msra.mxu0 0.0
    %2365 = vmatprep.subr.mxu0 0.0
    %2366 = vmatpush2.msra.mxu0 0.0
    %2367 = vmatprep.subr.mxu0 0.0
    %2368 = vmatpush2.msra.mxu0 0.0
    %2369 = vmatprep.subr.mxu0 0.0
    %2370 = vmatpush2.msra.mxu0 0.0
    %2371 = vmatprep.subr.mxu0 0.0
    %2372 = vmatpush2.msra.mxu0 0.0
    %2373 = vmatprep.subr.mxu0 0.0
    %2374 = vmatpush2.msra.mxu0 0.0
    %2375 = vmatprep.subr.mxu0 0.0
    %2376 = vmatpush2.msra.mxu0 0.0
    %2377 = vmatprep.subr.mxu0 0.0
    %2378 = vmatpush2.msra.mxu0 0.0
    %2379 = vmatprep.subr.mxu0 0.0
    %2380 = vmatpush2.msra.mxu0 0.0
    %2381 = vmatprep.subr.mxu0 0.0
    %2382 = vmatpush2.msra.mxu0 0.0
    %2383 = vmatprep.subr.mxu0 0.0
    %2384 = vmatpush2.msra.mxu0 0.0
    %2385 = vmatprep.subr.mxu0 0.0
    %2386 = vmatpush2.msra.mxu0 0.0
    %2387 = vmatprep.mubr.f32.mxu0 0.0
    %2388 = vmatmul.mubr.f32.gmra.mxu0 %v536
    %v2389 = vpop.f32.mrf.mxu0
    %v2390 = vadd.f32 0.0, %v2389
    %v2391 = vpop.f32.mrf.mxu0
    %v2392 = vadd.f32 0.0, %v2391
    %2393 = vmatprep.mubr.f32.mxu0 0.0
    %2394 = vmatmul.mubr.f32.gmra.mxu0 %v538
    %v2395 = vpop.f32.mrf.mxu0
    %v2396 = vadd.f32 0.0, %v2395
    %v2397 = vpop.f32.mrf.mxu0
    %v2398 = vadd.f32 0.0, %v2397
    %2399 = vmatprep.mubr.f32.mxu0 0.0
    %2400 = vmatmul.mubr.f32.gmra.mxu0 %v540
    %v2401 = vpop.f32.mrf.mxu0
    %v2402 = vadd.f32 0.0, %v2401
    %v2403 = vpop.f32.mrf.mxu0
    %v2404 = vadd.f32 0.0, %v2403
    %2405 = vmatprep.mubr.f32.mxu0 0.0
    %2406 = vmatmul.mubr.f32.gmra.mxu0 %v542
    %v2407 = vpop.f32.mrf.mxu0
    %v2408 = vadd.f32 0.0, %v2407
    %v2409 = vpop.f32.mrf.mxu0
    %v2410 = vadd.f32 0.0, %v2409
    %2411 = vmatprep.mubr.f32.mxu0 0.0
    %2412 = vmatmul.mubr.f32.gmra.mxu0 %v544
    %v2413 = vpop.f32.mrf.mxu0
    %v2414 = vadd.f32 0.0, %v2413
    %v2415 = vpop.f32.mrf.mxu0
    %v2416 = vadd.f32 0.0, %v2415
    %2417 = vdwg.mxu0
    %v2418 = vmax.f32 %v2295, 0.0
    %v2419 = vmax.f32 %v2297, 0.0
    %v2420 = vmax.f32 %v2390, 0.0
    %v2421 = vmax.f32 %v2392, 0.0
    %v2422 = vmax.f32 %v2301, 0.0
    %v2423 = vmax.f32 %v2303, 0.0
    %v2424 = vmax.f32 %v2396, 0.0
    %v2425 = vmax.f32 %v2398, 0.0
    %v2426 = vmax.f32 %v2307, 0.0
    %v2427 = vmax.f32 %v2309, 0.0
    %v2428 = vmax.f32 %v2402, 0.0
    %v2429 = vmax.f32 %v2404, 0.0
    %v2430 = vmax.f32 %v2313, 0.0
    %v2431 = vmax.f32 %v2315, 0.0
    %v2432 = vmax.f32 %v2408, 0.0
    %v2433 = vmax.f32 %v2410, 0.0
    %v2434 = vmax.f32 %v2319, 0.0
    %v2435 = vmax.f32 %v2321, 0.0
    %v2436 = vmax.f32 %v2414, 0.0
    %v2437 = vmax.f32 %v2416, 0.0
    %v2439 = vsel %vm303, %v2434, 0
    %v2442 = vsel %vm303, %v2435, 0
    %v2445 = vsel %vm303, %v2436, 0
    %v2448 = vsel %vm303, %v2437, 0
    %2450 = vmatprep.subr.mxu0 0.0
    %2451 = vmatpush1.msra.mxu0 0.0
    %2452 = vmatprep.subr.mxu0 0.0
    %2453 = vmatpush1.msra.mxu0 0.0
    %2454 = vmatprep.subr.mxu0 0.0
    %2455 = vmatpush1.msra.mxu0 0.0
    %2456 = vmatprep.subr.mxu0 0.0
    %2457 = vmatpush1.msra.mxu0 0.0
    %2458 = vmatprep.subr.mxu0 0.0
    %2459 = vmatpush1.msra.mxu0 0.0
    %2460 = vmatprep.subr.mxu0 0.0
    %2461 = vmatpush1.msra.mxu0 0.0
    %2462 = vmatprep.subr.mxu0 0.0
    %2463 = vmatpush1.msra.mxu0 0.0
    %2464 = vmatprep.subr.mxu0 0.0
    %2465 = vmatpush1.msra.mxu0 0.0
    %2466 = vmatprep.subr.mxu0 0.0
    %2467 = vmatpush1.msra.mxu0 0.0
    %2468 = vmatprep.subr.mxu0 0.0
    %2469 = vmatpush1.msra.mxu0 0.0
    %2470 = vmatprep.subr.mxu0 0.0
    %2471 = vmatpush1.msra.mxu0 0.0
    %2472 = vmatprep.subr.mxu0 %v2442
    %2473 = vmatpush1.msra.mxu0 %v2439
    %2474 = vmatprep.subr.mxu0 %v2431
    %2475 = vmatpush1.msra.mxu0 %v2430
    %2476 = vmatprep.subr.mxu0 %v2427
    %2477 = vmatpush1.msra.mxu0 %v2426
    %2478 = vmatprep.subr.mxu0 %v2423
    %2479 = vmatpush1.msra.mxu0 %v2422
    %2480 = vmatprep.subr.mxu0 %v2419
    %2481 = vmatpush1.msra.mxu0 %v2418
    %2482 = vmatprep.subr.mxu0 0.0
    %2483 = vmatpush2.msra.mxu0 0.0
    %2484 = vmatprep.subr.mxu0 0.0
    %2485 = vmatpush2.msra.mxu0 0.0
    %2486 = vmatprep.subr.mxu0 0.0
    %2487 = vmatpush2.msra.mxu0 0.0
    %2488 = vmatprep.subr.mxu0 0.0
    %2489 = vmatpush2.msra.mxu0 0.0
    %2490 = vmatprep.subr.mxu0 0.0
    %2491 = vmatpush2.msra.mxu0 0.0
    %2492 = vmatprep.subr.mxu0 0.0
    %2493 = vmatpush2.msra.mxu0 0.0
    %2494 = vmatprep.subr.mxu0 0.0
    %2495 = vmatpush2.msra.mxu0 0.0
    %2496 = vmatprep.subr.mxu0 0.0
    %2497 = vmatpush2.msra.mxu0 0.0
    %2498 = vmatprep.subr.mxu0 0.0
    %2499 = vmatpush2.msra.mxu0 0.0
    %2500 = vmatprep.subr.mxu0 0.0
    %2501 = vmatpush2.msra.mxu0 0.0
    %2502 = vmatprep.subr.mxu0 0.0
    %2503 = vmatpush2.msra.mxu0 0.0
    %2504 = vmatprep.subr.mxu0 0.0
    %2505 = vmatpush2.msra.mxu0 0.0
    %2506 = vmatprep.subr.mxu0 0.0
    %2507 = vmatpush2.msra.mxu0 0.0
    %2508 = vmatprep.subr.mxu0 0.0
    %2509 = vmatpush2.msra.mxu0 0.0
    %2510 = vmatprep.subr.mxu0 0.0
    %2511 = vmatpush2.msra.mxu0 0.0
    %2512 = vmatprep.subr.mxu0 0.0
    %2513 = vmatpush2.msra.mxu0 0.0
    %2514 = vmatprep.mubr.f32.mxu0 0.0
    %2515 = vmatmul.mubr.f32.gmra.mxu0 %v769
    %v2516 = vpop.f32.mrf.mxu0
    %v2517 = vadd.f32 0.0, %v2516
    %v2518 = vpop.f32.mrf.mxu0
    %v2519 = vadd.f32 0.0, %v2518
    %2520 = vdwg.mxu0
    %2521 = vmatprep.subr.mxu0 0.0
    %2522 = vmatpush1.msra.mxu0 0.0
    %2523 = vmatprep.subr.mxu0 0.0
    %2524 = vmatpush1.msra.mxu0 0.0
    %2525 = vmatprep.subr.mxu0 0.0
    %2526 = vmatpush1.msra.mxu0 0.0
    %2527 = vmatprep.subr.mxu0 0.0
    %2528 = vmatpush1.msra.mxu0 0.0
    %2529 = vmatprep.subr.mxu0 0.0
    %2530 = vmatpush1.msra.mxu0 0.0
    %2531 = vmatprep.subr.mxu0 0.0
    %2532 = vmatpush1.msra.mxu0 0.0
    %2533 = vmatprep.subr.mxu0 0.0
    %2534 = vmatpush1.msra.mxu0 0.0
    %2535 = vmatprep.subr.mxu0 0.0
    %2536 = vmatpush1.msra.mxu0 0.0
    %2537 = vmatprep.subr.mxu0 0.0
    %2538 = vmatpush1.msra.mxu0 0.0
    %2539 = vmatprep.subr.mxu0 0.0
    %2540 = vmatpush1.msra.mxu0 0.0
    %2541 = vmatprep.subr.mxu0 0.0
    %2542 = vmatpush1.msra.mxu0 0.0
    %2543 = vmatprep.subr.mxu0 %v2448
    %2544 = vmatpush1.msra.mxu0 %v2445
    %2545 = vmatprep.subr.mxu0 %v2433
    %2546 = vmatpush1.msra.mxu0 %v2432
    %2547 = vmatprep.subr.mxu0 %v2429
    %2548 = vmatpush1.msra.mxu0 %v2428
    %2549 = vmatprep.subr.mxu0 %v2425
    %2550 = vmatpush1.msra.mxu0 %v2424
    %2551 = vmatprep.subr.mxu0 %v2421
    %2552 = vmatpush1.msra.mxu0 %v2420
    %2553 = vmatprep.subr.mxu0 0.0
    %2554 = vmatpush2.msra.mxu0 0.0
    %2555 = vmatprep.subr.mxu0 0.0
    %2556 = vmatpush2.msra.mxu0 0.0
    %2557 = vmatprep.subr.mxu0 0.0
    %2558 = vmatpush2.msra.mxu0 0.0
    %2559 = vmatprep.subr.mxu0 0.0
    %2560 = vmatpush2.msra.mxu0 0.0
    %2561 = vmatprep.subr.mxu0 0.0
    %2562 = vmatpush2.msra.mxu0 0.0
    %2563 = vmatprep.subr.mxu0 0.0
    %2564 = vmatpush2.msra.mxu0 0.0
    %2565 = vmatprep.subr.mxu0 0.0
    %2566 = vmatpush2.msra.mxu0 0.0
    %2567 = vmatprep.subr.mxu0 0.0
    %2568 = vmatpush2.msra.mxu0 0.0
    %2569 = vmatprep.subr.mxu0 0.0
    %2570 = vmatpush2.msra.mxu0 0.0
    %2571 = vmatprep.subr.mxu0 0.0
    %2572 = vmatpush2.msra.mxu0 0.0
    %2573 = vmatprep.subr.mxu0 0.0
    %2574 = vmatpush2.msra.mxu0 0.0
    %2575 = vmatprep.subr.mxu0 0.0
    %2576 = vmatpush2.msra.mxu0 0.0
    %2577 = vmatprep.subr.mxu0 0.0
    %2578 = vmatpush2.msra.mxu0 0.0
    %2579 = vmatprep.subr.mxu0 0.0
    %2580 = vmatpush2.msra.mxu0 0.0
    %2581 = vmatprep.subr.mxu0 0.0
    %2582 = vmatpush2.msra.mxu0 0.0
    %2583 = vmatprep.subr.mxu0 0.0
    %2584 = vmatpush2.msra.mxu0 0.0
    %2585 = vmatprep.mubr.f32.mxu0 0.0
    %2586 = vmatmul.mubr.f32.gmra.mxu0 %v769
    %v2587 = vpop.f32.mrf.mxu0
    %v2588 = vadd.f32 0.0, %v2587
    %v2589 = vpop.f32.mrf.mxu0
    %v2590 = vadd.f32 0.0, %v2589
    %2591 = vdwg.mxu0
    %v2596 = vcombine.low %v2517, %v2519
    %v2597 = vcombine.low %v2588, %v2590
    %s2600 = scalar_lea.vmem [#allocation2], 32
    %2601 = vst [vmem:[%s2600] sm:$0x77] %v2596
    %2602 = vst [vmem:[%s2600 + $0x8] sm:$0x77] %v2597
    %s2603 = scalar_lea.vmem %s0, 48
    %v2604 = vld [vmem:[%s2603] sm:$0xff]
    %v2605 = vld [vmem:[%s2603 + $0x8] sm:$0xff]
    %v2608 = vcombine.high %v2604, %v2604
    %v2609 = vcombine.high %v2605, %v2605
    %v2610 = vsel %vm63, %v2604, 0
    %v2612 = vsel %vm63, %v2608, 0
    %v2614 = vsel %vm63, %v2605, 0
    %v2616 = vsel %vm63, %v2609, 0
    %2618 = vmatprep.subr.mxu0 0.0
    %2619 = vmatpush1.msra.mxu0 0.0
    %2620 = vmatprep.subr.mxu0 0.0
    %2621 = vmatpush1.msra.mxu0 0.0
    %2622 = vmatprep.subr.mxu0 0.0
    %2623 = vmatpush1.msra.mxu0 0.0
    %2624 = vmatprep.subr.mxu0 0.0
    %2625 = vmatpush1.msra.mxu0 0.0
    %2626 = vmatprep.subr.mxu0 0.0
    %2627 = vmatpush1.msra.mxu0 0.0
    %2628 = vmatprep.subr.mxu0 0.0
    %2629 = vmatpush1.msra.mxu0 0.0
    %2630 = vmatprep.subr.mxu0 0.0
    %2631 = vmatpush1.msra.mxu0 0.0
    %2632 = vmatprep.subr.mxu0 0.0
    %2633 = vmatpush1.msra.mxu0 0.0
    %2634 = vmatprep.subr.mxu0 0.0
    %2635 = vmatpush1.msra.mxu0 0.0
    %2636 = vmatprep.subr.mxu0 0.0
    %2637 = vmatpush1.msra.mxu0 0.0
    %2638 = vmatprep.subr.mxu0 0.0
    %2639 = vmatpush1.msra.mxu0 0.0
    %2640 = vmatprep.subr.mxu0 0.0
    %2641 = vmatpush1.msra.mxu0 0.0
    %2642 = vmatprep.subr.mxu0 0.0
    %2643 = vmatpush1.msra.mxu0 0.0
    %2644 = vmatprep.subr.mxu0 0.0
    %2645 = vmatpush1.msra.mxu0 0.0
    %2646 = vmatprep.subr.mxu0 0.0
    %2647 = vmatpush1.msra.mxu0 0.0
    %2648 = vmatprep.subr.mxu0 %v2612
    %2649 = vmatpush1.msra.mxu0 %v2610
    %2650 = vmatprep.subr.mxu0 0.0
    %2651 = vmatpush2.msra.mxu0 0.0
    %2652 = vmatprep.subr.mxu0 0.0
    %2653 = vmatpush2.msra.mxu0 0.0
    %2654 = vmatprep.subr.mxu0 0.0
    %2655 = vmatpush2.msra.mxu0 0.0
    %2656 = vmatprep.subr.mxu0 0.0
    %2657 = vmatpush2.msra.mxu0 0.0
    %2658 = vmatprep.subr.mxu0 0.0
    %2659 = vmatpush2.msra.mxu0 0.0
    %2660 = vmatprep.subr.mxu0 0.0
    %2661 = vmatpush2.msra.mxu0 0.0
    %2662 = vmatprep.subr.mxu0 0.0
    %2663 = vmatpush2.msra.mxu0 0.0
    %2664 = vmatprep.subr.mxu0 0.0
    %2665 = vmatpush2.msra.mxu0 0.0
    %2666 = vmatprep.subr.mxu0 0.0
    %2667 = vmatpush2.msra.mxu0 0.0
    %2668 = vmatprep.subr.mxu0 0.0
    %2669 = vmatpush2.msra.mxu0 0.0
    %2670 = vmatprep.subr.mxu0 0.0
    %2671 = vmatpush2.msra.mxu0 0.0
    %2672 = vmatprep.subr.mxu0 0.0
    %2673 = vmatpush2.msra.mxu0 0.0
    %2674 = vmatprep.subr.mxu0 0.0
    %2675 = vmatpush2.msra.mxu0 0.0
    %2676 = vmatprep.subr.mxu0 0.0
    %2677 = vmatpush2.msra.mxu0 0.0
    %2678 = vmatprep.subr.mxu0 0.0
    %2679 = vmatpush2.msra.mxu0 0.0
    %2680 = vmatprep.subr.mxu0 0.0
    %2681 = vmatpush2.msra.mxu0 0.0
    %2682 = vmatprep.mubr.f32.mxu0 0.0
    %2683 = vmatmul.mubr.f32.gmra.mxu0 %v53
    %v2684 = vpop.f32.mrf.mxu0
    %v2685 = vadd.f32 %v24, %v2684
    %v2686 = vpop.f32.mrf.mxu0
    %v2687 = vadd.f32 %v24, %v2686
    %2688 = vmatprep.mubr.f32.mxu0 0.0
    %2689 = vmatmul.mubr.f32.gmra.mxu0 %v55
    %v2690 = vpop.f32.mrf.mxu0
    %v2691 = vadd.f32 %v29, %v2690
    %v2692 = vpop.f32.mrf.mxu0
    %v2693 = vadd.f32 %v29, %v2692
    %2694 = vmatprep.mubr.f32.mxu0 0.0
    %2695 = vmatmul.mubr.f32.gmra.mxu0 %v57
    %v2696 = vpop.f32.mrf.mxu0
    %v2697 = vadd.f32 %v34, %v2696
    %v2698 = vpop.f32.mrf.mxu0
    %v2699 = vadd.f32 %v34, %v2698
    %2700 = vmatprep.mubr.f32.mxu0 0.0
    %2701 = vmatmul.mubr.f32.gmra.mxu0 %v59
    %v2702 = vpop.f32.mrf.mxu0
    %v2703 = vadd.f32 %v39, %v2702
    %v2704 = vpop.f32.mrf.mxu0
    %v2705 = vadd.f32 %v39, %v2704
    %2706 = vmatprep.mubr.f32.mxu0 0.0
    %2707 = vmatmul.mubr.f32.gmra.mxu0 %v61
    %v2708 = vpop.f32.mrf.mxu0
    %v2709 = vadd.f32 %v44, %v2708
    %v2710 = vpop.f32.mrf.mxu0
    %v2711 = vadd.f32 %v44, %v2710
    %2712 = vdwg.mxu0
    %2713 = vmatprep.subr.mxu0 0.0
    %2714 = vmatpush1.msra.mxu0 0.0
    %2715 = vmatprep.subr.mxu0 0.0
    %2716 = vmatpush1.msra.mxu0 0.0
    %2717 = vmatprep.subr.mxu0 0.0
    %2718 = vmatpush1.msra.mxu0 0.0
    %2719 = vmatprep.subr.mxu0 0.0
    %2720 = vmatpush1.msra.mxu0 0.0
    %2721 = vmatprep.subr.mxu0 0.0
    %2722 = vmatpush1.msra.mxu0 0.0
    %2723 = vmatprep.subr.mxu0 0.0
    %2724 = vmatpush1.msra.mxu0 0.0
    %2725 = vmatprep.subr.mxu0 0.0
    %2726 = vmatpush1.msra.mxu0 0.0
    %2727 = vmatprep.subr.mxu0 0.0
    %2728 = vmatpush1.msra.mxu0 0.0
    %2729 = vmatprep.subr.mxu0 0.0
    %2730 = vmatpush1.msra.mxu0 0.0
    %2731 = vmatprep.subr.mxu0 0.0
    %2732 = vmatpush1.msra.mxu0 0.0
    %2733 = vmatprep.subr.mxu0 0.0
    %2734 = vmatpush1.msra.mxu0 0.0
    %2735 = vmatprep.subr.mxu0 0.0
    %2736 = vmatpush1.msra.mxu0 0.0
    %2737 = vmatprep.subr.mxu0 0.0
    %2738 = vmatpush1.msra.mxu0 0.0
    %2739 = vmatprep.subr.mxu0 0.0
    %2740 = vmatpush1.msra.mxu0 0.0
    %2741 = vmatprep.subr.mxu0 0.0
    %2742 = vmatpush1.msra.mxu0 0.0
    %2743 = vmatprep.subr.mxu0 %v2616
    %2744 = vmatpush1.msra.mxu0 %v2614
    %2745 = vmatprep.subr.mxu0 0.0
    %2746 = vmatpush2.msra.mxu0 0.0
    %2747 = vmatprep.subr.mxu0 0.0
    %2748 = vmatpush2.msra.mxu0 0.0
    %2749 = vmatprep.subr.mxu0 0.0
    %2750 = vmatpush2.msra.mxu0 0.0
    %2751 = vmatprep.subr.mxu0 0.0
    %2752 = vmatpush2.msra.mxu0 0.0
    %2753 = vmatprep.subr.mxu0 0.0
    %2754 = vmatpush2.msra.mxu0 0.0
    %2755 = vmatprep.subr.mxu0 0.0
    %2756 = vmatpush2.msra.mxu0 0.0
    %2757 = vmatprep.subr.mxu0 0.0
    %2758 = vmatpush2.msra.mxu0 0.0
    %2759 = vmatprep.subr.mxu0 0.0
    %2760 = vmatpush2.msra.mxu0 0.0
    %2761 = vmatprep.subr.mxu0 0.0
    %2762 = vmatpush2.msra.mxu0 0.0
    %2763 = vmatprep.subr.mxu0 0.0
    %2764 = vmatpush2.msra.mxu0 0.0
    %2765 = vmatprep.subr.mxu0 0.0
    %2766 = vmatpush2.msra.mxu0 0.0
    %2767 = vmatprep.subr.mxu0 0.0
    %2768 = vmatpush2.msra.mxu0 0.0
    %2769 = vmatprep.subr.mxu0 0.0
    %2770 = vmatpush2.msra.mxu0 0.0
    %2771 = vmatprep.subr.mxu0 0.0
    %2772 = vmatpush2.msra.mxu0 0.0
    %2773 = vmatprep.subr.mxu0 0.0
    %2774 = vmatpush2.msra.mxu0 0.0
    %2775 = vmatprep.subr.mxu0 0.0
    %2776 = vmatpush2.msra.mxu0 0.0
    %2777 = vmatprep.mubr.f32.mxu0 0.0
    %2778 = vmatmul.mubr.f32.gmra.mxu0 %v53
    %v2779 = vpop.f32.mrf.mxu0
    %v2780 = vadd.f32 %v24, %v2779
    %v2781 = vpop.f32.mrf.mxu0
    %v2782 = vadd.f32 %v24, %v2781
    %2783 = vmatprep.mubr.f32.mxu0 0.0
    %2784 = vmatmul.mubr.f32.gmra.mxu0 %v55
    %v2785 = vpop.f32.mrf.mxu0
    %v2786 = vadd.f32 %v29, %v2785
    %v2787 = vpop.f32.mrf.mxu0
    %v2788 = vadd.f32 %v29, %v2787
    %2789 = vmatprep.mubr.f32.mxu0 0.0
    %2790 = vmatmul.mubr.f32.gmra.mxu0 %v57
    %v2791 = vpop.f32.mrf.mxu0
    %v2792 = vadd.f32 %v34, %v2791
    %v2793 = vpop.f32.mrf.mxu0
    %v2794 = vadd.f32 %v34, %v2793
    %2795 = vmatprep.mubr.f32.mxu0 0.0
    %2796 = vmatmul.mubr.f32.gmra.mxu0 %v59
    %v2797 = vpop.f32.mrf.mxu0
    %v2798 = vadd.f32 %v39, %v2797
    %v2799 = vpop.f32.mrf.mxu0
    %v2800 = vadd.f32 %v39, %v2799
    %2801 = vmatprep.mubr.f32.mxu0 0.0
    %2802 = vmatmul.mubr.f32.gmra.mxu0 %v61
    %v2803 = vpop.f32.mrf.mxu0
    %v2804 = vadd.f32 %v44, %v2803
    %v2805 = vpop.f32.mrf.mxu0
    %v2806 = vadd.f32 %v44, %v2805
    %2807 = vdwg.mxu0
    %v2808 = vmax.f32 %v2685, 0.0
    %v2809 = vmax.f32 %v2687, 0.0
    %v2810 = vmax.f32 %v2780, 0.0
    %v2811 = vmax.f32 %v2782, 0.0
    %v2812 = vmax.f32 %v2691, 0.0
    %v2813 = vmax.f32 %v2693, 0.0
    %v2814 = vmax.f32 %v2786, 0.0
    %v2815 = vmax.f32 %v2788, 0.0
    %v2816 = vmax.f32 %v2697, 0.0
    %v2817 = vmax.f32 %v2699, 0.0
    %v2818 = vmax.f32 %v2792, 0.0
    %v2819 = vmax.f32 %v2794, 0.0
    %v2820 = vmax.f32 %v2703, 0.0
    %v2821 = vmax.f32 %v2705, 0.0
    %v2822 = vmax.f32 %v2798, 0.0
    %v2823 = vmax.f32 %v2800, 0.0
    %v2824 = vmax.f32 %v2709, 0.0
    %v2825 = vmax.f32 %v2711, 0.0
    %v2826 = vmax.f32 %v2804, 0.0
    %v2827 = vmax.f32 %v2806, 0.0
    %v2829 = vsel %vm303, %v2824, 0
    %v2832 = vsel %vm303, %v2825, 0
    %v2835 = vsel %vm303, %v2826, 0
    %v2838 = vsel %vm303, %v2827, 0
    %2840 = vmatprep.subr.mxu0 0.0
    %2841 = vmatpush1.msra.mxu0 0.0
    %2842 = vmatprep.subr.mxu0 0.0
    %2843 = vmatpush1.msra.mxu0 0.0
    %2844 = vmatprep.subr.mxu0 0.0
    %2845 = vmatpush1.msra.mxu0 0.0
    %2846 = vmatprep.subr.mxu0 0.0
    %2847 = vmatpush1.msra.mxu0 0.0
    %2848 = vmatprep.subr.mxu0 0.0
    %2849 = vmatpush1.msra.mxu0 0.0
    %2850 = vmatprep.subr.mxu0 0.0
    %2851 = vmatpush1.msra.mxu0 0.0
    %2852 = vmatprep.subr.mxu0 0.0
    %2853 = vmatpush1.msra.mxu0 0.0
    %2854 = vmatprep.subr.mxu0 0.0
    %2855 = vmatpush1.msra.mxu0 0.0
    %2856 = vmatprep.subr.mxu0 0.0
    %2857 = vmatpush1.msra.mxu0 0.0
    %2858 = vmatprep.subr.mxu0 0.0
    %2859 = vmatpush1.msra.mxu0 0.0
    %2860 = vmatprep.subr.mxu0 0.0
    %2861 = vmatpush1.msra.mxu0 0.0
    %2862 = vmatprep.subr.mxu0 %v2832
    %2863 = vmatpush1.msra.mxu0 %v2829
    %2864 = vmatprep.subr.mxu0 %v2821
    %2865 = vmatpush1.msra.mxu0 %v2820
    %2866 = vmatprep.subr.mxu0 %v2817
    %2867 = vmatpush1.msra.mxu0 %v2816
    %2868 = vmatprep.subr.mxu0 %v2813
    %2869 = vmatpush1.msra.mxu0 %v2812
    %2870 = vmatprep.subr.mxu0 %v2809
    %2871 = vmatpush1.msra.mxu0 %v2808
    %2872 = vmatprep.subr.mxu0 0.0
    %2873 = vmatpush2.msra.mxu0 0.0
    %2874 = vmatprep.subr.mxu0 0.0
    %2875 = vmatpush2.msra.mxu0 0.0
    %2876 = vmatprep.subr.mxu0 0.0
    %2877 = vmatpush2.msra.mxu0 0.0
    %2878 = vmatprep.subr.mxu0 0.0
    %2879 = vmatpush2.msra.mxu0 0.0
    %2880 = vmatprep.subr.mxu0 0.0
    %2881 = vmatpush2.msra.mxu0 0.0
    %2882 = vmatprep.subr.mxu0 0.0
    %2883 = vmatpush2.msra.mxu0 0.0
    %2884 = vmatprep.subr.mxu0 0.0
    %2885 = vmatpush2.msra.mxu0 0.0
    %2886 = vmatprep.subr.mxu0 0.0
    %2887 = vmatpush2.msra.mxu0 0.0
    %2888 = vmatprep.subr.mxu0 0.0
    %2889 = vmatpush2.msra.mxu0 0.0
    %2890 = vmatprep.subr.mxu0 0.0
    %2891 = vmatpush2.msra.mxu0 0.0
    %2892 = vmatprep.subr.mxu0 0.0
    %2893 = vmatpush2.msra.mxu0 0.0
    %2894 = vmatprep.subr.mxu0 0.0
    %2895 = vmatpush2.msra.mxu0 0.0
    %2896 = vmatprep.subr.mxu0 0.0
    %2897 = vmatpush2.msra.mxu0 0.0
    %2898 = vmatprep.subr.mxu0 0.0
    %2899 = vmatpush2.msra.mxu0 0.0
    %2900 = vmatprep.subr.mxu0 0.0
    %2901 = vmatpush2.msra.mxu0 0.0
    %2902 = vmatprep.subr.mxu0 0.0
    %2903 = vmatpush2.msra.mxu0 0.0
    %2904 = vmatprep.mubr.f32.mxu0 0.0
    %2905 = vmatmul.mubr.f32.gmra.mxu0 %v293
    %v2906 = vpop.f32.mrf.mxu0
    %v2907 = vadd.f32 0.0, %v2906
    %v2908 = vpop.f32.mrf.mxu0
    %v2909 = vadd.f32 0.0, %v2908
    %2910 = vmatprep.mubr.f32.mxu0 0.0
    %2911 = vmatmul.mubr.f32.gmra.mxu0 %v295
    %v2912 = vpop.f32.mrf.mxu0
    %v2913 = vadd.f32 0.0, %v2912
    %v2914 = vpop.f32.mrf.mxu0
    %v2915 = vadd.f32 0.0, %v2914
    %2916 = vmatprep.mubr.f32.mxu0 0.0
    %2917 = vmatmul.mubr.f32.gmra.mxu0 %v297
    %v2918 = vpop.f32.mrf.mxu0
    %v2919 = vadd.f32 0.0, %v2918
    %v2920 = vpop.f32.mrf.mxu0
    %v2921 = vadd.f32 0.0, %v2920
    %2922 = vmatprep.mubr.f32.mxu0 0.0
    %2923 = vmatmul.mubr.f32.gmra.mxu0 %v299
    %v2924 = vpop.f32.mrf.mxu0
    %v2925 = vadd.f32 0.0, %v2924
    %v2926 = vpop.f32.mrf.mxu0
    %v2927 = vadd.f32 0.0, %v2926
    %2928 = vmatprep.mubr.f32.mxu0 0.0
    %2929 = vmatmul.mubr.f32.gmra.mxu0 %v301
    %v2930 = vpop.f32.mrf.mxu0
    %v2931 = vadd.f32 0.0, %v2930
    %v2932 = vpop.f32.mrf.mxu0
    %v2933 = vadd.f32 0.0, %v2932
    %2934 = vdwg.mxu0
    %2935 = vmatprep.subr.mxu0 0.0
    %2936 = vmatpush1.msra.mxu0 0.0
    %2937 = vmatprep.subr.mxu0 0.0
    %2938 = vmatpush1.msra.mxu0 0.0
    %2939 = vmatprep.subr.mxu0 0.0
    %2940 = vmatpush1.msra.mxu0 0.0
    %2941 = vmatprep.subr.mxu0 0.0
    %2942 = vmatpush1.msra.mxu0 0.0
    %2943 = vmatprep.subr.mxu0 0.0
    %2944 = vmatpush1.msra.mxu0 0.0
    %2945 = vmatprep.subr.mxu0 0.0
    %2946 = vmatpush1.msra.mxu0 0.0
    %2947 = vmatprep.subr.mxu0 0.0
    %2948 = vmatpush1.msra.mxu0 0.0
    %2949 = vmatprep.subr.mxu0 0.0
    %2950 = vmatpush1.msra.mxu0 0.0
    %2951 = vmatprep.subr.mxu0 0.0
    %2952 = vmatpush1.msra.mxu0 0.0
    %2953 = vmatprep.subr.mxu0 0.0
    %2954 = vmatpush1.msra.mxu0 0.0
    %2955 = vmatprep.subr.mxu0 0.0
    %2956 = vmatpush1.msra.mxu0 0.0
    %2957 = vmatprep.subr.mxu0 %v2838
    %2958 = vmatpush1.msra.mxu0 %v2835
    %2959 = vmatprep.subr.mxu0 %v2823
    %2960 = vmatpush1.msra.mxu0 %v2822
    %2961 = vmatprep.subr.mxu0 %v2819
    %2962 = vmatpush1.msra.mxu0 %v2818
    %2963 = vmatprep.subr.mxu0 %v2815
    %2964 = vmatpush1.msra.mxu0 %v2814
    %2965 = vmatprep.subr.mxu0 %v2811
    %2966 = vmatpush1.msra.mxu0 %v2810
    %2967 = vmatprep.subr.mxu0 0.0
    %2968 = vmatpush2.msra.mxu0 0.0
    %2969 = vmatprep.subr.mxu0 0.0
    %2970 = vmatpush2.msra.mxu0 0.0
    %2971 = vmatprep.subr.mxu0 0.0
    %2972 = vmatpush2.msra.mxu0 0.0
    %2973 = vmatprep.subr.mxu0 0.0
    %2974 = vmatpush2.msra.mxu0 0.0
    %2975 = vmatprep.subr.mxu0 0.0
    %2976 = vmatpush2.msra.mxu0 0.0
    %2977 = vmatprep.subr.mxu0 0.0
    %2978 = vmatpush2.msra.mxu0 0.0
    %2979 = vmatprep.subr.mxu0 0.0
    %2980 = vmatpush2.msra.mxu0 0.0
    %2981 = vmatprep.subr.mxu0 0.0
    %2982 = vmatpush2.msra.mxu0 0.0
    %2983 = vmatprep.subr.mxu0 0.0
    %2984 = vmatpush2.msra.mxu0 0.0
    %2985 = vmatprep.subr.mxu0 0.0
    %2986 = vmatpush2.msra.mxu0 0.0
    %2987 = vmatprep.subr.mxu0 0.0
    %2988 = vmatpush2.msra.mxu0 0.0
    %2989 = vmatprep.subr.mxu0 0.0
    %2990 = vmatpush2.msra.mxu0 0.0
    %2991 = vmatprep.subr.mxu0 0.0
    %2992 = vmatpush2.msra.mxu0 0.0
    %2993 = vmatprep.subr.mxu0 0.0
    %2994 = vmatpush2.msra.mxu0 0.0
    %2995 = vmatprep.subr.mxu0 0.0
    %2996 = vmatpush2.msra.mxu0 0.0
    %2997 = vmatprep.subr.mxu0 0.0
    %2998 = vmatpush2.msra.mxu0 0.0
    %2999 = vmatprep.mubr.f32.mxu0 0.0
    %3000 = vmatmul.mubr.f32.gmra.mxu0 %v293
    %v3001 = vpop.f32.mrf.mxu0
    %v3002 = vadd.f32 0.0, %v3001
    %v3003 = vpop.f32.mrf.mxu0
    %v3004 = vadd.f32 0.0, %v3003
    %3005 = vmatprep.mubr.f32.mxu0 0.0
    %3006 = vmatmul.mubr.f32.gmra.mxu0 %v295
    %v3007 = vpop.f32.mrf.mxu0
    %v3008 = vadd.f32 0.0, %v3007
    %v3009 = vpop.f32.mrf.mxu0
    %v3010 = vadd.f32 0.0, %v3009
    %3011 = vmatprep.mubr.f32.mxu0 0.0
    %3012 = vmatmul.mubr.f32.gmra.mxu0 %v297
    %v3013 = vpop.f32.mrf.mxu0
    %v3014 = vadd.f32 0.0, %v3013
    %v3015 = vpop.f32.mrf.mxu0
    %v3016 = vadd.f32 0.0, %v3015
    %3017 = vmatprep.mubr.f32.mxu0 0.0
    %3018 = vmatmul.mubr.f32.gmra.mxu0 %v299
    %v3019 = vpop.f32.mrf.mxu0
    %v3020 = vadd.f32 0.0, %v3019
    %v3021 = vpop.f32.mrf.mxu0
    %v3022 = vadd.f32 0.0, %v3021
    %3023 = vmatprep.mubr.f32.mxu0 0.0
    %3024 = vmatmul.mubr.f32.gmra.mxu0 %v301
    %v3025 = vpop.f32.mrf.mxu0
    %v3026 = vadd.f32 0.0, %v3025
    %v3027 = vpop.f32.mrf.mxu0
    %v3028 = vadd.f32 0.0, %v3027
    %3029 = vdwg.mxu0
    %v3030 = vmax.f32 %v2907, 0.0
    %v3031 = vmax.f32 %v2909, 0.0
    %v3032 = vmax.f32 %v3002, 0.0
    %v3033 = vmax.f32 %v3004, 0.0
    %v3034 = vmax.f32 %v2913, 0.0
    %v3035 = vmax.f32 %v2915, 0.0
    %v3036 = vmax.f32 %v3008, 0.0
    %v3037 = vmax.f32 %v3010, 0.0
    %v3038 = vmax.f32 %v2919, 0.0
    %v3039 = vmax.f32 %v2921, 0.0
    %v3040 = vmax.f32 %v3014, 0.0
    %v3041 = vmax.f32 %v3016, 0.0
    %v3042 = vmax.f32 %v2925, 0.0
    %v3043 = vmax.f32 %v2927, 0.0
    %v3044 = vmax.f32 %v3020, 0.0
    %v3045 = vmax.f32 %v3022, 0.0
    %v3046 = vmax.f32 %v2931, 0.0
    %v3047 = vmax.f32 %v2933, 0.0
    %v3048 = vmax.f32 %v3026, 0.0
    %v3049 = vmax.f32 %v3028, 0.0
    %v3051 = vsel %vm303, %v3046, 0
    %v3054 = vsel %vm303, %v3047, 0
    %v3057 = vsel %vm303, %v3048, 0
    %v3060 = vsel %vm303, %v3049, 0
    %3062 = vmatprep.subr.mxu0 0.0
    %3063 = vmatpush1.msra.mxu0 0.0
    %3064 = vmatprep.subr.mxu0 0.0
    %3065 = vmatpush1.msra.mxu0 0.0
    %3066 = vmatprep.subr.mxu0 0.0
    %3067 = vmatpush1.msra.mxu0 0.0
    %3068 = vmatprep.subr.mxu0 0.0
    %3069 = vmatpush1.msra.mxu0 0.0
    %3070 = vmatprep.subr.mxu0 0.0
    %3071 = vmatpush1.msra.mxu0 0.0
    %3072 = vmatprep.subr.mxu0 0.0
    %3073 = vmatpush1.msra.mxu0 0.0
    %3074 = vmatprep.subr.mxu0 0.0
    %3075 = vmatpush1.msra.mxu0 0.0
    %3076 = vmatprep.subr.mxu0 0.0
    %3077 = vmatpush1.msra.mxu0 0.0
    %3078 = vmatprep.subr.mxu0 0.0
    %3079 = vmatpush1.msra.mxu0 0.0
    %3080 = vmatprep.subr.mxu0 0.0
    %3081 = vmatpush1.msra.mxu0 0.0
    %3082 = vmatprep.subr.mxu0 0.0
    %3083 = vmatpush1.msra.mxu0 0.0
    %3084 = vmatprep.subr.mxu0 %v3054
    %3085 = vmatpush1.msra.mxu0 %v3051
    %3086 = vmatprep.subr.mxu0 %v3043
    %3087 = vmatpush1.msra.mxu0 %v3042
    %3088 = vmatprep.subr.mxu0 %v3039
    %3089 = vmatpush1.msra.mxu0 %v3038
    %3090 = vmatprep.subr.mxu0 %v3035
    %3091 = vmatpush1.msra.mxu0 %v3034
    %3092 = vmatprep.subr.mxu0 %v3031
    %3093 = vmatpush1.msra.mxu0 %v3030
    %3094 = vmatprep.subr.mxu0 0.0
    %3095 = vmatpush2.msra.mxu0 0.0
    %3096 = vmatprep.subr.mxu0 0.0
    %3097 = vmatpush2.msra.mxu0 0.0
    %3098 = vmatprep.subr.mxu0 0.0
    %3099 = vmatpush2.msra.mxu0 0.0
    %3100 = vmatprep.subr.mxu0 0.0
    %3101 = vmatpush2.msra.mxu0 0.0
    %3102 = vmatprep.subr.mxu0 0.0
    %3103 = vmatpush2.msra.mxu0 0.0
    %3104 = vmatprep.subr.mxu0 0.0
    %3105 = vmatpush2.msra.mxu0 0.0
    %3106 = vmatprep.subr.mxu0 0.0
    %3107 = vmatpush2.msra.mxu0 0.0
    %3108 = vmatprep.subr.mxu0 0.0
    %3109 = vmatpush2.msra.mxu0 0.0
    %3110 = vmatprep.subr.mxu0 0.0
    %3111 = vmatpush2.msra.mxu0 0.0
    %3112 = vmatprep.subr.mxu0 0.0
    %3113 = vmatpush2.msra.mxu0 0.0
    %3114 = vmatprep.subr.mxu0 0.0
    %3115 = vmatpush2.msra.mxu0 0.0
    %3116 = vmatprep.subr.mxu0 0.0
    %3117 = vmatpush2.msra.mxu0 0.0
    %3118 = vmatprep.subr.mxu0 0.0
    %3119 = vmatpush2.msra.mxu0 0.0
    %3120 = vmatprep.subr.mxu0 0.0
    %3121 = vmatpush2.msra.mxu0 0.0
    %3122 = vmatprep.subr.mxu0 0.0
    %3123 = vmatpush2.msra.mxu0 0.0
    %3124 = vmatprep.subr.mxu0 0.0
    %3125 = vmatpush2.msra.mxu0 0.0
    %3126 = vmatprep.mubr.f32.mxu0 0.0
    %3127 = vmatmul.mubr.f32.gmra.mxu0 %v536
    %v3128 = vpop.f32.mrf.mxu0
    %v3129 = vadd.f32 0.0, %v3128
    %v3130 = vpop.f32.mrf.mxu0
    %v3131 = vadd.f32 0.0, %v3130
    %3132 = vmatprep.mubr.f32.mxu0 0.0
    %3133 = vmatmul.mubr.f32.gmra.mxu0 %v538
    %v3134 = vpop.f32.mrf.mxu0
    %v3135 = vadd.f32 0.0, %v3134
    %v3136 = vpop.f32.mrf.mxu0
    %v3137 = vadd.f32 0.0, %v3136
    %3138 = vmatprep.mubr.f32.mxu0 0.0
    %3139 = vmatmul.mubr.f32.gmra.mxu0 %v540
    %v3140 = vpop.f32.mrf.mxu0
    %v3141 = vadd.f32 0.0, %v3140
    %v3142 = vpop.f32.mrf.mxu0
    %v3143 = vadd.f32 0.0, %v3142
    %3144 = vmatprep.mubr.f32.mxu0 0.0
    %3145 = vmatmul.mubr.f32.gmra.mxu0 %v542
    %v3146 = vpop.f32.mrf.mxu0
    %v3147 = vadd.f32 0.0, %v3146
    %v3148 = vpop.f32.mrf.mxu0
    %v3149 = vadd.f32 0.0, %v3148
    %3150 = vmatprep.mubr.f32.mxu0 0.0
    %3151 = vmatmul.mubr.f32.gmra.mxu0 %v544
    %v3152 = vpop.f32.mrf.mxu0
    %v3153 = vadd.f32 0.0, %v3152
    %v3154 = vpop.f32.mrf.mxu0
    %v3155 = vadd.f32 0.0, %v3154
    %3156 = vdwg.mxu0
    %3157 = vmatprep.subr.mxu0 0.0
    %3158 = vmatpush1.msra.mxu0 0.0
    %3159 = vmatprep.subr.mxu0 0.0
    %3160 = vmatpush1.msra.mxu0 0.0
    %3161 = vmatprep.subr.mxu0 0.0
    %3162 = vmatpush1.msra.mxu0 0.0
    %3163 = vmatprep.subr.mxu0 0.0
    %3164 = vmatpush1.msra.mxu0 0.0
    %3165 = vmatprep.subr.mxu0 0.0
    %3166 = vmatpush1.msra.mxu0 0.0
    %3167 = vmatprep.subr.mxu0 0.0
    %3168 = vmatpush1.msra.mxu0 0.0
    %3169 = vmatprep.subr.mxu0 0.0
    %3170 = vmatpush1.msra.mxu0 0.0
    %3171 = vmatprep.subr.mxu0 0.0
    %3172 = vmatpush1.msra.mxu0 0.0
    %3173 = vmatprep.subr.mxu0 0.0
    %3174 = vmatpush1.msra.mxu0 0.0
    %3175 = vmatprep.subr.mxu0 0.0
    %3176 = vmatpush1.msra.mxu0 0.0
    %3177 = vmatprep.subr.mxu0 0.0
    %3178 = vmatpush1.msra.mxu0 0.0
    %3179 = vmatprep.subr.mxu0 %v3060
    %3180 = vmatpush1.msra.mxu0 %v3057
    %3181 = vmatprep.subr.mxu0 %v3045
    %3182 = vmatpush1.msra.mxu0 %v3044
    %3183 = vmatprep.subr.mxu0 %v3041
    %3184 = vmatpush1.msra.mxu0 %v3040
    %3185 = vmatprep.subr.mxu0 %v3037
    %3186 = vmatpush1.msra.mxu0 %v3036
    %3187 = vmatprep.subr.mxu0 %v3033
    %3188 = vmatpush1.msra.mxu0 %v3032
    %3189 = vmatprep.subr.mxu0 0.0
    %3190 = vmatpush2.msra.mxu0 0.0
    %3191 = vmatprep.subr.mxu0 0.0
    %3192 = vmatpush2.msra.mxu0 0.0
    %3193 = vmatprep.subr.mxu0 0.0
    %3194 = vmatpush2.msra.mxu0 0.0
    %3195 = vmatprep.subr.mxu0 0.0
    %3196 = vmatpush2.msra.mxu0 0.0
    %3197 = vmatprep.subr.mxu0 0.0
    %3198 = vmatpush2.msra.mxu0 0.0
    %3199 = vmatprep.subr.mxu0 0.0
    %3200 = vmatpush2.msra.mxu0 0.0
    %3201 = vmatprep.subr.mxu0 0.0
    %3202 = vmatpush2.msra.mxu0 0.0
    %3203 = vmatprep.subr.mxu0 0.0
    %3204 = vmatpush2.msra.mxu0 0.0
    %3205 = vmatprep.subr.mxu0 0.0
    %3206 = vmatpush2.msra.mxu0 0.0
    %3207 = vmatprep.subr.mxu0 0.0
    %3208 = vmatpush2.msra.mxu0 0.0
    %3209 = vmatprep.subr.mxu0 0.0
    %3210 = vmatpush2.msra.mxu0 0.0
    %3211 = vmatprep.subr.mxu0 0.0
    %3212 = vmatpush2.msra.mxu0 0.0
    %3213 = vmatprep.subr.mxu0 0.0
    %3214 = vmatpush2.msra.mxu0 0.0
    %3215 = vmatprep.subr.mxu0 0.0
    %3216 = vmatpush2.msra.mxu0 0.0
    %3217 = vmatprep.subr.mxu0 0.0
    %3218 = vmatpush2.msra.mxu0 0.0
    %3219 = vmatprep.subr.mxu0 0.0
    %3220 = vmatpush2.msra.mxu0 0.0
    %3221 = vmatprep.mubr.f32.mxu0 0.0
    %3222 = vmatmul.mubr.f32.gmra.mxu0 %v536
    %v3223 = vpop.f32.mrf.mxu0
    %v3224 = vadd.f32 0.0, %v3223
    %v3225 = vpop.f32.mrf.mxu0
    %v3226 = vadd.f32 0.0, %v3225
    %3227 = vmatprep.mubr.f32.mxu0 0.0
    %3228 = vmatmul.mubr.f32.gmra.mxu0 %v538
    %v3229 = vpop.f32.mrf.mxu0
    %v3230 = vadd.f32 0.0, %v3229
    %v3231 = vpop.f32.mrf.mxu0
    %v3232 = vadd.f32 0.0, %v3231
    %3233 = vmatprep.mubr.f32.mxu0 0.0
    %3234 = vmatmul.mubr.f32.gmra.mxu0 %v540
    %v3235 = vpop.f32.mrf.mxu0
    %v3236 = vadd.f32 0.0, %v3235
    %v3237 = vpop.f32.mrf.mxu0
    %v3238 = vadd.f32 0.0, %v3237
    %3239 = vmatprep.mubr.f32.mxu0 0.0
    %3240 = vmatmul.mubr.f32.gmra.mxu0 %v542
    %v3241 = vpop.f32.mrf.mxu0
    %v3242 = vadd.f32 0.0, %v3241
    %v3243 = vpop.f32.mrf.mxu0
    %v3244 = vadd.f32 0.0, %v3243
    %3245 = vmatprep.mubr.f32.mxu0 0.0
    %3246 = vmatmul.mubr.f32.gmra.mxu0 %v544
    %v3247 = vpop.f32.mrf.mxu0
    %v3248 = vadd.f32 0.0, %v3247
    %v3249 = vpop.f32.mrf.mxu0
    %v3250 = vadd.f32 0.0, %v3249
    %3251 = vdwg.mxu0
    %v3252 = vmax.f32 %v3129, 0.0
    %v3253 = vmax.f32 %v3131, 0.0
    %v3254 = vmax.f32 %v3224, 0.0
    %v3255 = vmax.f32 %v3226, 0.0
    %v3256 = vmax.f32 %v3135, 0.0
    %v3257 = vmax.f32 %v3137, 0.0
    %v3258 = vmax.f32 %v3230, 0.0
    %v3259 = vmax.f32 %v3232, 0.0
    %v3260 = vmax.f32 %v3141, 0.0
    %v3261 = vmax.f32 %v3143, 0.0
    %v3262 = vmax.f32 %v3236, 0.0
    %v3263 = vmax.f32 %v3238, 0.0
    %v3264 = vmax.f32 %v3147, 0.0
    %v3265 = vmax.f32 %v3149, 0.0
    %v3266 = vmax.f32 %v3242, 0.0
    %v3267 = vmax.f32 %v3244, 0.0
    %v3268 = vmax.f32 %v3153, 0.0
    %v3269 = vmax.f32 %v3155, 0.0
    %v3270 = vmax.f32 %v3248, 0.0
    %v3271 = vmax.f32 %v3250, 0.0
    %v3273 = vsel %vm303, %v3268, 0
    %v3276 = vsel %vm303, %v3269, 0
    %v3279 = vsel %vm303, %v3270, 0
    %v3282 = vsel %vm303, %v3271, 0
    %3284 = vmatprep.subr.mxu0 0.0
    %3285 = vmatpush1.msra.mxu0 0.0
    %3286 = vmatprep.subr.mxu0 0.0
    %3287 = vmatpush1.msra.mxu0 0.0
    %3288 = vmatprep.subr.mxu0 0.0
    %3289 = vmatpush1.msra.mxu0 0.0
    %3290 = vmatprep.subr.mxu0 0.0
    %3291 = vmatpush1.msra.mxu0 0.0
    %3292 = vmatprep.subr.mxu0 0.0
    %3293 = vmatpush1.msra.mxu0 0.0
    %3294 = vmatprep.subr.mxu0 0.0
    %3295 = vmatpush1.msra.mxu0 0.0
    %3296 = vmatprep.subr.mxu0 0.0
    %3297 = vmatpush1.msra.mxu0 0.0
    %3298 = vmatprep.subr.mxu0 0.0
    %3299 = vmatpush1.msra.mxu0 0.0
    %3300 = vmatprep.subr.mxu0 0.0
    %3301 = vmatpush1.msra.mxu0 0.0
    %3302 = vmatprep.subr.mxu0 0.0
    %3303 = vmatpush1.msra.mxu0 0.0
    %3304 = vmatprep.subr.mxu0 0.0
    %3305 = vmatpush1.msra.mxu0 0.0
    %3306 = vmatprep.subr.mxu0 %v3276
    %3307 = vmatpush1.msra.mxu0 %v3273
    %3308 = vmatprep.subr.mxu0 %v3265
    %3309 = vmatpush1.msra.mxu0 %v3264
    %3310 = vmatprep.subr.mxu0 %v3261
    %3311 = vmatpush1.msra.mxu0 %v3260
    %3312 = vmatprep.subr.mxu0 %v3257
    %3313 = vmatpush1.msra.mxu0 %v3256
    %3314 = vmatprep.subr.mxu0 %v3253
    %3315 = vmatpush1.msra.mxu0 %v3252
    %3316 = vmatprep.subr.mxu0 0.0
    %3317 = vmatpush2.msra.mxu0 0.0
    %3318 = vmatprep.subr.mxu0 0.0
    %3319 = vmatpush2.msra.mxu0 0.0
    %3320 = vmatprep.subr.mxu0 0.0
    %3321 = vmatpush2.msra.mxu0 0.0
    %3322 = vmatprep.subr.mxu0 0.0
    %3323 = vmatpush2.msra.mxu0 0.0
    %3324 = vmatprep.subr.mxu0 0.0
    %3325 = vmatpush2.msra.mxu0 0.0
    %3326 = vmatprep.subr.mxu0 0.0
    %3327 = vmatpush2.msra.mxu0 0.0
    %3328 = vmatprep.subr.mxu0 0.0
    %3329 = vmatpush2.msra.mxu0 0.0
    %3330 = vmatprep.subr.mxu0 0.0
    %3331 = vmatpush2.msra.mxu0 0.0
    %3332 = vmatprep.subr.mxu0 0.0
    %3333 = vmatpush2.msra.mxu0 0.0
    %3334 = vmatprep.subr.mxu0 0.0
    %3335 = vmatpush2.msra.mxu0 0.0
    %3336 = vmatprep.subr.mxu0 0.0
    %3337 = vmatpush2.msra.mxu0 0.0
    %3338 = vmatprep.subr.mxu0 0.0
    %3339 = vmatpush2.msra.mxu0 0.0
    %3340 = vmatprep.subr.mxu0 0.0
    %3341 = vmatpush2.msra.mxu0 0.0
    %3342 = vmatprep.subr.mxu0 0.0
    %3343 = vmatpush2.msra.mxu0 0.0
    %3344 = vmatprep.subr.mxu0 0.0
    %3345 = vmatpush2.msra.mxu0 0.0
    %3346 = vmatprep.subr.mxu0 0.0
    %3347 = vmatpush2.msra.mxu0 0.0
    %3348 = vmatprep.mubr.f32.mxu0 0.0
    %3349 = vmatmul.mubr.f32.gmra.mxu0 %v769
    %v3350 = vpop.f32.mrf.mxu0
    %v3351 = vadd.f32 0.0, %v3350
    %v3352 = vpop.f32.mrf.mxu0
    %v3353 = vadd.f32 0.0, %v3352
    %3354 = vdwg.mxu0
    %3355 = vmatprep.subr.mxu0 0.0
    %3356 = vmatpush1.msra.mxu0 0.0
    %3357 = vmatprep.subr.mxu0 0.0
    %3358 = vmatpush1.msra.mxu0 0.0
    %3359 = vmatprep.subr.mxu0 0.0
    %3360 = vmatpush1.msra.mxu0 0.0
    %3361 = vmatprep.subr.mxu0 0.0
    %3362 = vmatpush1.msra.mxu0 0.0
    %3363 = vmatprep.subr.mxu0 0.0
    %3364 = vmatpush1.msra.mxu0 0.0
    %3365 = vmatprep.subr.mxu0 0.0
    %3366 = vmatpush1.msra.mxu0 0.0
    %3367 = vmatprep.subr.mxu0 0.0
    %3368 = vmatpush1.msra.mxu0 0.0
    %3369 = vmatprep.subr.mxu0 0.0
    %3370 = vmatpush1.msra.mxu0 0.0
    %3371 = vmatprep.subr.mxu0 0.0
    %3372 = vmatpush1.msra.mxu0 0.0
    %3373 = vmatprep.subr.mxu0 0.0
    %3374 = vmatpush1.msra.mxu0 0.0
    %3375 = vmatprep.subr.mxu0 0.0
    %3376 = vmatpush1.msra.mxu0 0.0
    %3377 = vmatprep.subr.mxu0 %v3282
    %3378 = vmatpush1.msra.mxu0 %v3279
    %3379 = vmatprep.subr.mxu0 %v3267
    %3380 = vmatpush1.msra.mxu0 %v3266
    %3381 = vmatprep.subr.mxu0 %v3263
    %3382 = vmatpush1.msra.mxu0 %v3262
    %3383 = vmatprep.subr.mxu0 %v3259
    %3384 = vmatpush1.msra.mxu0 %v3258
    %3385 = vmatprep.subr.mxu0 %v3255
    %3386 = vmatpush1.msra.mxu0 %v3254
    %3387 = vmatprep.subr.mxu0 0.0
    %3388 = vmatpush2.msra.mxu0 0.0
    %3389 = vmatprep.subr.mxu0 0.0
    %3390 = vmatpush2.msra.mxu0 0.0
    %3391 = vmatprep.subr.mxu0 0.0
    %3392 = vmatpush2.msra.mxu0 0.0
    %3393 = vmatprep.subr.mxu0 0.0
    %3394 = vmatpush2.msra.mxu0 0.0
    %3395 = vmatprep.subr.mxu0 0.0
    %3396 = vmatpush2.msra.mxu0 0.0
    %3397 = vmatprep.subr.mxu0 0.0
    %3398 = vmatpush2.msra.mxu0 0.0
    %3399 = vmatprep.subr.mxu0 0.0
    %3400 = vmatpush2.msra.mxu0 0.0
    %3401 = vmatprep.subr.mxu0 0.0
    %3402 = vmatpush2.msra.mxu0 0.0
    %3403 = vmatprep.subr.mxu0 0.0
    %3404 = vmatpush2.msra.mxu0 0.0
    %3405 = vmatprep.subr.mxu0 0.0
    %3406 = vmatpush2.msra.mxu0 0.0
    %3407 = vmatprep.subr.mxu0 0.0
    %3408 = vmatpush2.msra.mxu0 0.0
    %3409 = vmatprep.subr.mxu0 0.0
    %3410 = vmatpush2.msra.mxu0 0.0
    %3411 = vmatprep.subr.mxu0 0.0
    %3412 = vmatpush2.msra.mxu0 0.0
    %3413 = vmatprep.subr.mxu0 0.0
    %3414 = vmatpush2.msra.mxu0 0.0
    %3415 = vmatprep.subr.mxu0 0.0
    %3416 = vmatpush2.msra.mxu0 0.0
    %3417 = vmatprep.subr.mxu0 0.0
    %3418 = vmatpush2.msra.mxu0 0.0
    %3419 = vmatprep.mubr.f32.mxu0 0.0
    %3420 = vmatmul.mubr.f32.gmra.mxu0 %v769
    %v3421 = vpop.f32.mrf.mxu0
    %v3422 = vadd.f32 0.0, %v3421
    %v3423 = vpop.f32.mrf.mxu0
    %v3424 = vadd.f32 0.0, %v3423
    %3425 = vdwg.mxu0
    %v3430 = vcombine.low %v3351, %v3353
    %v3431 = vcombine.low %v3422, %v3424
    %s3434 = scalar_lea.vmem [#allocation2], 48
    %3435 = vst [vmem:[%s3434] sm:$0x77] %v3430
    %3436 = vst [vmem:[%s3434 + $0x8] sm:$0x77] %v3431
    // Predicated region
    $region14: #{fnnt_forward_t.1} parent=1 // pred_check
      _
    $region15: #{fnnt_forward_t.1} parent=1 // pred_check_branch
      %3438 = sbr.rel (0) target = $region17
    $region16: #{fnnt_forward_t.1} parent=1 // pred_region
      %s3440 = ssub.s32 1024, 1024
      %3441 = vsyncadd [#allocation3], %s3440
      %s3443 = sshll.u32 [#allocation2], 4
      %s3444 = int_to_ptr.vmem [resolvable:$true] %s3443
      %3446 = dma.vmem_to_hbm [thread:$0]  %s3444, 1024, %s3, [#allocation3]
    $region17: #{fnnt_forward_t.1} parent=1 // pred_fallthru
      _
    // Predicated region
    $region18: #{fnnt_forward_t.1} parent=1 // pred_check
      _
    $region19: #{fnnt_forward_t.1} parent=1 // pred_check_branch
      %3448 = sbr.rel (0) target = $region21
    $region20: #{fnnt_forward_t.1} parent=1 // pred_region
      %3449 = dma.done [#allocation3], 1024
    $region21: #{fnnt_forward_t.1} parent=1 // pred_fallthru
      _
    %3450 = vsyncpa [#allocation3], 1

</llo_original>
